<compile_context>
chip_gen: v7x
topology: tpu7x:2x2x1
jax: 0.10.0
libtpu: 0.0.40
codegen_flags: <defaults>
</compile_context>

<pallas_src>
import functools
import math

import jax
import jax.numpy as jnp
from jax.experimental import pallas as pl
from jax.experimental.pallas import tpu as pltpu


def _round_up(x, m):
    return ((x + m - 1) // m) * m


# ----------------------------------------------------------------------------------
# Pallas kernel 1: fused shared MLP  (Linear(no bias) + folded BN + activation) x L
# Weights/biases resident in VMEM; intermediates never touch HBM.
# ----------------------------------------------------------------------------------
def _make_fused_mlp_kernel(num_layers, activation, compute_dtype):
    def kernel(*refs):
        x_ref = refs[0]
        w_refs = refs[1:1 + num_layers]
        b_refs = refs[1 + num_layers:1 + 2 * num_layers]
        o_ref = refs[1 + 2 * num_layers]
        y = x_ref[...]
        for w_ref, b_ref in zip(w_refs, b_refs):
            # bf16 x bf16 MXU dot with f32 accumulation; BN scale already folded into W.
            y = jnp.dot(y.astype(compute_dtype), w_ref[...],
                        preferred_element_type=jnp.float32)
            y = y + b_ref[...]
            if activation == "relu":
                y = jnp.maximum(y, 0.0)
            else:  # silu
                y = y * jax.nn.sigmoid(y)
        o_ref[...] = y.astype(o_ref.dtype)
    return kernel


def fused_mlp(x, weights, biases, *, tp, out_dtype, activation, compute_dtype):
    n, cin = x.shape
    assert n % tp == 0, "pad N to a multiple of the MLP point tile in the wrapper"
    cout = weights[-1].shape[1]
    nl = len(weights)
    in_specs = [pl.BlockSpec((tp, cin), lambda i: (i, 0))]
    in_specs += [pl.BlockSpec(w.shape, lambda i: (0, 0)) for w in weights]   # resident
    in_specs += [pl.BlockSpec(b.shape, lambda i: (0, 0)) for b in biases]    # resident
    return pl.pallas_call(
        _make_fused_mlp_kernel(nl, activation, compute_dtype),
        out_shape=jax.ShapeDtypeStruct((n, cout), out_dtype),
        grid_spec=pltpu.PrefetchScalarGridSpec(
            num_scalar_prefetch=0,
            grid=(n // tp,),
            in_specs=in_specs,
            out_specs=pl.BlockSpec((tp, cout), lambda i: (i, 0)),
        ),
        compiler_params=pltpu.CompilerParams(
            dimension_semantics=("parallel",),
            vmem_limit_bytes=32 * 1024 * 1024),
    )(x, *weights, *biases)


# ----------------------------------------------------------------------------------
# Pallas kernel 2: scatter_max over a lane-dense packed point layout.
# Grid: (pillar tiles [parallel], point tiles within this pillar tile [arbitrary]).
# start_tile / ntiles are scalar-prefetched and drive data-dependent index maps.
# ----------------------------------------------------------------------------------
def _scatter_max_kernel(start_ref, ntiles_ref, pid_ref, feat_ref, fmax_ref, acc_ref,
                        *, cs_rows):
    p = pl.program_id(0)
    t = pl.program_id(1)
    tm, c = fmax_ref.shape
    rows_packed, lanes = feat_ref.shape           # (tp // g, g * C)
    g = lanes // c
    neg = jnp.finfo(acc_ref.dtype).min

    @pl.when(t == 0)
    def _():
        # -max init (SiLU-safe); empty rows are zeroed in the wrapper.
        acc_ref[...] = jnp.full(acc_ref.shape, neg, acc_ref.dtype)

    @pl.when(t < ntiles_ref[p])
    def _():
        lo = p * tm
        # pillar-row ids replicated across all 128 lanes (hoisted out of the chunk loop)
        rows = jax.lax.broadcasted_iota(jnp.int32, (tm, lanes), 0) + lo
        rows = rows[:, None, :]                                   # (tm, 1, lanes)
        acc = acc_ref[...]
        for s in range(0, rows_packed, cs_rows):                  # static chunk loop
            pid = pid_ref[pl.ds(s, cs_rows), :]                   # (cs, lanes) int32
            f = feat_ref[pl.ds(s, cs_rows), :]                    # (cs, lanes) bf16
            mk = pid[None, :, :] == rows                          # (tm, cs, lanes)
            m3 = jnp.where(mk, f[None, :, :], neg)                # lane-dense select
            acc = jnp.maximum(acc, jnp.max(m3, axis=1))           # (tm, lanes)
        acc_ref[...] = acc

    @pl.when(t == pl.num_programs(1) - 1)
    def _():
        # reduce the g packed point-columns down to the C channels, once per pillar tile
        part = acc_ref[...]
        red = part[:, :c]
        for k in range(1, g):
            red = jnp.maximum(red, part[:, k * c:(k + 1) * c])
        fmax_ref[...] = red.astype(fmax_ref.dtype)


def pillar_scatter_max(start_tile, ntiles, ids_packed, feats_packed, m_pad, c,
                       *, tm, tp, g, t_inner, out_dtype):
    n_rows, lanes = feats_packed.shape            # (n_pad // g, g * C)
    assert tp % g == 0
    rows_per_tile = tp // g
    assert n_rows % rows_per_tile == 0
    num_t = n_rows // rows_per_tile
    num_p = m_pad // tm
    cs_rows = min(32, rows_per_tile)
    assert rows_per_tile % cs_rows == 0

    def in_map(p, t, start_ref, ntiles_ref):
        # clamp to the last useful tile of this pillar tile: skipped steps keep the same
        # block index -> Pallas does not re-issue the DMA for them.
        pt = start_ref[p] + jnp.minimum(t, jnp.maximum(ntiles_ref[p] - 1, 0))
        return (jnp.minimum(pt, num_t - 1), 0)

    kernel = functools.partial(_scatter_max_kernel, cs_rows=cs_rows)
    return pl.pallas_call(
        kernel,
        out_shape=jax.ShapeDtypeStruct((m_pad, c), out_dtype),
        grid_spec=pltpu.PrefetchScalarGridSpec(
            num_scalar_prefetch=2,
            grid=(num_p, t_inner),
            in_specs=[
                pl.BlockSpec((rows_per_tile, lanes), in_map),   # packed pillar ids
                pl.BlockSpec((rows_per_tile, lanes), in_map),   # packed features
            ],
            out_specs=pl.BlockSpec((tm, c), lambda p, t, s, nt: (p, 0)),
            scratch_shapes=[pltpu.VMEM((tm, lanes), out_dtype)],
        ),
        compiler_params=pltpu.CompilerParams(
            dimension_semantics=("parallel", "arbitrary"),
            vmem_limit_bytes=32 * 1024 * 1024),
    )(start_tile, ntiles, ids_packed, feats_packed)


# ----------------------------------------------------------------------------------
# Module wrapper (parameter setup + pillarization glue)
# ----------------------------------------------------------------------------------
class PillarMaxPoolingPallas:
    def __init__(self, mlps, pillar_size, point_cloud_range, key, *,
                 activation="relu", mlp_point_tile=2048, scatter_point_tile=512,
                 pillar_tile=32, feature_dtype=jnp.bfloat16):
        self.pillar_size = float(pillar_size)
        self.pc_range = point_cloud_range
        self.width = int(round((point_cloud_range[3] - point_cloud_range[0]) / pillar_size))
        self.height = int(round((point_cloud_range[4] - point_cloud_range[1]) / pillar_size))
        self.activation = activation
        self.mlp_point_tile = mlp_point_tile
        self.scatter_point_tile = scatter_point_tile
        self.pillar_tile = pillar_tile
        self.feature_dtype = feature_dtype   # bf16 on v6e/v7x; pass f32 for strict v5e parity

        self.weights, self.biases = [], []
        eps = 1e-3  # BatchNorm1d(eps=0.001)
        for k in range(len(mlps) - 1):
            cin, cout = mlps[k], mlps[k + 1]
            key, sub = jax.random.split(key)
            # kaiming_normal_ on torch Linear weight (cout, cin): std = sqrt(2 / cin);
            # stored transposed as (cin, cout).
            w = jax.random.normal(sub, (cin, cout), jnp.float32) * jnp.sqrt(2.0 / cin)
            # BatchNorm1d folded with deterministic stats (gamma=1, beta=0, mean=0, var=1);
            # scale folded straight into the weight columns.
            gamma = jnp.ones((1, cout), jnp.float32)
            beta = jnp.zeros((1, cout), jnp.float32)
            rmean = jnp.zeros((1, cout), jnp.float32)
            rvar = jnp.ones((1, cout), jnp.float32)
            scale = gamma / jnp.sqrt(rvar + eps)
            self.weights.append((w * scale).astype(feature_dtype))
            self.biases.append(beta - rmean * scale)               # bias stays f32

    def __call__(self, pts_xy, pts_batch_cnt, pts_feature, xyzs):
        counts = [int(c) for c in pts_batch_cnt]
        batch = len(counts)
        n = int(pts_feature.shape[0])
        tp_mlp = self.mlp_point_tile
        tp_sc = self.scatter_point_tile
        tm = self.pillar_tile

        # --- PillarQueryAndGroup equivalent (plain-JAX glue) ---
        # TODO(synk): the CUDA PillarQueryAndGroup also concatenates pillar-relative point
        # offsets into the grouped features; here the point features pass through unchanged.
        bx = jnp.floor((pts_xy[:, 0] - self.pc_range[0]) / self.pillar_size).astype(jnp.int32)
        by = jnp.floor((pts_xy[:, 1] - self.pc_range[1]) / self.pillar_size).astype(jnp.int32)
        bx = jnp.clip(bx, 0, self.width - 1)
        by = jnp.clip(by, 0, self.height - 1)
        batch_idx = jnp.concatenate(
            [jnp.full((c,), i, jnp.int32) for i, c in enumerate(counts)])
        hw = self.height * self.width
        flat = batch_idx * hw + by * self.width + bx

        m_bound = min(n, batch * hw)               # tight static pillar bound
        m_pad = _round_up(m_bound, tm)
        uniq, point_pillar_indices = jnp.unique(
            flat, size=m_bound, fill_value=-1, return_inverse=True)
        valid = uniq >= 0
        pillar_indices = jnp.stack(  # (M, 3) [batch, y, x]; padded rows marked -1
            [jnp.where(valid, uniq // hw, -1),
             jnp.where(valid, (uniq % hw) // self.width, -1),
             jnp.where(valid, uniq % self.width, -1)], axis=1).astype(jnp.int32)

        ids = point_pillar_indices.reshape(-1).astype(jnp.int32)

        # --- pillar xyz mean + counts: plain JAX (removed from the hot kernel) ---
        xyz = jnp.concatenate(list(xyzs), axis=0).astype(jnp.float32)
        xyz_sum = jax.ops.segment_sum(xyz, ids, num_segments=m_bound)
        cnt = jax.ops.segment_sum(jnp.ones((n,), jnp.float32), ids, num_segments=m_bound)
        pillar_xyz = xyz_sum / jnp.maximum(cnt, 1.0)[:, None]

        # --- sort points by pillar id + pad N (sentinel ids never match a pillar row) ---
        order = jnp.argsort(ids)
        ids_s, feat_s = ids[order], pts_feature[order]
        n_pad = _round_up(n, math.lcm(tp_mlp, tp_sc))
        pad = n_pad - n
        sentinel = jnp.int32(m_pad)
        ids_p = jnp.concatenate([ids_s, jnp.full((pad,), sentinel, jnp.int32)])
        feat_p = jnp.concatenate([feat_s, jnp.zeros((pad, feat_s.shape[1]), feat_s.dtype)])

        # --- per-pillar-tile point-tile ranges (scalar-prefetch tables for the scatter) ---
        num_p = m_pad // tm
        bounds = jnp.arange(num_p + 1, dtype=jnp.int32) * tm
        pt_edges = jnp.searchsorted(ids_p, bounds, side="left").astype(jnp.int32)
        pt_start, pt_end = pt_edges[:-1], pt_edges[1:]
        start_tile = (pt_start // tp_sc).astype(jnp.int32)
        last_tile = jnp.maximum(pt_end - 1, 0) // tp_sc
        ntiles = jnp.where(pt_end > pt_start,
                           last_tile - start_tile + 1, 0).astype(jnp.int32)
        # TODO(synk): t_inner is data dependent (host sync + recompile if the max number of
        # point tiles per pillar tile changes); fine for an eager wrapper.
        t_inner = max(1, int(jnp.max(ntiles)))

        # --- fused shared MLP (single Pallas call, bf16 in/out, f32 accumulation) ---
        feats = fused_mlp(feat_p.astype(self.feature_dtype), self.weights, self.biases,
                          tp=tp_mlp, out_dtype=self.feature_dtype,
                          activation=self.activation, compute_dtype=self.feature_dtype)

        # --- lane-dense packed layouts for the scatter (free row-major reshapes) ---
        c_out = int(feats.shape[1])
        g = 128 // c_out if (c_out <= 128 and 128 % c_out == 0) else 1
        feats_packed = feats.reshape(n_pad // g, g * c_out)
        ids_packed = jnp.repeat(ids_p, c_out).reshape(n_pad // g, g * c_out)

        # --- scatter_max (single Pallas call, data-dependent point ranges) ---
        fmax = pillar_scatter_max(start_tile, ntiles, ids_packed, feats_packed,
                                  m_pad, c_out, tm=tm, tp=tp_sc, g=g,
                                  t_inner=t_inner, out_dtype=self.feature_dtype)
        # empty / padded pillar rows -> 0 (matches scatter-into-zeros; SiLU-safe)
        pillar_features = jnp.where(valid[:, None], fmax[:m_bound],
                                    jnp.zeros((), self.feature_dtype))

        # spconv.SparseConvTensor has no Pallas/JAX equivalent -> plain container.
        sparse = dict(
            features=pillar_features,
            indices=pillar_indices,
            spatial_shape=(self.height, self.width),
            batch_size=batch,
        )
        return sparse, pillar_xyz


# ----------------------------------------------------------------------------------
if __name__ == "__main__":
    key = jax.random.PRNGKey(0)
    counts = [300, 237]               # N = 537 (not a tile multiple -> exercises padding)
    n = sum(counts)
    c_in = 8
    mlps = [c_in, 32, 32]             # two fused MLP layers
    pillar_size = 1.0
    pc_range = [0.0, 0.0, -3.0, 8.0, 8.0, 1.0]   # -> spatial_shape (8, 8)

    key, k1, k2, k3 = jax.random.split(key, 4)
    xyz_all = jax.random.uniform(k1, (n, 3), jnp.float32, 0.0, 8.0)
    xyzs, off = [], 0
    for c in counts:
        xyzs.append(xyz_all[off:off + c])
        off += c
    pts_xy = xyz_all                                   # (N, 3), xy in first two cols
    pts_feature = jax.random.normal(k2, (n, c_in), jnp.float32)
    pts_batch_cnt = jnp.array(counts, jnp.int32)

    module = PillarMaxPoolingPallas(mlps, pillar_size, pc_range, k3)
    sparse, pillar_xyz = module(pts_xy, pts_batch_cnt, pts_feature, xyzs)
    jax.block_until_ready((sparse["features"], sparse["indices"], pillar_xyz))
    print("KERNEL_OK")
</pallas_src>

<mosaic_0001>
module attributes {stable_mosaic.version = 11 : i64} {
  func.func @kernel(%arg0: i32, %arg1: memref<2048x8xbf16, #tpu.memory_space<vmem>>, %arg2: memref<8x32xbf16, #tpu.memory_space<vmem>>, %arg3: memref<32x32xbf16, #tpu.memory_space<vmem>>, %arg4: memref<1x32xf32, #tpu.memory_space<vmem>>, %arg5: memref<1x32xf32, #tpu.memory_space<vmem>>, %arg6: memref<2048x32xbf16, #tpu.memory_space<vmem>>) attributes {dimension_semantics = [#tpu.dimension_semantics<parallel>], iteration_bounds = array<i64: 1>, scalar_prefetch = 0 : i64, scratch_operands = 0 : i64, tpu.core_type = #tpu.core_type<tc>, window_params = [{transform_indices = @transform_0, window_bounds = array<i64: 2048, 8>}, {pipeline_mode = #tpu.pipeline_mode<synchronous>, transform_indices = @transform_1, window_bounds = array<i64: 8, 32>}, {pipeline_mode = #tpu.pipeline_mode<synchronous>, transform_indices = @transform_2, window_bounds = array<i64: 32, 32>}, {pipeline_mode = #tpu.pipeline_mode<synchronous>, transform_indices = @transform_3, window_bounds = array<i64: 1, 32>}, {pipeline_mode = #tpu.pipeline_mode<synchronous>, transform_indices = @transform_4, window_bounds = array<i64: 1, 32>}, {transform_indices = @transform_5, window_bounds = array<i64: 2048, 32>}]} {
    %c0 = arith.constant 0 : index
    %c0_0 = arith.constant 0 : index
    %0 = vector.load %arg1[%c0, %c0_0] : memref<2048x8xbf16, #tpu.memory_space<vmem>>, vector<2048x8xbf16>
    %c0_1 = arith.constant 0 : index
    %c0_2 = arith.constant 0 : index
    %1 = vector.load %arg2[%c0_1, %c0_2] : memref<8x32xbf16, #tpu.memory_space<vmem>>, vector<8x32xbf16>
    %cst = arith.constant dense<0.000000e+00> : vector<2048x32xf32>
    %2 = tpu.matmul %0, %1, %cst {dimension_numbers = #tpu.dot_dimension_numbers<[1], [0], [0], [1], [0, 0, 1, 1], [], []>} : vector<2048x8xbf16>, vector<8x32xbf16>, vector<2048x32xf32> -> vector<2048x32xf32>
    %c0_3 = arith.constant 0 : index
    %c0_4 = arith.constant 0 : index
    %3 = vector.load %arg4[%c0_3, %c0_4] : memref<1x32xf32, #tpu.memory_space<vmem>>, vector<1x32xf32>
    %4 = vector.broadcast %3 : vector<1x32xf32> to vector<2048x32xf32>
    %5 = arith.addf %2, %4 : vector<2048x32xf32>
    %cst_5 = arith.constant 0.000000e+00 : f32
    %6 = vector.broadcast %cst_5 : f32 to vector<2048x32xf32>
    %7 = arith.maximumf %5, %6 : vector<2048x32xf32>
    %8 = arith.truncf %7 : vector<2048x32xf32> to vector<2048x32xbf16>
    %c0_6 = arith.constant 0 : index
    %c0_7 = arith.constant 0 : index
    %9 = vector.load %arg3[%c0_6, %c0_7] : memref<32x32xbf16, #tpu.memory_space<vmem>>, vector<32x32xbf16>
    %cst_8 = arith.constant dense<0.000000e+00> : vector<2048x32xf32>
    %10 = tpu.matmul %8, %9, %cst_8 {dimension_numbers = #tpu.dot_dimension_numbers<[1], [0], [0], [1], [0, 0, 1, 1], [], []>} : vector<2048x32xbf16>, vector<32x32xbf16>, vector<2048x32xf32> -> vector<2048x32xf32>
    %c0_9 = arith.constant 0 : index
    %c0_10 = arith.constant 0 : index
    %11 = vector.load %arg5[%c0_9, %c0_10] : memref<1x32xf32, #tpu.memory_space<vmem>>, vector<1x32xf32>
    %12 = vector.broadcast %11 : vector<1x32xf32> to vector<2048x32xf32>
    %13 = arith.addf %10, %12 : vector<2048x32xf32>
    %cst_11 = arith.constant 0.000000e+00 : f32
    %14 = vector.broadcast %cst_11 : f32 to vector<2048x32xf32>
    %15 = arith.maximumf %13, %14 : vector<2048x32xf32>
    %16 = arith.truncf %15 : vector<2048x32xf32> to vector<2048x32xbf16>
    %c0_12 = arith.constant 0 : index
    %c0_13 = arith.constant 0 : index
    %17 = vector.load %arg6[%c0_12, %c0_13] : memref<2048x32xbf16, #tpu.memory_space<vmem>>, vector<2048x32xbf16>
    tpu.vector_store %arg6[%c0_12, %c0_13], %16 {strides = array<i32>} : memref<2048x32xbf16, #tpu.memory_space<vmem>>, vector<2048x32xbf16>,
    return
  }
  func.func @transform_0(%arg0: i32) -> (i32, i32) {
    %c0_i32 = arith.constant 0 : i32
    %c0_i32_0 = arith.constant 0 : i32
    return %arg0, %c0_i32 : i32, i32
  }
  func.func @transform_1(%arg0: i32) -> (i32, i32) {
    %c0_i32 = arith.constant 0 : i32
    %c0_i32_0 = arith.constant 0 : i32
    %c0_i32_1 = arith.constant 0 : i32
    return %c0_i32, %c0_i32_0 : i32, i32
  }
  func.func @transform_2(%arg0: i32) -> (i32, i32) {
    %c0_i32 = arith.constant 0 : i32
    %c0_i32_0 = arith.constant 0 : i32
    %c0_i32_1 = arith.constant 0 : i32
    return %c0_i32, %c0_i32_0 : i32, i32
  }
  func.func @transform_3(%arg0: i32) -> (i32, i32) {
    %c0_i32 = arith.constant 0 : i32
    %c0_i32_0 = arith.constant 0 : i32
    %c0_i32_1 = arith.constant 0 : i32
    return %c0_i32, %c0_i32_0 : i32, i32
  }
  func.func @transform_4(%arg0: i32) -> (i32, i32) {
    %c0_i32 = arith.constant 0 : i32
    %c0_i32_0 = arith.constant 0 : i32
    %c0_i32_1 = arith.constant 0 : i32
    return %c0_i32, %c0_i32_0 : i32, i32
  }
  func.func @transform_5(%arg0: i32) -> (i32, i32) {
    %c0_i32 = arith.constant 0 : i32
    %c0_i32_0 = arith.constant 0 : i32
    return %arg0, %c0_i32 : i32, i32
  }
}

</mosaic_0001>

<llo_original>
// kernel: tpu_custom_call.1
$region0: #{tpu_custom_call.1}
  #allocation0 [shape = 'u32[]', space=smem, size = 0x4, offset = 0x4, fixed_abs, tag = 'smem constant byte address 0x4 - core index']
  #allocation1 [shape = 'u32[144,128]{1,0:T(1,128)}', space=vmem, size = 0x12000, scoped, tag = 'internal scratch']
  %s0 = inlined_call_operand.vmem [shape: bf16[2048,8], index: 0, kind: input, shape index: {}]
  %s1 = inlined_call_operand.vmem [shape: bf16[8,32], index: 1, kind: input, shape index: {}]
  %s2 = inlined_call_operand.vmem [shape: bf16[32,32], index: 2, kind: input, shape index: {}]
  %s3 = inlined_call_operand.vmem [shape: f32[1,32], index: 3, kind: input, shape index: {}]
  %s4 = inlined_call_operand.vmem [shape: f32[1,32], index: 4, kind: input, shape index: {}]
  %s5 = inlined_call_operand.vmem [shape: bf16[2048,32], index: 5, kind: output, shape index: {}]
  %s6 = sld [smem:[#allocation0]]
  $region30: #{tpu_custom_call.1} parent=0
    _
  %s8 = ssub.s32 1, %s6
  %s9 = scalar_select 0, %s8, %s6
  // Predicated region
  $region2: #{tpu_custom_call.1} parent=0 // pred_check
    _
  $region3: #{tpu_custom_call.1} parent=0 // pred_check_branch
    %11 = sbr.rel (0) target = $region5
  $region4: #{tpu_custom_call.1} parent=0 // pred_region
    _
  $region5: #{tpu_custom_call.1} parent=0 // pred_fallthru
    _
  // Predicated region
  $region6: #{tpu_custom_call.1} parent=0 // pred_check
    _
  $region7: #{tpu_custom_call.1} parent=0 // pred_check_branch
    %13 = sbr.rel (0) target = $region9
  $region8: #{tpu_custom_call.1} parent=0 // pred_region
    _
  $region9: #{tpu_custom_call.1} parent=0 // pred_fallthru
    _
  // Predicated region
  $region10: #{tpu_custom_call.1} parent=0 // pred_check
    _
  $region11: #{tpu_custom_call.1} parent=0 // pred_check_branch
    %15 = sbr.rel (0) target = $region13
  $region12: #{tpu_custom_call.1} parent=0 // pred_region
    _
  $region13: #{tpu_custom_call.1} parent=0 // pred_fallthru
    _
  // Predicated region
  $region14: #{tpu_custom_call.1} parent=0 // pred_check
    _
  $region15: #{tpu_custom_call.1} parent=0 // pred_check_branch
    %17 = sbr.rel (0) target = $region17
  $region16: #{tpu_custom_call.1} parent=0 // pred_region
    _
  $region17: #{tpu_custom_call.1} parent=0 // pred_fallthru
    _
  // Predicated region
  $region18: #{tpu_custom_call.1} parent=0 // pred_check
    _
  $region19: #{tpu_custom_call.1} parent=0 // pred_check_branch
    %19 = sbr.rel (0) target = $region21
  $region20: #{tpu_custom_call.1} parent=0 // pred_region
    _
  $region21: #{tpu_custom_call.1} parent=0 // pred_fallthru
    _
  %v21 = vld [vmem:[%s0] sm:$0xf]
  %v22 = vld [vmem:[%s0 + $0x4] sm:$0xf]
  %v23 = vld [vmem:[%s0 + $0x8] sm:$0xf]
  %v24 = vld [vmem:[%s0 + $0xc] sm:$0xf]
  %v25 = vld [vmem:[%s0 + $0x10] sm:$0xf]
  %v26 = vld [vmem:[%s0 + $0x14] sm:$0xf]
  %v27 = vld [vmem:[%s0 + $0x18] sm:$0xf]
  %v28 = vld [vmem:[%s0 + $0x1c] sm:$0xf]
  %v29 = vld [vmem:[%s0 + $0x20] sm:$0xf]
  %v30 = vld [vmem:[%s0 + $0x24] sm:$0xf]
  %v31 = vld [vmem:[%s0 + $0x28] sm:$0xf]
  %v32 = vld [vmem:[%s0 + $0x2c] sm:$0xf]
  %v33 = vld [vmem:[%s0 + $0x30] sm:$0xf]
  %v34 = vld [vmem:[%s0 + $0x34] sm:$0xf]
  %v35 = vld [vmem:[%s0 + $0x38] sm:$0xf]
  %v36 = vld [vmem:[%s0 + $0x3c] sm:$0xf]
  %v37 = vld [vmem:[%s0 + $0x40] sm:$0xf]
  %v38 = vld [vmem:[%s0 + $0x44] sm:$0xf]
  %v39 = vld [vmem:[%s0 + $0x48] sm:$0xf]
  %v40 = vld [vmem:[%s0 + $0x4c] sm:$0xf]
  %v41 = vld [vmem:[%s0 + $0x50] sm:$0xf]
  %v42 = vld [vmem:[%s0 + $0x54] sm:$0xf]
  %v43 = vld [vmem:[%s0 + $0x58] sm:$0xf]
  %v44 = vld [vmem:[%s0 + $0x5c] sm:$0xf]
  %v45 = vld [vmem:[%s0 + $0x60] sm:$0xf]
  %v46 = vld [vmem:[%s0 + $0x64] sm:$0xf]
  %v47 = vld [vmem:[%s0 + $0x68] sm:$0xf]
  %v48 = vld [vmem:[%s0 + $0x6c] sm:$0xf]
  %v49 = vld [vmem:[%s0 + $0x70] sm:$0xf]
  %v50 = vld [vmem:[%s0 + $0x74] sm:$0xf]
  %v51 = vld [vmem:[%s0 + $0x78] sm:$0xf]
  %v52 = vld [vmem:[%s0 + $0x7c] sm:$0xf]
  %v53 = vld [vmem:[%s0 + $0x80] sm:$0xf]
  %v54 = vld [vmem:[%s0 + $0x84] sm:$0xf]
  %v55 = vld [vmem:[%s0 + $0x88] sm:$0xf]
  %v56 = vld [vmem:[%s0 + $0x8c] sm:$0xf]
  %v57 = vld [vmem:[%s0 + $0x90] sm:$0xf]
  %v58 = vld [vmem:[%s0 + $0x94] sm:$0xf]
  %v59 = vld [vmem:[%s0 + $0x98] sm:$0xf]
  %v60 = vld [vmem:[%s0 + $0x9c] sm:$0xf]
  %v61 = vld [vmem:[%s0 + $0xa0] sm:$0xf]
  %v62 = vld [vmem:[%s0 + $0xa4] sm:$0xf]
  %v63 = vld [vmem:[%s0 + $0xa8] sm:$0xf]
  %v64 = vld [vmem:[%s0 + $0xac] sm:$0xf]
  %v65 = vld [vmem:[%s0 + $0xb0] sm:$0xf]
  %v66 = vld [vmem:[%s0 + $0xb4] sm:$0xf]
  %v67 = vld [vmem:[%s0 + $0xb8] sm:$0xf]
  %v68 = vld [vmem:[%s0 + $0xbc] sm:$0xf]
  %v69 = vld [vmem:[%s0 + $0xc0] sm:$0xf]
  %v70 = vld [vmem:[%s0 + $0xc4] sm:$0xf]
  %v71 = vld [vmem:[%s0 + $0xc8] sm:$0xf]
  %v72 = vld [vmem:[%s0 + $0xcc] sm:$0xf]
  %v73 = vld [vmem:[%s0 + $0xd0] sm:$0xf]
  %v74 = vld [vmem:[%s0 + $0xd4] sm:$0xf]
  %v75 = vld [vmem:[%s0 + $0xd8] sm:$0xf]
  %v76 = vld [vmem:[%s0 + $0xdc] sm:$0xf]
  %v77 = vld [vmem:[%s0 + $0xe0] sm:$0xf]
  %v78 = vld [vmem:[%s0 + $0xe4] sm:$0xf]
  %v79 = vld [vmem:[%s0 + $0xe8] sm:$0xf]
  %v80 = vld [vmem:[%s0 + $0xec] sm:$0xf]
  %v81 = vld [vmem:[%s0 + $0xf0] sm:$0xf]
  %v82 = vld [vmem:[%s0 + $0xf4] sm:$0xf]
  %v83 = vld [vmem:[%s0 + $0xf8] sm:$0xf]
  %v84 = vld [vmem:[%s0 + $0xfc] sm:$0xf]
  %v85 = vld [vmem:[%s0 + $0x100] sm:$0xf]
  %v86 = vld [vmem:[%s0 + $0x104] sm:$0xf]
  %v87 = vld [vmem:[%s0 + $0x108] sm:$0xf]
  %v88 = vld [vmem:[%s0 + $0x10c] sm:$0xf]
  %v89 = vld [vmem:[%s0 + $0x110] sm:$0xf]
  %v90 = vld [vmem:[%s0 + $0x114] sm:$0xf]
  %v91 = vld [vmem:[%s0 + $0x118] sm:$0xf]
  %v92 = vld [vmem:[%s0 + $0x11c] sm:$0xf]
  %v93 = vld [vmem:[%s0 + $0x120] sm:$0xf]
  %v94 = vld [vmem:[%s0 + $0x124] sm:$0xf]
  %v95 = vld [vmem:[%s0 + $0x128] sm:$0xf]
  %v96 = vld [vmem:[%s0 + $0x12c] sm:$0xf]
  %v97 = vld [vmem:[%s0 + $0x130] sm:$0xf]
  %v98 = vld [vmem:[%s0 + $0x134] sm:$0xf]
  %v99 = vld [vmem:[%s0 + $0x138] sm:$0xf]
  %v100 = vld [vmem:[%s0 + $0x13c] sm:$0xf]
  %v101 = vld [vmem:[%s0 + $0x140] sm:$0xf]
  %v102 = vld [vmem:[%s0 + $0x144] sm:$0xf]
  %v103 = vld [vmem:[%s0 + $0x148] sm:$0xf]
  %v104 = vld [vmem:[%s0 + $0x14c] sm:$0xf]
  %v105 = vld [vmem:[%s0 + $0x150] sm:$0xf]
  %v106 = vld [vmem:[%s0 + $0x154] sm:$0xf]
  %v107 = vld [vmem:[%s0 + $0x158] sm:$0xf]
  %v108 = vld [vmem:[%s0 + $0x15c] sm:$0xf]
  %v109 = vld [vmem:[%s0 + $0x160] sm:$0xf]
  %v110 = vld [vmem:[%s0 + $0x164] sm:$0xf]
  %v111 = vld [vmem:[%s0 + $0x168] sm:$0xf]
  %v112 = vld [vmem:[%s0 + $0x16c] sm:$0xf]
  %v113 = vld [vmem:[%s0 + $0x170] sm:$0xf]
  %v114 = vld [vmem:[%s0 + $0x174] sm:$0xf]
  %v115 = vld [vmem:[%s0 + $0x178] sm:$0xf]
  %v116 = vld [vmem:[%s0 + $0x17c] sm:$0xf]
  %v117 = vld [vmem:[%s0 + $0x180] sm:$0xf]
  %v118 = vld [vmem:[%s0 + $0x184] sm:$0xf]
  %v119 = vld [vmem:[%s0 + $0x188] sm:$0xf]
  %v120 = vld [vmem:[%s0 + $0x18c] sm:$0xf]
  %v121 = vld [vmem:[%s0 + $0x190] sm:$0xf]
  %v122 = vld [vmem:[%s0 + $0x194] sm:$0xf]
  %v123 = vld [vmem:[%s0 + $0x198] sm:$0xf]
  %v124 = vld [vmem:[%s0 + $0x19c] sm:$0xf]
  %v125 = vld [vmem:[%s0 + $0x1a0] sm:$0xf]
  %v126 = vld [vmem:[%s0 + $0x1a4] sm:$0xf]
  %v127 = vld [vmem:[%s0 + $0x1a8] sm:$0xf]
  %v128 = vld [vmem:[%s0 + $0x1ac] sm:$0xf]
  %v129 = vld [vmem:[%s0 + $0x1b0] sm:$0xf]
  %v130 = vld [vmem:[%s0 + $0x1b4] sm:$0xf]
  %v131 = vld [vmem:[%s0 + $0x1b8] sm:$0xf]
  %v132 = vld [vmem:[%s0 + $0x1bc] sm:$0xf]
  %v133 = vld [vmem:[%s0 + $0x1c0] sm:$0xf]
  %v134 = vld [vmem:[%s0 + $0x1c4] sm:$0xf]
  %v135 = vld [vmem:[%s0 + $0x1c8] sm:$0xf]
  %v136 = vld [vmem:[%s0 + $0x1cc] sm:$0xf]
  %v137 = vld [vmem:[%s0 + $0x1d0] sm:$0xf]
  %v138 = vld [vmem:[%s0 + $0x1d4] sm:$0xf]
  %v139 = vld [vmem:[%s0 + $0x1d8] sm:$0xf]
  %v140 = vld [vmem:[%s0 + $0x1dc] sm:$0xf]
  %v141 = vld [vmem:[%s0 + $0x1e0] sm:$0xf]
  %v142 = vld [vmem:[%s0 + $0x1e4] sm:$0xf]
  %v143 = vld [vmem:[%s0 + $0x1e8] sm:$0xf]
  %v144 = vld [vmem:[%s0 + $0x1ec] sm:$0xf]
  %v145 = vld [vmem:[%s0 + $0x1f0] sm:$0xf]
  %v146 = vld [vmem:[%s0 + $0x1f4] sm:$0xf]
  %v147 = vld [vmem:[%s0 + $0x1f8] sm:$0xf]
  %v148 = vld [vmem:[%s0 + $0x1fc] sm:$0xf]
  %v149 = vld [vmem:[%s0 + $0x200] sm:$0xf]
  %v150 = vld [vmem:[%s0 + $0x204] sm:$0xf]
  %v151 = vld [vmem:[%s0 + $0x208] sm:$0xf]
  %v152 = vld [vmem:[%s0 + $0x20c] sm:$0xf]
  %v153 = vld [vmem:[%s0 + $0x210] sm:$0xf]
  %v154 = vld [vmem:[%s0 + $0x214] sm:$0xf]
  %v155 = vld [vmem:[%s0 + $0x218] sm:$0xf]
  %v156 = vld [vmem:[%s0 + $0x21c] sm:$0xf]
  %v157 = vld [vmem:[%s0 + $0x220] sm:$0xf]
  %v158 = vld [vmem:[%s0 + $0x224] sm:$0xf]
  %v159 = vld [vmem:[%s0 + $0x228] sm:$0xf]
  %v160 = vld [vmem:[%s0 + $0x22c] sm:$0xf]
  %v161 = vld [vmem:[%s0 + $0x230] sm:$0xf]
  %v162 = vld [vmem:[%s0 + $0x234] sm:$0xf]
  %v163 = vld [vmem:[%s0 + $0x238] sm:$0xf]
  %v164 = vld [vmem:[%s0 + $0x23c] sm:$0xf]
  %v165 = vld [vmem:[%s0 + $0x240] sm:$0xf]
  %v166 = vld [vmem:[%s0 + $0x244] sm:$0xf]
  %v167 = vld [vmem:[%s0 + $0x248] sm:$0xf]
  %v168 = vld [vmem:[%s0 + $0x24c] sm:$0xf]
  %v169 = vld [vmem:[%s0 + $0x250] sm:$0xf]
  %v170 = vld [vmem:[%s0 + $0x254] sm:$0xf]
  %v171 = vld [vmem:[%s0 + $0x258] sm:$0xf]
  %v172 = vld [vmem:[%s0 + $0x25c] sm:$0xf]
  %v173 = vld [vmem:[%s0 + $0x260] sm:$0xf]
  %v174 = vld [vmem:[%s0 + $0x264] sm:$0xf]
  %v175 = vld [vmem:[%s0 + $0x268] sm:$0xf]
  %v176 = vld [vmem:[%s0 + $0x26c] sm:$0xf]
  %v177 = vld [vmem:[%s0 + $0x270] sm:$0xf]
  %v178 = vld [vmem:[%s0 + $0x274] sm:$0xf]
  %v179 = vld [vmem:[%s0 + $0x278] sm:$0xf]
  %v180 = vld [vmem:[%s0 + $0x27c] sm:$0xf]
  %v181 = vld [vmem:[%s0 + $0x280] sm:$0xf]
  %v182 = vld [vmem:[%s0 + $0x284] sm:$0xf]
  %v183 = vld [vmem:[%s0 + $0x288] sm:$0xf]
  %v184 = vld [vmem:[%s0 + $0x28c] sm:$0xf]
  %v185 = vld [vmem:[%s0 + $0x290] sm:$0xf]
  %v186 = vld [vmem:[%s0 + $0x294] sm:$0xf]
  %v187 = vld [vmem:[%s0 + $0x298] sm:$0xf]
  %v188 = vld [vmem:[%s0 + $0x29c] sm:$0xf]
  %v189 = vld [vmem:[%s0 + $0x2a0] sm:$0xf]
  %v190 = vld [vmem:[%s0 + $0x2a4] sm:$0xf]
  %v191 = vld [vmem:[%s0 + $0x2a8] sm:$0xf]
  %v192 = vld [vmem:[%s0 + $0x2ac] sm:$0xf]
  %v193 = vld [vmem:[%s0 + $0x2b0] sm:$0xf]
  %v194 = vld [vmem:[%s0 + $0x2b4] sm:$0xf]
  %v195 = vld [vmem:[%s0 + $0x2b8] sm:$0xf]
  %v196 = vld [vmem:[%s0 + $0x2bc] sm:$0xf]
  %v197 = vld [vmem:[%s0 + $0x2c0] sm:$0xf]
  %v198 = vld [vmem:[%s0 + $0x2c4] sm:$0xf]
  %v199 = vld [vmem:[%s0 + $0x2c8] sm:$0xf]
  %v200 = vld [vmem:[%s0 + $0x2cc] sm:$0xf]
  %v201 = vld [vmem:[%s0 + $0x2d0] sm:$0xf]
  %v202 = vld [vmem:[%s0 + $0x2d4] sm:$0xf]
  %v203 = vld [vmem:[%s0 + $0x2d8] sm:$0xf]
  %v204 = vld [vmem:[%s0 + $0x2dc] sm:$0xf]
  %v205 = vld [vmem:[%s0 + $0x2e0] sm:$0xf]
  %v206 = vld [vmem:[%s0 + $0x2e4] sm:$0xf]
  %v207 = vld [vmem:[%s0 + $0x2e8] sm:$0xf]
  %v208 = vld [vmem:[%s0 + $0x2ec] sm:$0xf]
  %v209 = vld [vmem:[%s0 + $0x2f0] sm:$0xf]
  %v210 = vld [vmem:[%s0 + $0x2f4] sm:$0xf]
  %v211 = vld [vmem:[%s0 + $0x2f8] sm:$0xf]
  %v212 = vld [vmem:[%s0 + $0x2fc] sm:$0xf]
  %v213 = vld [vmem:[%s0 + $0x300] sm:$0xf]
  %v214 = vld [vmem:[%s0 + $0x304] sm:$0xf]
  %v215 = vld [vmem:[%s0 + $0x308] sm:$0xf]
  %v216 = vld [vmem:[%s0 + $0x30c] sm:$0xf]
  %v217 = vld [vmem:[%s0 + $0x310] sm:$0xf]
  %v218 = vld [vmem:[%s0 + $0x314] sm:$0xf]
  %v219 = vld [vmem:[%s0 + $0x318] sm:$0xf]
  %v220 = vld [vmem:[%s0 + $0x31c] sm:$0xf]
  %v221 = vld [vmem:[%s0 + $0x320] sm:$0xf]
  %v222 = vld [vmem:[%s0 + $0x324] sm:$0xf]
  %v223 = vld [vmem:[%s0 + $0x328] sm:$0xf]
  %v224 = vld [vmem:[%s0 + $0x32c] sm:$0xf]
  %v225 = vld [vmem:[%s0 + $0x330] sm:$0xf]
  %v226 = vld [vmem:[%s0 + $0x334] sm:$0xf]
  %v227 = vld [vmem:[%s0 + $0x338] sm:$0xf]
  %v228 = vld [vmem:[%s0 + $0x33c] sm:$0xf]
  %v229 = vld [vmem:[%s0 + $0x340] sm:$0xf]
  %v230 = vld [vmem:[%s0 + $0x344] sm:$0xf]
  %v231 = vld [vmem:[%s0 + $0x348] sm:$0xf]
  %v232 = vld [vmem:[%s0 + $0x34c] sm:$0xf]
  %v233 = vld [vmem:[%s0 + $0x350] sm:$0xf]
  %v234 = vld [vmem:[%s0 + $0x354] sm:$0xf]
  %v235 = vld [vmem:[%s0 + $0x358] sm:$0xf]
  %v236 = vld [vmem:[%s0 + $0x35c] sm:$0xf]
  %v237 = vld [vmem:[%s0 + $0x360] sm:$0xf]
  %v238 = vld [vmem:[%s0 + $0x364] sm:$0xf]
  %v239 = vld [vmem:[%s0 + $0x368] sm:$0xf]
  %v240 = vld [vmem:[%s0 + $0x36c] sm:$0xf]
  %v241 = vld [vmem:[%s0 + $0x370] sm:$0xf]
  %v242 = vld [vmem:[%s0 + $0x374] sm:$0xf]
  %v243 = vld [vmem:[%s0 + $0x378] sm:$0xf]
  %v244 = vld [vmem:[%s0 + $0x37c] sm:$0xf]
  %v245 = vld [vmem:[%s0 + $0x380] sm:$0xf]
  %v246 = vld [vmem:[%s0 + $0x384] sm:$0xf]
  %v247 = vld [vmem:[%s0 + $0x388] sm:$0xf]
  %v248 = vld [vmem:[%s0 + $0x38c] sm:$0xf]
  %v249 = vld [vmem:[%s0 + $0x390] sm:$0xf]
  %v250 = vld [vmem:[%s0 + $0x394] sm:$0xf]
  %v251 = vld [vmem:[%s0 + $0x398] sm:$0xf]
  %v252 = vld [vmem:[%s0 + $0x39c] sm:$0xf]
  %v253 = vld [vmem:[%s0 + $0x3a0] sm:$0xf]
  %v254 = vld [vmem:[%s0 + $0x3a4] sm:$0xf]
  %v255 = vld [vmem:[%s0 + $0x3a8] sm:$0xf]
  %v256 = vld [vmem:[%s0 + $0x3ac] sm:$0xf]
  %v257 = vld [vmem:[%s0 + $0x3b0] sm:$0xf]
  %v258 = vld [vmem:[%s0 + $0x3b4] sm:$0xf]
  %v259 = vld [vmem:[%s0 + $0x3b8] sm:$0xf]
  %v260 = vld [vmem:[%s0 + $0x3bc] sm:$0xf]
  %v261 = vld [vmem:[%s0 + $0x3c0] sm:$0xf]
  %v262 = vld [vmem:[%s0 + $0x3c4] sm:$0xf]
  %v263 = vld [vmem:[%s0 + $0x3c8] sm:$0xf]
  %v264 = vld [vmem:[%s0 + $0x3cc] sm:$0xf]
  %v265 = vld [vmem:[%s0 + $0x3d0] sm:$0xf]
  %v266 = vld [vmem:[%s0 + $0x3d4] sm:$0xf]
  %v267 = vld [vmem:[%s0 + $0x3d8] sm:$0xf]
  %v268 = vld [vmem:[%s0 + $0x3dc] sm:$0xf]
  %v269 = vld [vmem:[%s0 + $0x3e0] sm:$0xf]
  %v270 = vld [vmem:[%s0 + $0x3e4] sm:$0xf]
  %v271 = vld [vmem:[%s0 + $0x3e8] sm:$0xf]
  %v272 = vld [vmem:[%s0 + $0x3ec] sm:$0xf]
  %v273 = vld [vmem:[%s0 + $0x3f0] sm:$0xf]
  %v274 = vld [vmem:[%s0 + $0x3f4] sm:$0xf]
  %v275 = vld [vmem:[%s0 + $0x3f8] sm:$0xf]
  %v276 = vld [vmem:[%s0 + $0x3fc] sm:$0xf]
  %v277 = vld [vmem:[%s1] sm:$0xf]
  %v278 = vld [vmem:[%s3] sm:$0x1]
  %v280 = vlaneseq
  %v281 = vshrl.u32 %v280, 7
  %v282 = vsub.s32 0, %v281
  %v283 = vrot.slane %v278, %v282
  %v541 = vunpack.c.l.b16 %v21
  %v542 = vunpack.c.l.b16 %v22
  %v543 = vunpack.c.l.b16 %v23
  %v544 = vunpack.c.l.b16 %v24
  %v545 = vunpack.c.l.b16 %v25
  %v546 = vunpack.c.l.b16 %v26
  %v547 = vunpack.c.l.b16 %v27
  %v548 = vunpack.c.l.b16 %v28
  %v549 = vunpack.c.l.b16 %v29
  %v550 = vunpack.c.l.b16 %v30
  %v551 = vunpack.c.l.b16 %v31
  %v552 = vunpack.c.l.b16 %v32
  %v553 = vunpack.c.l.b16 %v33
  %v554 = vunpack.c.l.b16 %v34
  %v555 = vunpack.c.l.b16 %v35
  %v556 = vunpack.c.l.b16 %v36
  %v557 = vunpack.c.l.b16 %v37
  %v558 = vunpack.c.l.b16 %v38
  %v559 = vunpack.c.l.b16 %v39
  %v560 = vunpack.c.l.b16 %v40
  %v561 = vunpack.c.l.b16 %v41
  %v562 = vunpack.c.l.b16 %v42
  %v563 = vunpack.c.l.b16 %v43
  %v564 = vunpack.c.l.b16 %v44
  %v565 = vunpack.c.l.b16 %v45
  %v566 = vunpack.c.l.b16 %v46
  %v567 = vunpack.c.l.b16 %v47
  %v568 = vunpack.c.l.b16 %v48
  %v569 = vunpack.c.l.b16 %v49
  %v570 = vunpack.c.l.b16 %v50
  %v571 = vunpack.c.l.b16 %v51
  %v572 = vunpack.c.l.b16 %v52
  %v573 = vunpack.c.l.b16 %v53
  %v574 = vunpack.c.l.b16 %v54
  %v575 = vunpack.c.l.b16 %v55
  %v576 = vunpack.c.l.b16 %v56
  %v577 = vunpack.c.l.b16 %v57
  %v578 = vunpack.c.l.b16 %v58
  %v579 = vunpack.c.l.b16 %v59
  %v580 = vunpack.c.l.b16 %v60
  %v581 = vunpack.c.l.b16 %v61
  %v582 = vunpack.c.l.b16 %v62
  %v583 = vunpack.c.l.b16 %v63
  %v584 = vunpack.c.l.b16 %v64
  %v585 = vunpack.c.l.b16 %v65
  %v586 = vunpack.c.l.b16 %v66
  %v587 = vunpack.c.l.b16 %v67
  %v588 = vunpack.c.l.b16 %v68
  %v589 = vunpack.c.l.b16 %v69
  %v590 = vunpack.c.l.b16 %v70
  %v591 = vunpack.c.l.b16 %v71
  %v592 = vunpack.c.l.b16 %v72
  %v593 = vunpack.c.l.b16 %v73
  %v594 = vunpack.c.l.b16 %v74
  %v595 = vunpack.c.l.b16 %v75
  %v596 = vunpack.c.l.b16 %v76
  %v597 = vunpack.c.l.b16 %v77
  %v598 = vunpack.c.l.b16 %v78
  %v599 = vunpack.c.l.b16 %v79
  %v600 = vunpack.c.l.b16 %v80
  %v601 = vunpack.c.l.b16 %v81
  %v602 = vunpack.c.l.b16 %v82
  %v603 = vunpack.c.l.b16 %v83
  %v604 = vunpack.c.l.b16 %v84
  %v605 = vunpack.c.l.b16 %v85
  %v606 = vunpack.c.l.b16 %v86
  %v607 = vunpack.c.l.b16 %v87
  %v608 = vunpack.c.l.b16 %v88
  %v609 = vunpack.c.l.b16 %v89
  %v610 = vunpack.c.l.b16 %v90
  %v611 = vunpack.c.l.b16 %v91
  %v612 = vunpack.c.l.b16 %v92
  %v613 = vunpack.c.l.b16 %v93
  %v614 = vunpack.c.l.b16 %v94
  %v615 = vunpack.c.l.b16 %v95
  %v616 = vunpack.c.l.b16 %v96
  %v617 = vunpack.c.l.b16 %v97
  %v618 = vunpack.c.l.b16 %v98
  %v619 = vunpack.c.l.b16 %v99
  %v620 = vunpack.c.l.b16 %v100
  %v621 = vunpack.c.l.b16 %v101
  %v622 = vunpack.c.l.b16 %v102
  %v623 = vunpack.c.l.b16 %v103
  %v624 = vunpack.c.l.b16 %v104
  %v625 = vunpack.c.l.b16 %v105
  %v626 = vunpack.c.l.b16 %v106
  %v627 = vunpack.c.l.b16 %v107
  %v628 = vunpack.c.l.b16 %v108
  %v629 = vunpack.c.l.b16 %v109
  %v630 = vunpack.c.l.b16 %v110
  %v631 = vunpack.c.l.b16 %v111
  %v632 = vunpack.c.l.b16 %v112
  %v633 = vunpack.c.l.b16 %v113
  %v634 = vunpack.c.l.b16 %v114
  %v635 = vunpack.c.l.b16 %v115
  %v636 = vunpack.c.l.b16 %v116
  %v637 = vunpack.c.l.b16 %v117
  %v638 = vunpack.c.l.b16 %v118
  %v639 = vunpack.c.l.b16 %v119
  %v640 = vunpack.c.l.b16 %v120
  %v641 = vunpack.c.l.b16 %v121
  %v642 = vunpack.c.l.b16 %v122
  %v643 = vunpack.c.l.b16 %v123
  %v644 = vunpack.c.l.b16 %v124
  %v645 = vunpack.c.l.b16 %v125
  %v646 = vunpack.c.l.b16 %v126
  %v647 = vunpack.c.l.b16 %v127
  %v648 = vunpack.c.l.b16 %v128
  %v649 = vunpack.c.l.b16 %v129
  %v650 = vunpack.c.l.b16 %v130
  %v651 = vunpack.c.l.b16 %v131
  %v652 = vunpack.c.l.b16 %v132
  %v653 = vunpack.c.l.b16 %v133
  %v654 = vunpack.c.l.b16 %v134
  %v655 = vunpack.c.l.b16 %v135
  %v656 = vunpack.c.l.b16 %v136
  %v657 = vunpack.c.l.b16 %v137
  %v658 = vunpack.c.l.b16 %v138
  %v659 = vunpack.c.l.b16 %v139
  %v660 = vunpack.c.l.b16 %v140
  %v661 = vunpack.c.l.b16 %v141
  %v662 = vunpack.c.l.b16 %v142
  %v663 = vunpack.c.l.b16 %v143
  %v664 = vunpack.c.l.b16 %v144
  %v665 = vunpack.c.l.b16 %v145
  %v666 = vunpack.c.l.b16 %v146
  %v667 = vunpack.c.l.b16 %v147
  %v668 = vunpack.c.l.b16 %v148
  %v669 = vunpack.c.l.b16 %v149
  %v670 = vunpack.c.l.b16 %v150
  %v671 = vunpack.c.l.b16 %v151
  %v672 = vunpack.c.l.b16 %v152
  %v673 = vunpack.c.l.b16 %v153
  %v674 = vunpack.c.l.b16 %v154
  %v675 = vunpack.c.l.b16 %v155
  %v676 = vunpack.c.l.b16 %v156
  %v677 = vunpack.c.l.b16 %v157
  %v678 = vunpack.c.l.b16 %v158
  %v679 = vunpack.c.l.b16 %v159
  %v680 = vunpack.c.l.b16 %v160
  %v681 = vunpack.c.l.b16 %v161
  %v682 = vunpack.c.l.b16 %v162
  %v683 = vunpack.c.l.b16 %v163
  %v684 = vunpack.c.l.b16 %v164
  %v685 = vunpack.c.l.b16 %v165
  %v686 = vunpack.c.l.b16 %v166
  %v687 = vunpack.c.l.b16 %v167
  %v688 = vunpack.c.l.b16 %v168
  %v689 = vunpack.c.l.b16 %v169
  %v690 = vunpack.c.l.b16 %v170
  %v691 = vunpack.c.l.b16 %v171
  %v692 = vunpack.c.l.b16 %v172
  %v693 = vunpack.c.l.b16 %v173
  %v694 = vunpack.c.l.b16 %v174
  %v695 = vunpack.c.l.b16 %v175
  %v696 = vunpack.c.l.b16 %v176
  %v697 = vunpack.c.l.b16 %v177
  %v698 = vunpack.c.l.b16 %v178
  %v699 = vunpack.c.l.b16 %v179
  %v700 = vunpack.c.l.b16 %v180
  %v701 = vunpack.c.l.b16 %v181
  %v702 = vunpack.c.l.b16 %v182
  %v703 = vunpack.c.l.b16 %v183
  %v704 = vunpack.c.l.b16 %v184
  %v705 = vunpack.c.l.b16 %v185
  %v706 = vunpack.c.l.b16 %v186
  %v707 = vunpack.c.l.b16 %v187
  %v708 = vunpack.c.l.b16 %v188
  %v709 = vunpack.c.l.b16 %v189
  %v710 = vunpack.c.l.b16 %v190
  %v711 = vunpack.c.l.b16 %v191
  %v712 = vunpack.c.l.b16 %v192
  %v713 = vunpack.c.l.b16 %v193
  %v714 = vunpack.c.l.b16 %v194
  %v715 = vunpack.c.l.b16 %v195
  %v716 = vunpack.c.l.b16 %v196
  %v717 = vunpack.c.l.b16 %v197
  %v718 = vunpack.c.l.b16 %v198
  %v719 = vunpack.c.l.b16 %v199
  %v720 = vunpack.c.l.b16 %v200
  %v721 = vunpack.c.l.b16 %v201
  %v722 = vunpack.c.l.b16 %v202
  %v723 = vunpack.c.l.b16 %v203
  %v724 = vunpack.c.l.b16 %v204
  %v725 = vunpack.c.l.b16 %v205
  %v726 = vunpack.c.l.b16 %v206
  %v727 = vunpack.c.l.b16 %v207
  %v728 = vunpack.c.l.b16 %v208
  %v729 = vunpack.c.l.b16 %v209
  %v730 = vunpack.c.l.b16 %v210
  %v731 = vunpack.c.l.b16 %v211
  %v732 = vunpack.c.l.b16 %v212
  %v733 = vunpack.c.l.b16 %v213
  %v734 = vunpack.c.l.b16 %v214
  %v735 = vunpack.c.l.b16 %v215
  %v736 = vunpack.c.l.b16 %v216
  %v737 = vunpack.c.l.b16 %v217
  %v738 = vunpack.c.l.b16 %v218
  %v739 = vunpack.c.l.b16 %v219
  %v740 = vunpack.c.l.b16 %v220
  %v741 = vunpack.c.l.b16 %v221
  %v742 = vunpack.c.l.b16 %v222
  %v743 = vunpack.c.l.b16 %v223
  %v744 = vunpack.c.l.b16 %v224
  %v745 = vunpack.c.l.b16 %v225
  %v746 = vunpack.c.l.b16 %v226
  %v747 = vunpack.c.l.b16 %v227
  %v748 = vunpack.c.l.b16 %v228
  %v749 = vunpack.c.l.b16 %v229
  %v750 = vunpack.c.l.b16 %v230
  %v751 = vunpack.c.l.b16 %v231
  %v752 = vunpack.c.l.b16 %v232
  %v753 = vunpack.c.l.b16 %v233
  %v754 = vunpack.c.l.b16 %v234
  %v755 = vunpack.c.l.b16 %v235
  %v756 = vunpack.c.l.b16 %v236
  %v757 = vunpack.c.l.b16 %v237
  %v758 = vunpack.c.l.b16 %v238
  %v759 = vunpack.c.l.b16 %v239
  %v760 = vunpack.c.l.b16 %v240
  %v761 = vunpack.c.l.b16 %v241
  %v762 = vunpack.c.l.b16 %v242
  %v763 = vunpack.c.l.b16 %v243
  %v764 = vunpack.c.l.b16 %v244
  %v765 = vunpack.c.l.b16 %v245
  %v766 = vunpack.c.l.b16 %v246
  %v767 = vunpack.c.l.b16 %v247
  %v768 = vunpack.c.l.b16 %v248
  %v769 = vunpack.c.l.b16 %v249
  %v770 = vunpack.c.l.b16 %v250
  %v771 = vunpack.c.l.b16 %v251
  %v772 = vunpack.c.l.b16 %v252
  %v773 = vunpack.c.l.b16 %v253
  %v774 = vunpack.c.l.b16 %v254
  %v775 = vunpack.c.l.b16 %v255
  %v776 = vunpack.c.l.b16 %v256
  %v777 = vunpack.c.l.b16 %v257
  %v778 = vunpack.c.l.b16 %v258
  %v779 = vunpack.c.l.b16 %v259
  %v780 = vunpack.c.l.b16 %v260
  %v781 = vunpack.c.l.b16 %v261
  %v782 = vunpack.c.l.b16 %v262
  %v783 = vunpack.c.l.b16 %v263
  %v784 = vunpack.c.l.b16 %v264
  %v785 = vunpack.c.l.b16 %v265
  %v786 = vunpack.c.l.b16 %v266
  %v787 = vunpack.c.l.b16 %v267
  %v788 = vunpack.c.l.b16 %v268
  %v789 = vunpack.c.l.b16 %v269
  %v790 = vunpack.c.l.b16 %v270
  %v791 = vunpack.c.l.b16 %v271
  %v792 = vunpack.c.l.b16 %v272
  %v793 = vunpack.c.l.b16 %v273
  %v794 = vunpack.c.l.b16 %v274
  %v795 = vunpack.c.l.b16 %v275
  %v796 = vunpack.c.l.b16 %v276
  %v797 = vpack.c.b16 %v542, %v541
  %v798 = vpack.c.b16 %v544, %v543
  %v799 = vpack.c.b16 %v546, %v545
  %v800 = vpack.c.b16 %v548, %v547
  %v801 = vpack.c.b16 %v550, %v549
  %v802 = vpack.c.b16 %v552, %v551
  %v803 = vpack.c.b16 %v554, %v553
  %v804 = vpack.c.b16 %v556, %v555
  %v805 = vpack.c.b16 %v558, %v557
  %v806 = vpack.c.b16 %v560, %v559
  %v807 = vpack.c.b16 %v562, %v561
  %v808 = vpack.c.b16 %v564, %v563
  %v809 = vpack.c.b16 %v566, %v565
  %v810 = vpack.c.b16 %v568, %v567
  %v811 = vpack.c.b16 %v570, %v569
  %v812 = vpack.c.b16 %v572, %v571
  %v813 = vpack.c.b16 %v574, %v573
  %v814 = vpack.c.b16 %v576, %v575
  %v815 = vpack.c.b16 %v578, %v577
  %v816 = vpack.c.b16 %v580, %v579
  %v817 = vpack.c.b16 %v582, %v581
  %v818 = vpack.c.b16 %v584, %v583
  %v819 = vpack.c.b16 %v586, %v585
  %v820 = vpack.c.b16 %v588, %v587
  %v821 = vpack.c.b16 %v590, %v589
  %v822 = vpack.c.b16 %v592, %v591
  %v823 = vpack.c.b16 %v594, %v593
  %v824 = vpack.c.b16 %v596, %v595
  %v825 = vpack.c.b16 %v598, %v597
  %v826 = vpack.c.b16 %v600, %v599
  %v827 = vpack.c.b16 %v602, %v601
  %v828 = vpack.c.b16 %v604, %v603
  %v829 = vpack.c.b16 %v606, %v605
  %v830 = vpack.c.b16 %v608, %v607
  %v831 = vpack.c.b16 %v610, %v609
  %v832 = vpack.c.b16 %v612, %v611
  %v833 = vpack.c.b16 %v614, %v613
  %v834 = vpack.c.b16 %v616, %v615
  %v835 = vpack.c.b16 %v618, %v617
  %v836 = vpack.c.b16 %v620, %v619
  %v837 = vpack.c.b16 %v622, %v621
  %v838 = vpack.c.b16 %v624, %v623
  %v839 = vpack.c.b16 %v626, %v625
  %v840 = vpack.c.b16 %v628, %v627
  %v841 = vpack.c.b16 %v630, %v629
  %v842 = vpack.c.b16 %v632, %v631
  %v843 = vpack.c.b16 %v634, %v633
  %v844 = vpack.c.b16 %v636, %v635
  %v845 = vpack.c.b16 %v638, %v637
  %v846 = vpack.c.b16 %v640, %v639
  %v847 = vpack.c.b16 %v642, %v641
  %v848 = vpack.c.b16 %v644, %v643
  %v849 = vpack.c.b16 %v646, %v645
  %v850 = vpack.c.b16 %v648, %v647
  %v851 = vpack.c.b16 %v650, %v649
  %v852 = vpack.c.b16 %v652, %v651
  %v853 = vpack.c.b16 %v654, %v653
  %v854 = vpack.c.b16 %v656, %v655
  %v855 = vpack.c.b16 %v658, %v657
  %v856 = vpack.c.b16 %v660, %v659
  %v857 = vpack.c.b16 %v662, %v661
  %v858 = vpack.c.b16 %v664, %v663
  %v859 = vpack.c.b16 %v666, %v665
  %v860 = vpack.c.b16 %v668, %v667
  %v861 = vpack.c.b16 %v670, %v669
  %v862 = vpack.c.b16 %v672, %v671
  %v863 = vpack.c.b16 %v674, %v673
  %v864 = vpack.c.b16 %v676, %v675
  %v865 = vpack.c.b16 %v678, %v677
  %v866 = vpack.c.b16 %v680, %v679
  %v867 = vpack.c.b16 %v682, %v681
  %v868 = vpack.c.b16 %v684, %v683
  %v869 = vpack.c.b16 %v686, %v685
  %v870 = vpack.c.b16 %v688, %v687
  %v871 = vpack.c.b16 %v690, %v689
  %v872 = vpack.c.b16 %v692, %v691
  %v873 = vpack.c.b16 %v694, %v693
  %v874 = vpack.c.b16 %v696, %v695
  %v875 = vpack.c.b16 %v698, %v697
  %v876 = vpack.c.b16 %v700, %v699
  %v877 = vpack.c.b16 %v702, %v701
  %v878 = vpack.c.b16 %v704, %v703
  %v879 = vpack.c.b16 %v706, %v705
  %v880 = vpack.c.b16 %v708, %v707
  %v881 = vpack.c.b16 %v710, %v709
  %v882 = vpack.c.b16 %v712, %v711
  %v883 = vpack.c.b16 %v714, %v713
  %v884 = vpack.c.b16 %v716, %v715
  %v885 = vpack.c.b16 %v718, %v717
  %v886 = vpack.c.b16 %v720, %v719
  %v887 = vpack.c.b16 %v722, %v721
  %v888 = vpack.c.b16 %v724, %v723
  %v889 = vpack.c.b16 %v726, %v725
  %v890 = vpack.c.b16 %v728, %v727
  %v891 = vpack.c.b16 %v730, %v729
  %v892 = vpack.c.b16 %v732, %v731
  %v893 = vpack.c.b16 %v734, %v733
  %v894 = vpack.c.b16 %v736, %v735
  %v895 = vpack.c.b16 %v738, %v737
  %v896 = vpack.c.b16 %v740, %v739
  %v897 = vpack.c.b16 %v742, %v741
  %v898 = vpack.c.b16 %v744, %v743
  %v899 = vpack.c.b16 %v746, %v745
  %v900 = vpack.c.b16 %v748, %v747
  %v901 = vpack.c.b16 %v750, %v749
  %v902 = vpack.c.b16 %v752, %v751
  %v903 = vpack.c.b16 %v754, %v753
  %v904 = vpack.c.b16 %v756, %v755
  %v905 = vpack.c.b16 %v758, %v757
  %v906 = vpack.c.b16 %v760, %v759
  %v907 = vpack.c.b16 %v762, %v761
  %v908 = vpack.c.b16 %v764, %v763
  %v909 = vpack.c.b16 %v766, %v765
  %v910 = vpack.c.b16 %v768, %v767
  %v911 = vpack.c.b16 %v770, %v769
  %v912 = vpack.c.b16 %v772, %v771
  %v913 = vpack.c.b16 %v774, %v773
  %v914 = vpack.c.b16 %v776, %v775
  %v915 = vpack.c.b16 %v778, %v777
  %v916 = vpack.c.b16 %v780, %v779
  %v917 = vpack.c.b16 %v782, %v781
  %v918 = vpack.c.b16 %v784, %v783
  %v919 = vpack.c.b16 %v786, %v785
  %v920 = vpack.c.b16 %v788, %v787
  %v921 = vpack.c.b16 %v790, %v789
  %v922 = vpack.c.b16 %v792, %v791
  %v923 = vpack.c.b16 %v794, %v793
  %v924 = vpack.c.b16 %v796, %v795
  %vm925 = vcmask 64512
  %v927 = vsel %vm925, %v797, 0
  %v930 = vsel %vm925, %v798, 0
  %v933 = vsel %vm925, %v799, 0
  %v936 = vsel %vm925, %v800, 0
  %v939 = vsel %vm925, %v801, 0
  %v942 = vsel %vm925, %v802, 0
  %v945 = vsel %vm925, %v803, 0
  %v948 = vsel %vm925, %v804, 0
  %v951 = vsel %vm925, %v805, 0
  %v954 = vsel %vm925, %v806, 0
  %v957 = vsel %vm925, %v807, 0
  %v960 = vsel %vm925, %v808, 0
  %v963 = vsel %vm925, %v809, 0
  %v966 = vsel %vm925, %v810, 0
  %v969 = vsel %vm925, %v811, 0
  %v972 = vsel %vm925, %v812, 0
  %v975 = vsel %vm925, %v813, 0
  %v978 = vsel %vm925, %v814, 0
  %v981 = vsel %vm925, %v815, 0
  %v984 = vsel %vm925, %v816, 0
  %v987 = vsel %vm925, %v817, 0
  %v990 = vsel %vm925, %v818, 0
  %v993 = vsel %vm925, %v819, 0
  %v996 = vsel %vm925, %v820, 0
  %v999 = vsel %vm925, %v821, 0
  %v1002 = vsel %vm925, %v822, 0
  %v1005 = vsel %vm925, %v823, 0
  %v1008 = vsel %vm925, %v824, 0
  %v1011 = vsel %vm925, %v825, 0
  %v1014 = vsel %vm925, %v826, 0
  %v1017 = vsel %vm925, %v827, 0
  %v1020 = vsel %vm925, %v828, 0
  %v1023 = vsel %vm925, %v829, 0
  %v1026 = vsel %vm925, %v830, 0
  %v1029 = vsel %vm925, %v831, 0
  %v1032 = vsel %vm925, %v832, 0
  %v1035 = vsel %vm925, %v833, 0
  %v1038 = vsel %vm925, %v834, 0
  %v1041 = vsel %vm925, %v835, 0
  %v1044 = vsel %vm925, %v836, 0
  %v1047 = vsel %vm925, %v837, 0
  %v1050 = vsel %vm925, %v838, 0
  %v1053 = vsel %vm925, %v839, 0
  %v1056 = vsel %vm925, %v840, 0
  %v1059 = vsel %vm925, %v841, 0
  %v1062 = vsel %vm925, %v842, 0
  %v1065 = vsel %vm925, %v843, 0
  %v1068 = vsel %vm925, %v844, 0
  %v1071 = vsel %vm925, %v845, 0
  %v1074 = vsel %vm925, %v846, 0
  %v1077 = vsel %vm925, %v847, 0
  %v1080 = vsel %vm925, %v848, 0
  %v1083 = vsel %vm925, %v849, 0
  %v1086 = vsel %vm925, %v850, 0
  %v1089 = vsel %vm925, %v851, 0
  %v1092 = vsel %vm925, %v852, 0
  %v1095 = vsel %vm925, %v853, 0
  %v1098 = vsel %vm925, %v854, 0
  %v1101 = vsel %vm925, %v855, 0
  %v1104 = vsel %vm925, %v856, 0
  %v1107 = vsel %vm925, %v857, 0
  %v1110 = vsel %vm925, %v858, 0
  %v1113 = vsel %vm925, %v859, 0
  %v1116 = vsel %vm925, %v860, 0
  %v1119 = vsel %vm925, %v861, 0
  %v1122 = vsel %vm925, %v862, 0
  %v1125 = vsel %vm925, %v863, 0
  %v1128 = vsel %vm925, %v864, 0
  %v1131 = vsel %vm925, %v865, 0
  %v1134 = vsel %vm925, %v866, 0
  %v1137 = vsel %vm925, %v867, 0
  %v1140 = vsel %vm925, %v868, 0
  %v1143 = vsel %vm925, %v869, 0
  %v1146 = vsel %vm925, %v870, 0
  %v1149 = vsel %vm925, %v871, 0
  %v1152 = vsel %vm925, %v872, 0
  %v1155 = vsel %vm925, %v873, 0
  %v1158 = vsel %vm925, %v874, 0
  %v1161 = vsel %vm925, %v875, 0
  %v1164 = vsel %vm925, %v876, 0
  %v1167 = vsel %vm925, %v877, 0
  %v1170 = vsel %vm925, %v878, 0
  %v1173 = vsel %vm925, %v879, 0
  %v1176 = vsel %vm925, %v880, 0
  %v1179 = vsel %vm925, %v881, 0
  %v1182 = vsel %vm925, %v882, 0
  %v1185 = vsel %vm925, %v883, 0
  %v1188 = vsel %vm925, %v884, 0
  %v1191 = vsel %vm925, %v885, 0
  %v1194 = vsel %vm925, %v886, 0
  %v1197 = vsel %vm925, %v887, 0
  %v1200 = vsel %vm925, %v888, 0
  %v1203 = vsel %vm925, %v889, 0
  %v1206 = vsel %vm925, %v890, 0
  %v1209 = vsel %vm925, %v891, 0
  %v1212 = vsel %vm925, %v892, 0
  %v1215 = vsel %vm925, %v893, 0
  %v1218 = vsel %vm925, %v894, 0
  %v1221 = vsel %vm925, %v895, 0
  %v1224 = vsel %vm925, %v896, 0
  %v1227 = vsel %vm925, %v897, 0
  %v1230 = vsel %vm925, %v898, 0
  %v1233 = vsel %vm925, %v899, 0
  %v1236 = vsel %vm925, %v900, 0
  %v1239 = vsel %vm925, %v901, 0
  %v1242 = vsel %vm925, %v902, 0
  %v1245 = vsel %vm925, %v903, 0
  %v1248 = vsel %vm925, %v904, 0
  %v1251 = vsel %vm925, %v905, 0
  %v1254 = vsel %vm925, %v906, 0
  %v1257 = vsel %vm925, %v907, 0
  %v1260 = vsel %vm925, %v908, 0
  %v1263 = vsel %vm925, %v909, 0
  %v1266 = vsel %vm925, %v910, 0
  %v1269 = vsel %vm925, %v911, 0
  %v1272 = vsel %vm925, %v912, 0
  %v1275 = vsel %vm925, %v913, 0
  %v1278 = vsel %vm925, %v914, 0
  %v1281 = vsel %vm925, %v915, 0
  %v1284 = vsel %vm925, %v916, 0
  %v1287 = vsel %vm925, %v917, 0
  %v1290 = vsel %vm925, %v918, 0
  %v1293 = vsel %vm925, %v919, 0
  %v1296 = vsel %vm925, %v920, 0
  %v1299 = vsel %vm925, %v921, 0
  %v1302 = vsel %vm925, %v922, 0
  %v1305 = vsel %vm925, %v923, 0
  %v1308 = vsel %vm925, %v924, 0
  %vm1310 = vcmask 1043456
  %v1312 = vsel %vm1310, %v277, 0
  %1314 = vmatprep.subr.bf16.mxu0 0
  %1315 = vmatpush1.bf16.msra.mxu0 %v1312
  %1316 = vmatprep.subr.bf16.mxu0 0
  %1317 = vmatpush1.bf16.msra.mxu0 0
  %1318 = vmatprep.subr.bf16.mxu0 0
  %1319 = vmatpush1.bf16.msra.mxu0 0
  %1320 = vmatprep.subr.bf16.mxu0 0
  %1321 = vmatpush1.bf16.msra.mxu0 0
  %1322 = vmatprep.subr.bf16.mxu0 0
  %1323 = vmatpush1.bf16.msra.mxu0 0
  %1324 = vmatprep.subr.bf16.mxu0 0
  %1325 = vmatpush1.bf16.msra.mxu0 0
  %1326 = vmatprep.subr.bf16.mxu0 0
  %1327 = vmatpush1.bf16.msra.mxu0 0
  %1328 = vmatprep.subr.bf16.mxu0 0
  %1329 = vmatpush1.bf16.msra.mxu0 0
  %1330 = vmatprep.subr.bf16.mxu0 0
  %1331 = vmatpush1.bf16.msra.mxu0 0
  %1332 = vmatprep.subr.bf16.mxu0 0
  %1333 = vmatpush1.bf16.msra.mxu0 0
  %1334 = vmatprep.subr.bf16.mxu0 0
  %1335 = vmatpush1.bf16.msra.mxu0 0
  %1336 = vmatprep.subr.bf16.mxu0 0
  %1337 = vmatpush1.bf16.msra.mxu0 0
  %1338 = vmatprep.subr.bf16.mxu0 0
  %1339 = vmatpush1.bf16.msra.mxu0 0
  %1340 = vmatprep.subr.bf16.mxu0 0
  %1341 = vmatpush1.bf16.msra.mxu0 0
  %1342 = vmatprep.subr.bf16.mxu0 0
  %1343 = vmatpush1.bf16.msra.mxu0 0
  %1344 = vmatprep.subr.bf16.mxu0 0
  %1345 = vmatpush1.bf16.msra.mxu0 0
  %1346 = vmatprep.mubr.bf16.mxu0 0
  %1347 = vmatmul.mubr.bf16.gmra.mrb[0].mxu0 %v927
  %v1348 = vpop.f32.mrb[0].mxu0
  %v1349 = vadd.f32 %v283, %v1348
  %v1350 = vpop.f32.mrb[0].mxu0
  %v1351 = vpop.f32.mrb[0].mxu0
  %v1352 = vadd.f32 %v283, %v1351
  %v1353 = vpop.f32.mrb[0].mxu0
  %1354 = vmatprep.mubr.bf16.mxu0 0
  %1355 = vmatmul.mubr.bf16.gmra.mrb[0].mxu0 %v930
  %v1356 = vpop.f32.mrb[0].mxu0
  %v1357 = vadd.f32 %v283, %v1356
  %v1358 = vpop.f32.mrb[0].mxu0
  %v1359 = vpop.f32.mrb[0].mxu0
  %v1360 = vadd.f32 %v283, %v1359
  %v1361 = vpop.f32.mrb[0].mxu0
  %1362 = vmatprep.mubr.bf16.mxu0 0
  %1363 = vmatmul.mubr.bf16.gmra.mrb[0].mxu0 %v933
  %v1364 = vpop.f32.mrb[0].mxu0
  %v1365 = vadd.f32 %v283, %v1364
  %v1366 = vpop.f32.mrb[0].mxu0
  %v1367 = vpop.f32.mrb[0].mxu0
  %v1368 = vadd.f32 %v283, %v1367
  %v1369 = vpop.f32.mrb[0].mxu0
  %1370 = vmatprep.mubr.bf16.mxu0 0
  %1371 = vmatmul.mubr.bf16.gmra.mrb[0].mxu0 %v936
  %v1372 = vpop.f32.mrb[0].mxu0
  %v1373 = vadd.f32 %v283, %v1372
  %v1374 = vpop.f32.mrb[0].mxu0
  %v1375 = vpop.f32.mrb[0].mxu0
  %v1376 = vadd.f32 %v283, %v1375
  %v1377 = vpop.f32.mrb[0].mxu0
  %1378 = vmatprep.mubr.bf16.mxu0 0
  %1379 = vmatmul.mubr.bf16.gmra.mrb[0].mxu0 %v939
  %v1380 = vpop.f32.mrb[0].mxu0
  %v1381 = vadd.f32 %v283, %v1380
  %v1382 = vpop.f32.mrb[0].mxu0
  %v1383 = vpop.f32.mrb[0].mxu0
  %v1384 = vadd.f32 %v283, %v1383
  %v1385 = vpop.f32.mrb[0].mxu0
  %1386 = vmatprep.mubr.bf16.mxu0 0
  %1387 = vmatmul.mubr.bf16.gmra.mrb[0].mxu0 %v942
  %v1388 = vpop.f32.mrb[0].mxu0
  %v1389 = vadd.f32 %v283, %v1388
  %v1390 = vpop.f32.mrb[0].mxu0
  %v1391 = vpop.f32.mrb[0].mxu0
  %v1392 = vadd.f32 %v283, %v1391
  %v1393 = vpop.f32.mrb[0].mxu0
  %1394 = vmatprep.mubr.bf16.mxu0 0
  %1395 = vmatmul.mubr.bf16.gmra.mrb[0].mxu0 %v945
  %v1396 = vpop.f32.mrb[0].mxu0
  %v1397 = vadd.f32 %v283, %v1396
  %v1398 = vpop.f32.mrb[0].mxu0
  %v1399 = vpop.f32.mrb[0].mxu0
  %v1400 = vadd.f32 %v283, %v1399
  %v1401 = vpop.f32.mrb[0].mxu0
  %1402 = vmatprep.mubr.bf16.mxu0 0
  %1403 = vmatmul.mubr.bf16.gmra.mrb[0].mxu0 %v948
  %v1404 = vpop.f32.mrb[0].mxu0
  %v1405 = vadd.f32 %v283, %v1404
  %v1406 = vpop.f32.mrb[0].mxu0
  %v1407 = vpop.f32.mrb[0].mxu0
  %v1408 = vadd.f32 %v283, %v1407
  %v1409 = vpop.f32.mrb[0].mxu0
  %1410 = vmatprep.mubr.bf16.mxu0 0
  %1411 = vmatmul.mubr.bf16.gmra.mrb[0].mxu0 %v951
  %v1412 = vpop.f32.mrb[0].mxu0
  %v1413 = vadd.f32 %v283, %v1412
  %v1414 = vpop.f32.mrb[0].mxu0
  %v1415 = vpop.f32.mrb[0].mxu0
  %v1416 = vadd.f32 %v283, %v1415
  %v1417 = vpop.f32.mrb[0].mxu0
  %1418 = vmatprep.mubr.bf16.mxu0 0
  %1419 = vmatmul.mubr.bf16.gmra.mrb[0].mxu0 %v954
  %v1420 = vpop.f32.mrb[0].mxu0
  %v1421 = vadd.f32 %v283, %v1420
  %v1422 = vpop.f32.mrb[0].mxu0
  %v1423 = vpop.f32.mrb[0].mxu0
  %v1424 = vadd.f32 %v283, %v1423
  %v1425 = vpop.f32.mrb[0].mxu0
  %1426 = vmatprep.mubr.bf16.mxu0 0
  %1427 = vmatmul.mubr.bf16.gmra.mrb[0].mxu0 %v957
  %v1428 = vpop.f32.mrb[0].mxu0
  %v1429 = vadd.f32 %v283, %v1428
  %v1430 = vpop.f32.mrb[0].mxu0
  %v1431 = vpop.f32.mrb[0].mxu0
  %v1432 = vadd.f32 %v283, %v1431
  %v1433 = vpop.f32.mrb[0].mxu0
  %1434 = vmatprep.mubr.bf16.mxu0 0
  %1435 = vmatmul.mubr.bf16.gmra.mrb[0].mxu0 %v960
  %v1436 = vpop.f32.mrb[0].mxu0
  %v1437 = vadd.f32 %v283, %v1436
  %v1438 = vpop.f32.mrb[0].mxu0
  %v1439 = vpop.f32.mrb[0].mxu0
  %v1440 = vadd.f32 %v283, %v1439
  %v1441 = vpop.f32.mrb[0].mxu0
  %1442 = vmatprep.mubr.bf16.mxu0 0
  %1443 = vmatmul.mubr.bf16.gmra.mrb[0].mxu0 %v963
  %v1444 = vpop.f32.mrb[0].mxu0
  %v1445 = vadd.f32 %v283, %v1444
  %v1446 = vpop.f32.mrb[0].mxu0
  %v1447 = vpop.f32.mrb[0].mxu0
  %v1448 = vadd.f32 %v283, %v1447
  %v1449 = vpop.f32.mrb[0].mxu0
  %1450 = vmatprep.mubr.bf16.mxu0 0
  %1451 = vmatmul.mubr.bf16.gmra.mrb[0].mxu0 %v966
  %v1452 = vpop.f32.mrb[0].mxu0
  %v1453 = vadd.f32 %v283, %v1452
  %v1454 = vpop.f32.mrb[0].mxu0
  %v1455 = vpop.f32.mrb[0].mxu0
  %v1456 = vadd.f32 %v283, %v1455
  %v1457 = vpop.f32.mrb[0].mxu0
  %1458 = vmatprep.mubr.bf16.mxu0 0
  %1459 = vmatmul.mubr.bf16.gmra.mrb[0].mxu0 %v969
  %v1460 = vpop.f32.mrb[0].mxu0
  %v1461 = vadd.f32 %v283, %v1460
  %v1462 = vpop.f32.mrb[0].mxu0
  %v1463 = vpop.f32.mrb[0].mxu0
  %v1464 = vadd.f32 %v283, %v1463
  %v1465 = vpop.f32.mrb[0].mxu0
  %1466 = vmatprep.mubr.bf16.mxu0 0
  %1467 = vmatmul.mubr.bf16.gmra.mrb[0].mxu0 %v972
  %v1468 = vpop.f32.mrb[0].mxu0
  %v1469 = vadd.f32 %v283, %v1468
  %v1470 = vpop.f32.mrb[0].mxu0
  %v1471 = vpop.f32.mrb[0].mxu0
  %v1472 = vadd.f32 %v283, %v1471
  %v1473 = vpop.f32.mrb[0].mxu0
  %1474 = vmatprep.mubr.bf16.mxu0 0
  %1475 = vmatmul.mubr.bf16.gmra.mrb[0].mxu0 %v975
  %v1476 = vpop.f32.mrb[0].mxu0
  %v1477 = vadd.f32 %v283, %v1476
  %v1478 = vpop.f32.mrb[0].mxu0
  %v1479 = vpop.f32.mrb[0].mxu0
  %v1480 = vadd.f32 %v283, %v1479
  %v1481 = vpop.f32.mrb[0].mxu0
  %1482 = vmatprep.mubr.bf16.mxu0 0
  %1483 = vmatmul.mubr.bf16.gmra.mrb[0].mxu0 %v978
  %v1484 = vpop.f32.mrb[0].mxu0
  %v1485 = vadd.f32 %v283, %v1484
  %v1486 = vpop.f32.mrb[0].mxu0
  %v1487 = vpop.f32.mrb[0].mxu0
  %v1488 = vadd.f32 %v283, %v1487
  %v1489 = vpop.f32.mrb[0].mxu0
  %1490 = vmatprep.mubr.bf16.mxu0 0
  %1491 = vmatmul.mubr.bf16.gmra.mrb[0].mxu0 %v981
  %v1492 = vpop.f32.mrb[0].mxu0
  %v1493 = vadd.f32 %v283, %v1492
  %v1494 = vpop.f32.mrb[0].mxu0
  %v1495 = vpop.f32.mrb[0].mxu0
  %v1496 = vadd.f32 %v283, %v1495
  %v1497 = vpop.f32.mrb[0].mxu0
  %1498 = vmatprep.mubr.bf16.mxu0 0
  %1499 = vmatmul.mubr.bf16.gmra.mrb[0].mxu0 %v984
  %v1500 = vpop.f32.mrb[0].mxu0
  %v1501 = vadd.f32 %v283, %v1500
  %v1502 = vpop.f32.mrb[0].mxu0
  %v1503 = vpop.f32.mrb[0].mxu0
  %v1504 = vadd.f32 %v283, %v1503
  %v1505 = vpop.f32.mrb[0].mxu0
  %1506 = vmatprep.mubr.bf16.mxu0 0
  %1507 = vmatmul.mubr.bf16.gmra.mrb[0].mxu0 %v987
  %v1508 = vpop.f32.mrb[0].mxu0
  %v1509 = vadd.f32 %v283, %v1508
  %v1510 = vpop.f32.mrb[0].mxu0
  %v1511 = vpop.f32.mrb[0].mxu0
  %v1512 = vadd.f32 %v283, %v1511
  %v1513 = vpop.f32.mrb[0].mxu0
  %1514 = vmatprep.mubr.bf16.mxu0 0
  %1515 = vmatmul.mubr.bf16.gmra.mrb[0].mxu0 %v990
  %v1516 = vpop.f32.mrb[0].mxu0
  %v1517 = vadd.f32 %v283, %v1516
  %v1518 = vpop.f32.mrb[0].mxu0
  %v1519 = vpop.f32.mrb[0].mxu0
  %v1520 = vadd.f32 %v283, %v1519
  %v1521 = vpop.f32.mrb[0].mxu0
  %1522 = vmatprep.mubr.bf16.mxu0 0
  %1523 = vmatmul.mubr.bf16.gmra.mrb[0].mxu0 %v993
  %v1524 = vpop.f32.mrb[0].mxu0
  %v1525 = vadd.f32 %v283, %v1524
  %v1526 = vpop.f32.mrb[0].mxu0
  %v1527 = vpop.f32.mrb[0].mxu0
  %v1528 = vadd.f32 %v283, %v1527
  %v1529 = vpop.f32.mrb[0].mxu0
  %1530 = vmatprep.mubr.bf16.mxu0 0
  %1531 = vmatmul.mubr.bf16.gmra.mrb[0].mxu0 %v996
  %v1532 = vpop.f32.mrb[0].mxu0
  %v1533 = vadd.f32 %v283, %v1532
  %v1534 = vpop.f32.mrb[0].mxu0
  %v1535 = vpop.f32.mrb[0].mxu0
  %v1536 = vadd.f32 %v283, %v1535
  %v1537 = vpop.f32.mrb[0].mxu0
  %1538 = vmatprep.mubr.bf16.mxu0 0
  %1539 = vmatmul.mubr.bf16.gmra.mrb[0].mxu0 %v999
  %v1540 = vpop.f32.mrb[0].mxu0
  %v1541 = vadd.f32 %v283, %v1540
  %v1542 = vpop.f32.mrb[0].mxu0
  %v1543 = vpop.f32.mrb[0].mxu0
  %v1544 = vadd.f32 %v283, %v1543
  %v1545 = vpop.f32.mrb[0].mxu0
  %1546 = vmatprep.mubr.bf16.mxu0 0
  %1547 = vmatmul.mubr.bf16.gmra.mrb[0].mxu0 %v1002
  %v1548 = vpop.f32.mrb[0].mxu0
  %v1549 = vadd.f32 %v283, %v1548
  %v1550 = vpop.f32.mrb[0].mxu0
  %v1551 = vpop.f32.mrb[0].mxu0
  %v1552 = vadd.f32 %v283, %v1551
  %v1553 = vpop.f32.mrb[0].mxu0
  %1554 = vmatprep.mubr.bf16.mxu0 0
  %1555 = vmatmul.mubr.bf16.gmra.mrb[0].mxu0 %v1005
  %v1556 = vpop.f32.mrb[0].mxu0
  %v1557 = vadd.f32 %v283, %v1556
  %v1558 = vpop.f32.mrb[0].mxu0
  %v1559 = vpop.f32.mrb[0].mxu0
  %v1560 = vadd.f32 %v283, %v1559
  %v1561 = vpop.f32.mrb[0].mxu0
  %1562 = vmatprep.mubr.bf16.mxu0 0
  %1563 = vmatmul.mubr.bf16.gmra.mrb[0].mxu0 %v1008
  %v1564 = vpop.f32.mrb[0].mxu0
  %v1565 = vadd.f32 %v283, %v1564
  %v1566 = vpop.f32.mrb[0].mxu0
  %v1567 = vpop.f32.mrb[0].mxu0
  %v1568 = vadd.f32 %v283, %v1567
  %v1569 = vpop.f32.mrb[0].mxu0
  %1570 = vmatprep.mubr.bf16.mxu0 0
  %1571 = vmatmul.mubr.bf16.gmra.mrb[0].mxu0 %v1011
  %v1572 = vpop.f32.mrb[0].mxu0
  %v1573 = vadd.f32 %v283, %v1572
  %v1574 = vpop.f32.mrb[0].mxu0
  %v1575 = vpop.f32.mrb[0].mxu0
  %v1576 = vadd.f32 %v283, %v1575
  %v1577 = vpop.f32.mrb[0].mxu0
  %1578 = vmatprep.mubr.bf16.mxu0 0
  %1579 = vmatmul.mubr.bf16.gmra.mrb[0].mxu0 %v1014
  %v1580 = vpop.f32.mrb[0].mxu0
  %v1581 = vadd.f32 %v283, %v1580
  %v1582 = vpop.f32.mrb[0].mxu0
  %v1583 = vpop.f32.mrb[0].mxu0
  %v1584 = vadd.f32 %v283, %v1583
  %v1585 = vpop.f32.mrb[0].mxu0
  %1586 = vmatprep.mubr.bf16.mxu0 0
  %1587 = vmatmul.mubr.bf16.gmra.mrb[0].mxu0 %v1017
  %v1588 = vpop.f32.mrb[0].mxu0
  %v1589 = vadd.f32 %v283, %v1588
  %v1590 = vpop.f32.mrb[0].mxu0
  %v1591 = vpop.f32.mrb[0].mxu0
  %v1592 = vadd.f32 %v283, %v1591
  %v1593 = vpop.f32.mrb[0].mxu0
  %1594 = vmatprep.mubr.bf16.mxu0 0
  %1595 = vmatmul.mubr.bf16.gmra.mrb[0].mxu0 %v1020
  %v1596 = vpop.f32.mrb[0].mxu0
  %v1597 = vadd.f32 %v283, %v1596
  %v1598 = vpop.f32.mrb[0].mxu0
  %v1599 = vpop.f32.mrb[0].mxu0
  %v1600 = vadd.f32 %v283, %v1599
  %v1601 = vpop.f32.mrb[0].mxu0
  %1602 = vmatprep.mubr.bf16.mxu0 0
  %1603 = vmatmul.mubr.bf16.gmra.mrb[0].mxu0 %v1023
  %v1604 = vpop.f32.mrb[0].mxu0
  %v1605 = vadd.f32 %v283, %v1604
  %v1606 = vpop.f32.mrb[0].mxu0
  %v1607 = vpop.f32.mrb[0].mxu0
  %v1608 = vadd.f32 %v283, %v1607
  %v1609 = vpop.f32.mrb[0].mxu0
  %1610 = vmatprep.mubr.bf16.mxu0 0
  %1611 = vmatmul.mubr.bf16.gmra.mrb[0].mxu0 %v1026
  %v1612 = vpop.f32.mrb[0].mxu0
  %v1613 = vadd.f32 %v283, %v1612
  %v1614 = vpop.f32.mrb[0].mxu0
  %v1615 = vpop.f32.mrb[0].mxu0
  %v1616 = vadd.f32 %v283, %v1615
  %v1617 = vpop.f32.mrb[0].mxu0
  %1618 = vmatprep.mubr.bf16.mxu0 0
  %1619 = vmatmul.mubr.bf16.gmra.mrb[0].mxu0 %v1029
  %v1620 = vpop.f32.mrb[0].mxu0
  %v1621 = vadd.f32 %v283, %v1620
  %v1622 = vpop.f32.mrb[0].mxu0
  %v1623 = vpop.f32.mrb[0].mxu0
  %v1624 = vadd.f32 %v283, %v1623
  %v1625 = vpop.f32.mrb[0].mxu0
  %1626 = vmatprep.mubr.bf16.mxu0 0
  %1627 = vmatmul.mubr.bf16.gmra.mrb[0].mxu0 %v1032
  %v1628 = vpop.f32.mrb[0].mxu0
  %v1629 = vadd.f32 %v283, %v1628
  %v1630 = vpop.f32.mrb[0].mxu0
  %v1631 = vpop.f32.mrb[0].mxu0
  %v1632 = vadd.f32 %v283, %v1631
  %v1633 = vpop.f32.mrb[0].mxu0
  %1634 = vmatprep.mubr.bf16.mxu0 0
  %1635 = vmatmul.mubr.bf16.gmra.mrb[0].mxu0 %v1035
  %v1636 = vpop.f32.mrb[0].mxu0
  %v1637 = vadd.f32 %v283, %v1636
  %v1638 = vpop.f32.mrb[0].mxu0
  %v1639 = vpop.f32.mrb[0].mxu0
  %v1640 = vadd.f32 %v283, %v1639
  %v1641 = vpop.f32.mrb[0].mxu0
  %1642 = vmatprep.mubr.bf16.mxu0 0
  %1643 = vmatmul.mubr.bf16.gmra.mrb[0].mxu0 %v1038
  %v1644 = vpop.f32.mrb[0].mxu0
  %v1645 = vadd.f32 %v283, %v1644
  %v1646 = vpop.f32.mrb[0].mxu0
  %v1647 = vpop.f32.mrb[0].mxu0
  %v1648 = vadd.f32 %v283, %v1647
  %v1649 = vpop.f32.mrb[0].mxu0
  %1650 = vmatprep.mubr.bf16.mxu0 0
  %1651 = vmatmul.mubr.bf16.gmra.mrb[0].mxu0 %v1041
  %v1652 = vpop.f32.mrb[0].mxu0
  %v1653 = vadd.f32 %v283, %v1652
  %v1654 = vpop.f32.mrb[0].mxu0
  %v1655 = vpop.f32.mrb[0].mxu0
  %v1656 = vadd.f32 %v283, %v1655
  %v1657 = vpop.f32.mrb[0].mxu0
  %1658 = vmatprep.mubr.bf16.mxu0 0
  %1659 = vmatmul.mubr.bf16.gmra.mrb[0].mxu0 %v1044
  %v1660 = vpop.f32.mrb[0].mxu0
  %v1661 = vadd.f32 %v283, %v1660
  %v1662 = vpop.f32.mrb[0].mxu0
  %v1663 = vpop.f32.mrb[0].mxu0
  %v1664 = vadd.f32 %v283, %v1663
  %v1665 = vpop.f32.mrb[0].mxu0
  %1666 = vmatprep.mubr.bf16.mxu0 0
  %1667 = vmatmul.mubr.bf16.gmra.mrb[0].mxu0 %v1047
  %v1668 = vpop.f32.mrb[0].mxu0
  %v1669 = vadd.f32 %v283, %v1668
  %v1670 = vpop.f32.mrb[0].mxu0
  %v1671 = vpop.f32.mrb[0].mxu0
  %v1672 = vadd.f32 %v283, %v1671
  %v1673 = vpop.f32.mrb[0].mxu0
  %1674 = vmatprep.mubr.bf16.mxu0 0
  %1675 = vmatmul.mubr.bf16.gmra.mrb[0].mxu0 %v1050
  %v1676 = vpop.f32.mrb[0].mxu0
  %v1677 = vadd.f32 %v283, %v1676
  %v1678 = vpop.f32.mrb[0].mxu0
  %v1679 = vpop.f32.mrb[0].mxu0
  %v1680 = vadd.f32 %v283, %v1679
  %v1681 = vpop.f32.mrb[0].mxu0
  %1682 = vmatprep.mubr.bf16.mxu0 0
  %1683 = vmatmul.mubr.bf16.gmra.mrb[0].mxu0 %v1053
  %v1684 = vpop.f32.mrb[0].mxu0
  %v1685 = vadd.f32 %v283, %v1684
  %v1686 = vpop.f32.mrb[0].mxu0
  %v1687 = vpop.f32.mrb[0].mxu0
  %v1688 = vadd.f32 %v283, %v1687
  %v1689 = vpop.f32.mrb[0].mxu0
  %1690 = vmatprep.mubr.bf16.mxu0 0
  %1691 = vmatmul.mubr.bf16.gmra.mrb[0].mxu0 %v1056
  %v1692 = vpop.f32.mrb[0].mxu0
  %v1693 = vadd.f32 %v283, %v1692
  %v1694 = vpop.f32.mrb[0].mxu0
  %v1695 = vpop.f32.mrb[0].mxu0
  %v1696 = vadd.f32 %v283, %v1695
  %v1697 = vpop.f32.mrb[0].mxu0
  %1698 = vmatprep.mubr.bf16.mxu0 0
  %1699 = vmatmul.mubr.bf16.gmra.mrb[0].mxu0 %v1059
  %v1700 = vpop.f32.mrb[0].mxu0
  %v1701 = vadd.f32 %v283, %v1700
  %v1702 = vpop.f32.mrb[0].mxu0
  %v1703 = vpop.f32.mrb[0].mxu0
  %v1704 = vadd.f32 %v283, %v1703
  %v1705 = vpop.f32.mrb[0].mxu0
  %1706 = vmatprep.mubr.bf16.mxu0 0
  %1707 = vmatmul.mubr.bf16.gmra.mrb[0].mxu0 %v1062
  %v1708 = vpop.f32.mrb[0].mxu0
  %v1709 = vadd.f32 %v283, %v1708
  %v1710 = vpop.f32.mrb[0].mxu0
  %v1711 = vpop.f32.mrb[0].mxu0
  %v1712 = vadd.f32 %v283, %v1711
  %v1713 = vpop.f32.mrb[0].mxu0
  %1714 = vmatprep.mubr.bf16.mxu0 0
  %1715 = vmatmul.mubr.bf16.gmra.mrb[0].mxu0 %v1065
  %v1716 = vpop.f32.mrb[0].mxu0
  %v1717 = vadd.f32 %v283, %v1716
  %v1718 = vpop.f32.mrb[0].mxu0
  %v1719 = vpop.f32.mrb[0].mxu0
  %v1720 = vadd.f32 %v283, %v1719
  %v1721 = vpop.f32.mrb[0].mxu0
  %1722 = vmatprep.mubr.bf16.mxu0 0
  %1723 = vmatmul.mubr.bf16.gmra.mrb[0].mxu0 %v1068
  %v1724 = vpop.f32.mrb[0].mxu0
  %v1725 = vadd.f32 %v283, %v1724
  %v1726 = vpop.f32.mrb[0].mxu0
  %v1727 = vpop.f32.mrb[0].mxu0
  %v1728 = vadd.f32 %v283, %v1727
  %v1729 = vpop.f32.mrb[0].mxu0
  %1730 = vmatprep.mubr.bf16.mxu0 0
  %1731 = vmatmul.mubr.bf16.gmra.mrb[0].mxu0 %v1071
  %v1732 = vpop.f32.mrb[0].mxu0
  %v1733 = vadd.f32 %v283, %v1732
  %v1734 = vpop.f32.mrb[0].mxu0
  %v1735 = vpop.f32.mrb[0].mxu0
  %v1736 = vadd.f32 %v283, %v1735
  %v1737 = vpop.f32.mrb[0].mxu0
  %1738 = vmatprep.mubr.bf16.mxu0 0
  %1739 = vmatmul.mubr.bf16.gmra.mrb[0].mxu0 %v1074
  %v1740 = vpop.f32.mrb[0].mxu0
  %v1741 = vadd.f32 %v283, %v1740
  %v1742 = vpop.f32.mrb[0].mxu0
  %v1743 = vpop.f32.mrb[0].mxu0
  %v1744 = vadd.f32 %v283, %v1743
  %v1745 = vpop.f32.mrb[0].mxu0
  %1746 = vmatprep.mubr.bf16.mxu0 0
  %1747 = vmatmul.mubr.bf16.gmra.mrb[0].mxu0 %v1077
  %v1748 = vpop.f32.mrb[0].mxu0
  %v1749 = vadd.f32 %v283, %v1748
  %v1750 = vpop.f32.mrb[0].mxu0
  %v1751 = vpop.f32.mrb[0].mxu0
  %v1752 = vadd.f32 %v283, %v1751
  %v1753 = vpop.f32.mrb[0].mxu0
  %1754 = vmatprep.mubr.bf16.mxu0 0
  %1755 = vmatmul.mubr.bf16.gmra.mrb[0].mxu0 %v1080
  %v1756 = vpop.f32.mrb[0].mxu0
  %v1757 = vadd.f32 %v283, %v1756
  %v1758 = vpop.f32.mrb[0].mxu0
  %v1759 = vpop.f32.mrb[0].mxu0
  %v1760 = vadd.f32 %v283, %v1759
  %v1761 = vpop.f32.mrb[0].mxu0
  %1762 = vmatprep.mubr.bf16.mxu0 0
  %1763 = vmatmul.mubr.bf16.gmra.mrb[0].mxu0 %v1083
  %v1764 = vpop.f32.mrb[0].mxu0
  %v1765 = vadd.f32 %v283, %v1764
  %v1766 = vpop.f32.mrb[0].mxu0
  %v1767 = vpop.f32.mrb[0].mxu0
  %v1768 = vadd.f32 %v283, %v1767
  %v1769 = vpop.f32.mrb[0].mxu0
  %1770 = vmatprep.mubr.bf16.mxu0 0
  %1771 = vmatmul.mubr.bf16.gmra.mrb[0].mxu0 %v1086
  %v1772 = vpop.f32.mrb[0].mxu0
  %v1773 = vadd.f32 %v283, %v1772
  %v1774 = vpop.f32.mrb[0].mxu0
  %v1775 = vpop.f32.mrb[0].mxu0
  %v1776 = vadd.f32 %v283, %v1775
  %v1777 = vpop.f32.mrb[0].mxu0
  %1778 = vmatprep.mubr.bf16.mxu0 0
  %1779 = vmatmul.mubr.bf16.gmra.mrb[0].mxu0 %v1089
  %v1780 = vpop.f32.mrb[0].mxu0
  %v1781 = vadd.f32 %v283, %v1780
  %v1782 = vpop.f32.mrb[0].mxu0
  %v1783 = vpop.f32.mrb[0].mxu0
  %v1784 = vadd.f32 %v283, %v1783
  %v1785 = vpop.f32.mrb[0].mxu0
  %1786 = vmatprep.mubr.bf16.mxu0 0
  %1787 = vmatmul.mubr.bf16.gmra.mrb[0].mxu0 %v1092
  %v1788 = vpop.f32.mrb[0].mxu0
  %v1789 = vadd.f32 %v283, %v1788
  %v1790 = vpop.f32.mrb[0].mxu0
  %v1791 = vpop.f32.mrb[0].mxu0
  %v1792 = vadd.f32 %v283, %v1791
  %v1793 = vpop.f32.mrb[0].mxu0
  %1794 = vmatprep.mubr.bf16.mxu0 0
  %1795 = vmatmul.mubr.bf16.gmra.mrb[0].mxu0 %v1095
  %v1796 = vpop.f32.mrb[0].mxu0
  %v1797 = vadd.f32 %v283, %v1796
  %v1798 = vpop.f32.mrb[0].mxu0
  %v1799 = vpop.f32.mrb[0].mxu0
  %v1800 = vadd.f32 %v283, %v1799
  %v1801 = vpop.f32.mrb[0].mxu0
  %1802 = vmatprep.mubr.bf16.mxu0 0
  %1803 = vmatmul.mubr.bf16.gmra.mrb[0].mxu0 %v1098
  %v1804 = vpop.f32.mrb[0].mxu0
  %v1805 = vadd.f32 %v283, %v1804
  %v1806 = vpop.f32.mrb[0].mxu0
  %v1807 = vpop.f32.mrb[0].mxu0
  %v1808 = vadd.f32 %v283, %v1807
  %v1809 = vpop.f32.mrb[0].mxu0
  %1810 = vmatprep.mubr.bf16.mxu0 0
  %1811 = vmatmul.mubr.bf16.gmra.mrb[0].mxu0 %v1101
  %v1812 = vpop.f32.mrb[0].mxu0
  %v1813 = vadd.f32 %v283, %v1812
  %v1814 = vpop.f32.mrb[0].mxu0
  %v1815 = vpop.f32.mrb[0].mxu0
  %v1816 = vadd.f32 %v283, %v1815
  %v1817 = vpop.f32.mrb[0].mxu0
  %1818 = vmatprep.mubr.bf16.mxu0 0
  %1819 = vmatmul.mubr.bf16.gmra.mrb[0].mxu0 %v1104
  %v1820 = vpop.f32.mrb[0].mxu0
  %v1821 = vadd.f32 %v283, %v1820
  %v1822 = vpop.f32.mrb[0].mxu0
  %v1823 = vpop.f32.mrb[0].mxu0
  %v1824 = vadd.f32 %v283, %v1823
  %v1825 = vpop.f32.mrb[0].mxu0
  %1826 = vmatprep.mubr.bf16.mxu0 0
  %1827 = vmatmul.mubr.bf16.gmra.mrb[0].mxu0 %v1107
  %v1828 = vpop.f32.mrb[0].mxu0
  %v1829 = vadd.f32 %v283, %v1828
  %v1830 = vpop.f32.mrb[0].mxu0
  %v1831 = vpop.f32.mrb[0].mxu0
  %v1832 = vadd.f32 %v283, %v1831
  %v1833 = vpop.f32.mrb[0].mxu0
  %1834 = vmatprep.mubr.bf16.mxu0 0
  %1835 = vmatmul.mubr.bf16.gmra.mrb[0].mxu0 %v1110
  %v1836 = vpop.f32.mrb[0].mxu0
  %v1837 = vadd.f32 %v283, %v1836
  %v1838 = vpop.f32.mrb[0].mxu0
  %v1839 = vpop.f32.mrb[0].mxu0
  %v1840 = vadd.f32 %v283, %v1839
  %v1841 = vpop.f32.mrb[0].mxu0
  %1842 = vmatprep.mubr.bf16.mxu0 0
  %1843 = vmatmul.mubr.bf16.gmra.mrb[0].mxu0 %v1113
  %v1844 = vpop.f32.mrb[0].mxu0
  %v1845 = vadd.f32 %v283, %v1844
  %v1846 = vpop.f32.mrb[0].mxu0
  %v1847 = vpop.f32.mrb[0].mxu0
  %v1848 = vadd.f32 %v283, %v1847
  %v1849 = vpop.f32.mrb[0].mxu0
  %1850 = vmatprep.mubr.bf16.mxu0 0
  %1851 = vmatmul.mubr.bf16.gmra.mrb[0].mxu0 %v1116
  %v1852 = vpop.f32.mrb[0].mxu0
  %v1853 = vadd.f32 %v283, %v1852
  %v1854 = vpop.f32.mrb[0].mxu0
  %v1855 = vpop.f32.mrb[0].mxu0
  %v1856 = vadd.f32 %v283, %v1855
  %v1857 = vpop.f32.mrb[0].mxu0
  %1858 = vmatprep.mubr.bf16.mxu0 0
  %1859 = vmatmul.mubr.bf16.gmra.mrb[0].mxu0 %v1119
  %v1860 = vpop.f32.mrb[0].mxu0
  %v1861 = vadd.f32 %v283, %v1860
  %v1862 = vpop.f32.mrb[0].mxu0
  %v1863 = vpop.f32.mrb[0].mxu0
  %v1864 = vadd.f32 %v283, %v1863
  %v1865 = vpop.f32.mrb[0].mxu0
  %1866 = vmatprep.mubr.bf16.mxu0 0
  %1867 = vmatmul.mubr.bf16.gmra.mrb[0].mxu0 %v1122
  %v1868 = vpop.f32.mrb[0].mxu0
  %v1869 = vadd.f32 %v283, %v1868
  %v1870 = vpop.f32.mrb[0].mxu0
  %v1871 = vpop.f32.mrb[0].mxu0
  %v1872 = vadd.f32 %v283, %v1871
  %v1873 = vpop.f32.mrb[0].mxu0
  %1874 = vmatprep.mubr.bf16.mxu0 0
  %1875 = vmatmul.mubr.bf16.gmra.mrb[0].mxu0 %v1125
  %v1876 = vpop.f32.mrb[0].mxu0
  %v1877 = vadd.f32 %v283, %v1876
  %v1878 = vpop.f32.mrb[0].mxu0
  %v1879 = vpop.f32.mrb[0].mxu0
  %v1880 = vadd.f32 %v283, %v1879
  %v1881 = vpop.f32.mrb[0].mxu0
  %1882 = vmatprep.mubr.bf16.mxu0 0
  %1883 = vmatmul.mubr.bf16.gmra.mrb[0].mxu0 %v1128
  %v1884 = vpop.f32.mrb[0].mxu0
  %v1885 = vadd.f32 %v283, %v1884
  %v1886 = vpop.f32.mrb[0].mxu0
  %v1887 = vpop.f32.mrb[0].mxu0
  %v1888 = vadd.f32 %v283, %v1887
  %v1889 = vpop.f32.mrb[0].mxu0
  %1890 = vmatprep.mubr.bf16.mxu0 0
  %1891 = vmatmul.mubr.bf16.gmra.mrb[0].mxu0 %v1131
  %v1892 = vpop.f32.mrb[0].mxu0
  %v1893 = vadd.f32 %v283, %v1892
  %v1894 = vpop.f32.mrb[0].mxu0
  %v1895 = vpop.f32.mrb[0].mxu0
  %v1896 = vadd.f32 %v283, %v1895
  %v1897 = vpop.f32.mrb[0].mxu0
  %1898 = vmatprep.mubr.bf16.mxu0 0
  %1899 = vmatmul.mubr.bf16.gmra.mrb[0].mxu0 %v1134
  %v1900 = vpop.f32.mrb[0].mxu0
  %v1901 = vadd.f32 %v283, %v1900
  %v1902 = vpop.f32.mrb[0].mxu0
  %v1903 = vpop.f32.mrb[0].mxu0
  %v1904 = vadd.f32 %v283, %v1903
  %v1905 = vpop.f32.mrb[0].mxu0
  %1906 = vmatprep.mubr.bf16.mxu0 0
  %1907 = vmatmul.mubr.bf16.gmra.mrb[0].mxu0 %v1137
  %v1908 = vpop.f32.mrb[0].mxu0
  %v1909 = vadd.f32 %v283, %v1908
  %v1910 = vpop.f32.mrb[0].mxu0
  %v1911 = vpop.f32.mrb[0].mxu0
  %v1912 = vadd.f32 %v283, %v1911
  %v1913 = vpop.f32.mrb[0].mxu0
  %1914 = vmatprep.mubr.bf16.mxu0 0
  %1915 = vmatmul.mubr.bf16.gmra.mrb[0].mxu0 %v1140
  %v1916 = vpop.f32.mrb[0].mxu0
  %v1917 = vadd.f32 %v283, %v1916
  %v1918 = vpop.f32.mrb[0].mxu0
  %v1919 = vpop.f32.mrb[0].mxu0
  %v1920 = vadd.f32 %v283, %v1919
  %v1921 = vpop.f32.mrb[0].mxu0
  %1922 = vmatprep.mubr.bf16.mxu0 0
  %1923 = vmatmul.mubr.bf16.gmra.mrb[0].mxu0 %v1143
  %v1924 = vpop.f32.mrb[0].mxu0
  %v1925 = vadd.f32 %v283, %v1924
  %v1926 = vpop.f32.mrb[0].mxu0
  %v1927 = vpop.f32.mrb[0].mxu0
  %v1928 = vadd.f32 %v283, %v1927
  %v1929 = vpop.f32.mrb[0].mxu0
  %1930 = vmatprep.mubr.bf16.mxu0 0
  %1931 = vmatmul.mubr.bf16.gmra.mrb[0].mxu0 %v1146
  %v1932 = vpop.f32.mrb[0].mxu0
  %v1933 = vadd.f32 %v283, %v1932
  %v1934 = vpop.f32.mrb[0].mxu0
  %v1935 = vpop.f32.mrb[0].mxu0
  %v1936 = vadd.f32 %v283, %v1935
  %v1937 = vpop.f32.mrb[0].mxu0
  %1938 = vmatprep.mubr.bf16.mxu0 0
  %1939 = vmatmul.mubr.bf16.gmra.mrb[0].mxu0 %v1149
  %v1940 = vpop.f32.mrb[0].mxu0
  %v1941 = vadd.f32 %v283, %v1940
  %v1942 = vpop.f32.mrb[0].mxu0
  %v1943 = vpop.f32.mrb[0].mxu0
  %v1944 = vadd.f32 %v283, %v1943
  %v1945 = vpop.f32.mrb[0].mxu0
  %1946 = vmatprep.mubr.bf16.mxu0 0
  %1947 = vmatmul.mubr.bf16.gmra.mrb[0].mxu0 %v1152
  %v1948 = vpop.f32.mrb[0].mxu0
  %v1949 = vadd.f32 %v283, %v1948
  %v1950 = vpop.f32.mrb[0].mxu0
  %v1951 = vpop.f32.mrb[0].mxu0
  %v1952 = vadd.f32 %v283, %v1951
  %v1953 = vpop.f32.mrb[0].mxu0
  %1954 = vmatprep.mubr.bf16.mxu0 0
  %1955 = vmatmul.mubr.bf16.gmra.mrb[0].mxu0 %v1155
  %v1956 = vpop.f32.mrb[0].mxu0
  %v1957 = vadd.f32 %v283, %v1956
  %v1958 = vpop.f32.mrb[0].mxu0
  %v1959 = vpop.f32.mrb[0].mxu0
  %v1960 = vadd.f32 %v283, %v1959
  %v1961 = vpop.f32.mrb[0].mxu0
  %1962 = vmatprep.mubr.bf16.mxu0 0
  %1963 = vmatmul.mubr.bf16.gmra.mrb[0].mxu0 %v1158
  %v1964 = vpop.f32.mrb[0].mxu0
  %v1965 = vadd.f32 %v283, %v1964
  %v1966 = vpop.f32.mrb[0].mxu0
  %v1967 = vpop.f32.mrb[0].mxu0
  %v1968 = vadd.f32 %v283, %v1967
  %v1969 = vpop.f32.mrb[0].mxu0
  %1970 = vmatprep.mubr.bf16.mxu0 0
  %1971 = vmatmul.mubr.bf16.gmra.mrb[0].mxu0 %v1161
  %v1972 = vpop.f32.mrb[0].mxu0
  %v1973 = vadd.f32 %v283, %v1972
  %v1974 = vpop.f32.mrb[0].mxu0
  %v1975 = vpop.f32.mrb[0].mxu0
  %v1976 = vadd.f32 %v283, %v1975
  %v1977 = vpop.f32.mrb[0].mxu0
  %1978 = vmatprep.mubr.bf16.mxu0 0
  %1979 = vmatmul.mubr.bf16.gmra.mrb[0].mxu0 %v1164
  %v1980 = vpop.f32.mrb[0].mxu0
  %v1981 = vadd.f32 %v283, %v1980
  %v1982 = vpop.f32.mrb[0].mxu0
  %v1983 = vpop.f32.mrb[0].mxu0
  %v1984 = vadd.f32 %v283, %v1983
  %v1985 = vpop.f32.mrb[0].mxu0
  %1986 = vmatprep.mubr.bf16.mxu0 0
  %1987 = vmatmul.mubr.bf16.gmra.mrb[0].mxu0 %v1167
  %v1988 = vpop.f32.mrb[0].mxu0
  %v1989 = vadd.f32 %v283, %v1988
  %v1990 = vpop.f32.mrb[0].mxu0
  %v1991 = vpop.f32.mrb[0].mxu0
  %v1992 = vadd.f32 %v283, %v1991
  %v1993 = vpop.f32.mrb[0].mxu0
  %1994 = vmatprep.mubr.bf16.mxu0 0
  %1995 = vmatmul.mubr.bf16.gmra.mrb[0].mxu0 %v1170
  %v1996 = vpop.f32.mrb[0].mxu0
  %v1997 = vadd.f32 %v283, %v1996
  %v1998 = vpop.f32.mrb[0].mxu0
  %v1999 = vpop.f32.mrb[0].mxu0
  %v2000 = vadd.f32 %v283, %v1999
  %v2001 = vpop.f32.mrb[0].mxu0
  %2002 = vmatprep.mubr.bf16.mxu0 0
  %2003 = vmatmul.mubr.bf16.gmra.mrb[0].mxu0 %v1173
  %v2004 = vpop.f32.mrb[0].mxu0
  %v2005 = vadd.f32 %v283, %v2004
  %v2006 = vpop.f32.mrb[0].mxu0
  %v2007 = vpop.f32.mrb[0].mxu0
  %v2008 = vadd.f32 %v283, %v2007
  %v2009 = vpop.f32.mrb[0].mxu0
  %2010 = vmatprep.mubr.bf16.mxu0 0
  %2011 = vmatmul.mubr.bf16.gmra.mrb[0].mxu0 %v1176
  %v2012 = vpop.f32.mrb[0].mxu0
  %v2013 = vadd.f32 %v283, %v2012
  %v2014 = vpop.f32.mrb[0].mxu0
  %v2015 = vpop.f32.mrb[0].mxu0
  %v2016 = vadd.f32 %v283, %v2015
  %v2017 = vpop.f32.mrb[0].mxu0
  %2018 = vmatprep.mubr.bf16.mxu0 0
  %2019 = vmatmul.mubr.bf16.gmra.mrb[0].mxu0 %v1179
  %v2020 = vpop.f32.mrb[0].mxu0
  %v2021 = vadd.f32 %v283, %v2020
  %v2022 = vpop.f32.mrb[0].mxu0
  %v2023 = vpop.f32.mrb[0].mxu0
  %v2024 = vadd.f32 %v283, %v2023
  %v2025 = vpop.f32.mrb[0].mxu0
  %2026 = vmatprep.mubr.bf16.mxu0 0
  %2027 = vmatmul.mubr.bf16.gmra.mrb[0].mxu0 %v1182
  %v2028 = vpop.f32.mrb[0].mxu0
  %v2029 = vadd.f32 %v283, %v2028
  %v2030 = vpop.f32.mrb[0].mxu0
  %v2031 = vpop.f32.mrb[0].mxu0
  %v2032 = vadd.f32 %v283, %v2031
  %v2033 = vpop.f32.mrb[0].mxu0
  %2034 = vmatprep.mubr.bf16.mxu0 0
  %2035 = vmatmul.mubr.bf16.gmra.mrb[0].mxu0 %v1185
  %v2036 = vpop.f32.mrb[0].mxu0
  %v2037 = vadd.f32 %v283, %v2036
  %v2038 = vpop.f32.mrb[0].mxu0
  %v2039 = vpop.f32.mrb[0].mxu0
  %v2040 = vadd.f32 %v283, %v2039
  %v2041 = vpop.f32.mrb[0].mxu0
  %2042 = vmatprep.mubr.bf16.mxu0 0
  %2043 = vmatmul.mubr.bf16.gmra.mrb[0].mxu0 %v1188
  %v2044 = vpop.f32.mrb[0].mxu0
  %v2045 = vadd.f32 %v283, %v2044
  %v2046 = vpop.f32.mrb[0].mxu0
  %v2047 = vpop.f32.mrb[0].mxu0
  %v2048 = vadd.f32 %v283, %v2047
  %v2049 = vpop.f32.mrb[0].mxu0
  %2050 = vmatprep.mubr.bf16.mxu0 0
  %2051 = vmatmul.mubr.bf16.gmra.mrb[0].mxu0 %v1191
  %v2052 = vpop.f32.mrb[0].mxu0
  %v2053 = vadd.f32 %v283, %v2052
  %v2054 = vpop.f32.mrb[0].mxu0
  %v2055 = vpop.f32.mrb[0].mxu0
  %v2056 = vadd.f32 %v283, %v2055
  %v2057 = vpop.f32.mrb[0].mxu0
  %2058 = vmatprep.mubr.bf16.mxu0 0
  %2059 = vmatmul.mubr.bf16.gmra.mrb[0].mxu0 %v1194
  %v2060 = vpop.f32.mrb[0].mxu0
  %v2061 = vadd.f32 %v283, %v2060
  %v2062 = vpop.f32.mrb[0].mxu0
  %v2063 = vpop.f32.mrb[0].mxu0
  %v2064 = vadd.f32 %v283, %v2063
  %v2065 = vpop.f32.mrb[0].mxu0
  %2066 = vmatprep.mubr.bf16.mxu0 0
  %2067 = vmatmul.mubr.bf16.gmra.mrb[0].mxu0 %v1197
  %v2068 = vpop.f32.mrb[0].mxu0
  %v2069 = vadd.f32 %v283, %v2068
  %v2070 = vpop.f32.mrb[0].mxu0
  %v2071 = vpop.f32.mrb[0].mxu0
  %v2072 = vadd.f32 %v283, %v2071
  %v2073 = vpop.f32.mrb[0].mxu0
  %2074 = vmatprep.mubr.bf16.mxu0 0
  %2075 = vmatmul.mubr.bf16.gmra.mrb[0].mxu0 %v1200
  %v2076 = vpop.f32.mrb[0].mxu0
  %v2077 = vadd.f32 %v283, %v2076
  %v2078 = vpop.f32.mrb[0].mxu0
  %v2079 = vpop.f32.mrb[0].mxu0
  %v2080 = vadd.f32 %v283, %v2079
  %v2081 = vpop.f32.mrb[0].mxu0
  %2082 = vmatprep.mubr.bf16.mxu0 0
  %2083 = vmatmul.mubr.bf16.gmra.mrb[0].mxu0 %v1203
  %v2084 = vpop.f32.mrb[0].mxu0
  %v2085 = vadd.f32 %v283, %v2084
  %v2086 = vpop.f32.mrb[0].mxu0
  %v2087 = vpop.f32.mrb[0].mxu0
  %v2088 = vadd.f32 %v283, %v2087
  %v2089 = vpop.f32.mrb[0].mxu0
  %2090 = vmatprep.mubr.bf16.mxu0 0
  %2091 = vmatmul.mubr.bf16.gmra.mrb[0].mxu0 %v1206
  %v2092 = vpop.f32.mrb[0].mxu0
  %v2093 = vadd.f32 %v283, %v2092
  %v2094 = vpop.f32.mrb[0].mxu0
  %v2095 = vpop.f32.mrb[0].mxu0
  %v2096 = vadd.f32 %v283, %v2095
  %v2097 = vpop.f32.mrb[0].mxu0
  %2098 = vmatprep.mubr.bf16.mxu0 0
  %2099 = vmatmul.mubr.bf16.gmra.mrb[0].mxu0 %v1209
  %v2100 = vpop.f32.mrb[0].mxu0
  %v2101 = vadd.f32 %v283, %v2100
  %v2102 = vpop.f32.mrb[0].mxu0
  %v2103 = vpop.f32.mrb[0].mxu0
  %v2104 = vadd.f32 %v283, %v2103
  %v2105 = vpop.f32.mrb[0].mxu0
  %2106 = vmatprep.mubr.bf16.mxu0 0
  %2107 = vmatmul.mubr.bf16.gmra.mrb[0].mxu0 %v1212
  %v2108 = vpop.f32.mrb[0].mxu0
  %v2109 = vadd.f32 %v283, %v2108
  %v2110 = vpop.f32.mrb[0].mxu0
  %v2111 = vpop.f32.mrb[0].mxu0
  %v2112 = vadd.f32 %v283, %v2111
  %v2113 = vpop.f32.mrb[0].mxu0
  %2114 = vmatprep.mubr.bf16.mxu0 0
  %2115 = vmatmul.mubr.bf16.gmra.mrb[0].mxu0 %v1215
  %v2116 = vpop.f32.mrb[0].mxu0
  %v2117 = vadd.f32 %v283, %v2116
  %v2118 = vpop.f32.mrb[0].mxu0
  %v2119 = vpop.f32.mrb[0].mxu0
  %v2120 = vadd.f32 %v283, %v2119
  %v2121 = vpop.f32.mrb[0].mxu0
  %2122 = vmatprep.mubr.bf16.mxu0 0
  %2123 = vmatmul.mubr.bf16.gmra.mrb[0].mxu0 %v1218
  %v2124 = vpop.f32.mrb[0].mxu0
  %v2125 = vadd.f32 %v283, %v2124
  %v2126 = vpop.f32.mrb[0].mxu0
  %v2127 = vpop.f32.mrb[0].mxu0
  %v2128 = vadd.f32 %v283, %v2127
  %v2129 = vpop.f32.mrb[0].mxu0
  %2130 = vmatprep.mubr.bf16.mxu0 0
  %2131 = vmatmul.mubr.bf16.gmra.mrb[0].mxu0 %v1221
  %v2132 = vpop.f32.mrb[0].mxu0
  %v2133 = vadd.f32 %v283, %v2132
  %v2134 = vpop.f32.mrb[0].mxu0
  %v2135 = vpop.f32.mrb[0].mxu0
  %v2136 = vadd.f32 %v283, %v2135
  %v2137 = vpop.f32.mrb[0].mxu0
  %2138 = vmatprep.mubr.bf16.mxu0 0
  %2139 = vmatmul.mubr.bf16.gmra.mrb[0].mxu0 %v1224
  %v2140 = vpop.f32.mrb[0].mxu0
  %v2141 = vadd.f32 %v283, %v2140
  %v2142 = vpop.f32.mrb[0].mxu0
  %v2143 = vpop.f32.mrb[0].mxu0
  %v2144 = vadd.f32 %v283, %v2143
  %v2145 = vpop.f32.mrb[0].mxu0
  %2146 = vmatprep.mubr.bf16.mxu0 0
  %2147 = vmatmul.mubr.bf16.gmra.mrb[0].mxu0 %v1227
  %v2148 = vpop.f32.mrb[0].mxu0
  %v2149 = vadd.f32 %v283, %v2148
  %v2150 = vpop.f32.mrb[0].mxu0
  %v2151 = vpop.f32.mrb[0].mxu0
  %v2152 = vadd.f32 %v283, %v2151
  %v2153 = vpop.f32.mrb[0].mxu0
  %2154 = vmatprep.mubr.bf16.mxu0 0
  %2155 = vmatmul.mubr.bf16.gmra.mrb[0].mxu0 %v1230
  %v2156 = vpop.f32.mrb[0].mxu0
  %v2157 = vadd.f32 %v283, %v2156
  %v2158 = vpop.f32.mrb[0].mxu0
  %v2159 = vpop.f32.mrb[0].mxu0
  %v2160 = vadd.f32 %v283, %v2159
  %v2161 = vpop.f32.mrb[0].mxu0
  %2162 = vmatprep.mubr.bf16.mxu0 0
  %2163 = vmatmul.mubr.bf16.gmra.mrb[0].mxu0 %v1233
  %v2164 = vpop.f32.mrb[0].mxu0
  %v2165 = vadd.f32 %v283, %v2164
  %v2166 = vpop.f32.mrb[0].mxu0
  %v2167 = vpop.f32.mrb[0].mxu0
  %v2168 = vadd.f32 %v283, %v2167
  %v2169 = vpop.f32.mrb[0].mxu0
  %2170 = vmatprep.mubr.bf16.mxu0 0
  %2171 = vmatmul.mubr.bf16.gmra.mrb[0].mxu0 %v1236
  %v2172 = vpop.f32.mrb[0].mxu0
  %v2173 = vadd.f32 %v283, %v2172
  %v2174 = vpop.f32.mrb[0].mxu0
  %v2175 = vpop.f32.mrb[0].mxu0
  %v2176 = vadd.f32 %v283, %v2175
  %v2177 = vpop.f32.mrb[0].mxu0
  %2178 = vmatprep.mubr.bf16.mxu0 0
  %2179 = vmatmul.mubr.bf16.gmra.mrb[0].mxu0 %v1239
  %v2180 = vpop.f32.mrb[0].mxu0
  %v2181 = vadd.f32 %v283, %v2180
  %v2182 = vpop.f32.mrb[0].mxu0
  %v2183 = vpop.f32.mrb[0].mxu0
  %v2184 = vadd.f32 %v283, %v2183
  %v2185 = vpop.f32.mrb[0].mxu0
  %2186 = vmatprep.mubr.bf16.mxu0 0
  %2187 = vmatmul.mubr.bf16.gmra.mrb[0].mxu0 %v1242
  %v2188 = vpop.f32.mrb[0].mxu0
  %v2189 = vadd.f32 %v283, %v2188
  %v2190 = vpop.f32.mrb[0].mxu0
  %v2191 = vpop.f32.mrb[0].mxu0
  %v2192 = vadd.f32 %v283, %v2191
  %v2193 = vpop.f32.mrb[0].mxu0
  %2194 = vmatprep.mubr.bf16.mxu0 0
  %2195 = vmatmul.mubr.bf16.gmra.mrb[0].mxu0 %v1245
  %v2196 = vpop.f32.mrb[0].mxu0
  %v2197 = vadd.f32 %v283, %v2196
  %v2198 = vpop.f32.mrb[0].mxu0
  %v2199 = vpop.f32.mrb[0].mxu0
  %v2200 = vadd.f32 %v283, %v2199
  %v2201 = vpop.f32.mrb[0].mxu0
  %2202 = vmatprep.mubr.bf16.mxu0 0
  %2203 = vmatmul.mubr.bf16.gmra.mrb[0].mxu0 %v1248
  %v2204 = vpop.f32.mrb[0].mxu0
  %v2205 = vadd.f32 %v283, %v2204
  %v2206 = vpop.f32.mrb[0].mxu0
  %v2207 = vpop.f32.mrb[0].mxu0
  %v2208 = vadd.f32 %v283, %v2207
  %v2209 = vpop.f32.mrb[0].mxu0
  %2210 = vmatprep.mubr.bf16.mxu0 0
  %2211 = vmatmul.mubr.bf16.gmra.mrb[0].mxu0 %v1251
  %v2212 = vpop.f32.mrb[0].mxu0
  %v2213 = vadd.f32 %v283, %v2212
  %v2214 = vpop.f32.mrb[0].mxu0
  %v2215 = vpop.f32.mrb[0].mxu0
  %v2216 = vadd.f32 %v283, %v2215
  %v2217 = vpop.f32.mrb[0].mxu0
  %2218 = vmatprep.mubr.bf16.mxu0 0
  %2219 = vmatmul.mubr.bf16.gmra.mrb[0].mxu0 %v1254
  %v2220 = vpop.f32.mrb[0].mxu0
  %v2221 = vadd.f32 %v283, %v2220
  %v2222 = vpop.f32.mrb[0].mxu0
  %v2223 = vpop.f32.mrb[0].mxu0
  %v2224 = vadd.f32 %v283, %v2223
  %v2225 = vpop.f32.mrb[0].mxu0
  %2226 = vmatprep.mubr.bf16.mxu0 0
  %2227 = vmatmul.mubr.bf16.gmra.mrb[0].mxu0 %v1257
  %v2228 = vpop.f32.mrb[0].mxu0
  %v2229 = vadd.f32 %v283, %v2228
  %v2230 = vpop.f32.mrb[0].mxu0
  %v2231 = vpop.f32.mrb[0].mxu0
  %v2232 = vadd.f32 %v283, %v2231
  %v2233 = vpop.f32.mrb[0].mxu0
  %2234 = vmatprep.mubr.bf16.mxu0 0
  %2235 = vmatmul.mubr.bf16.gmra.mrb[0].mxu0 %v1260
  %v2236 = vpop.f32.mrb[0].mxu0
  %v2237 = vadd.f32 %v283, %v2236
  %v2238 = vpop.f32.mrb[0].mxu0
  %v2239 = vpop.f32.mrb[0].mxu0
  %v2240 = vadd.f32 %v283, %v2239
  %v2241 = vpop.f32.mrb[0].mxu0
  %2242 = vmatprep.mubr.bf16.mxu0 0
  %2243 = vmatmul.mubr.bf16.gmra.mrb[0].mxu0 %v1263
  %v2244 = vpop.f32.mrb[0].mxu0
  %v2245 = vadd.f32 %v283, %v2244
  %v2246 = vpop.f32.mrb[0].mxu0
  %v2247 = vpop.f32.mrb[0].mxu0
  %v2248 = vadd.f32 %v283, %v2247
  %v2249 = vpop.f32.mrb[0].mxu0
  %2250 = vmatprep.mubr.bf16.mxu0 0
  %2251 = vmatmul.mubr.bf16.gmra.mrb[0].mxu0 %v1266
  %v2252 = vpop.f32.mrb[0].mxu0
  %v2253 = vadd.f32 %v283, %v2252
  %v2254 = vpop.f32.mrb[0].mxu0
  %v2255 = vpop.f32.mrb[0].mxu0
  %v2256 = vadd.f32 %v283, %v2255
  %v2257 = vpop.f32.mrb[0].mxu0
  %2258 = vmatprep.mubr.bf16.mxu0 0
  %2259 = vmatmul.mubr.bf16.gmra.mrb[0].mxu0 %v1269
  %v2260 = vpop.f32.mrb[0].mxu0
  %v2261 = vadd.f32 %v283, %v2260
  %v2262 = vpop.f32.mrb[0].mxu0
  %v2263 = vpop.f32.mrb[0].mxu0
  %v2264 = vadd.f32 %v283, %v2263
  %v2265 = vpop.f32.mrb[0].mxu0
  %2266 = vmatprep.mubr.bf16.mxu0 0
  %2267 = vmatmul.mubr.bf16.gmra.mrb[0].mxu0 %v1272
  %v2268 = vpop.f32.mrb[0].mxu0
  %v2269 = vadd.f32 %v283, %v2268
  %v2270 = vpop.f32.mrb[0].mxu0
  %v2271 = vpop.f32.mrb[0].mxu0
  %v2272 = vadd.f32 %v283, %v2271
  %v2273 = vpop.f32.mrb[0].mxu0
  %2274 = vmatprep.mubr.bf16.mxu0 0
  %2275 = vmatmul.mubr.bf16.gmra.mrb[0].mxu0 %v1275
  %v2276 = vpop.f32.mrb[0].mxu0
  %v2277 = vadd.f32 %v283, %v2276
  %v2278 = vpop.f32.mrb[0].mxu0
  %v2279 = vpop.f32.mrb[0].mxu0
  %v2280 = vadd.f32 %v283, %v2279
  %v2281 = vpop.f32.mrb[0].mxu0
  %2282 = vmatprep.mubr.bf16.mxu0 0
  %2283 = vmatmul.mubr.bf16.gmra.mrb[0].mxu0 %v1278
  %v2284 = vpop.f32.mrb[0].mxu0
  %v2285 = vadd.f32 %v283, %v2284
  %v2286 = vpop.f32.mrb[0].mxu0
  %v2287 = vpop.f32.mrb[0].mxu0
  %v2288 = vadd.f32 %v283, %v2287
  %v2289 = vpop.f32.mrb[0].mxu0
  %2290 = vmatprep.mubr.bf16.mxu0 0
  %2291 = vmatmul.mubr.bf16.gmra.mrb[0].mxu0 %v1281
  %v2292 = vpop.f32.mrb[0].mxu0
  %v2293 = vadd.f32 %v283, %v2292
  %v2294 = vpop.f32.mrb[0].mxu0
  %v2295 = vpop.f32.mrb[0].mxu0
  %v2296 = vadd.f32 %v283, %v2295
  %v2297 = vpop.f32.mrb[0].mxu0
  %2298 = vmatprep.mubr.bf16.mxu0 0
  %2299 = vmatmul.mubr.bf16.gmra.mrb[0].mxu0 %v1284
  %v2300 = vpop.f32.mrb[0].mxu0
  %v2301 = vadd.f32 %v283, %v2300
  %v2302 = vpop.f32.mrb[0].mxu0
  %v2303 = vpop.f32.mrb[0].mxu0
  %v2304 = vadd.f32 %v283, %v2303
  %v2305 = vpop.f32.mrb[0].mxu0
  %2306 = vmatprep.mubr.bf16.mxu0 0
  %2307 = vmatmul.mubr.bf16.gmra.mrb[0].mxu0 %v1287
  %v2308 = vpop.f32.mrb[0].mxu0
  %v2309 = vadd.f32 %v283, %v2308
  %v2310 = vpop.f32.mrb[0].mxu0
  %v2311 = vpop.f32.mrb[0].mxu0
  %v2312 = vadd.f32 %v283, %v2311
  %v2313 = vpop.f32.mrb[0].mxu0
  %2314 = vmatprep.mubr.bf16.mxu0 0
  %2315 = vmatmul.mubr.bf16.gmra.mrb[0].mxu0 %v1290
  %v2316 = vpop.f32.mrb[0].mxu0
  %v2317 = vadd.f32 %v283, %v2316
  %v2318 = vpop.f32.mrb[0].mxu0
  %v2319 = vpop.f32.mrb[0].mxu0
  %v2320 = vadd.f32 %v283, %v2319
  %v2321 = vpop.f32.mrb[0].mxu0
  %2322 = vmatprep.mubr.bf16.mxu0 0
  %2323 = vmatmul.mubr.bf16.gmra.mrb[0].mxu0 %v1293
  %v2324 = vpop.f32.mrb[0].mxu0
  %v2325 = vadd.f32 %v283, %v2324
  %v2326 = vpop.f32.mrb[0].mxu0
  %v2327 = vpop.f32.mrb[0].mxu0
  %v2328 = vadd.f32 %v283, %v2327
  %v2329 = vpop.f32.mrb[0].mxu0
  %2330 = vmatprep.mubr.bf16.mxu0 0
  %2331 = vmatmul.mubr.bf16.gmra.mrb[0].mxu0 %v1296
  %v2332 = vpop.f32.mrb[0].mxu0
  %v2333 = vadd.f32 %v283, %v2332
  %v2334 = vpop.f32.mrb[0].mxu0
  %v2335 = vpop.f32.mrb[0].mxu0
  %v2336 = vadd.f32 %v283, %v2335
  %v2337 = vpop.f32.mrb[0].mxu0
  %2338 = vmatprep.mubr.bf16.mxu0 0
  %2339 = vmatmul.mubr.bf16.gmra.mrb[0].mxu0 %v1299
  %v2340 = vpop.f32.mrb[0].mxu0
  %v2341 = vadd.f32 %v283, %v2340
  %v2342 = vpop.f32.mrb[0].mxu0
  %v2343 = vpop.f32.mrb[0].mxu0
  %v2344 = vadd.f32 %v283, %v2343
  %v2345 = vpop.f32.mrb[0].mxu0
  %2346 = vmatprep.mubr.bf16.mxu0 0
  %2347 = vmatmul.mubr.bf16.gmra.mrb[0].mxu0 %v1302
  %v2348 = vpop.f32.mrb[0].mxu0
  %v2349 = vadd.f32 %v283, %v2348
  %v2350 = vpop.f32.mrb[0].mxu0
  %v2351 = vpop.f32.mrb[0].mxu0
  %v2352 = vadd.f32 %v283, %v2351
  %v2353 = vpop.f32.mrb[0].mxu0
  %2354 = vmatprep.mubr.bf16.mxu0 0
  %2355 = vmatmul.mubr.bf16.gmra.mrb[0].mxu0 %v1305
  %v2356 = vpop.f32.mrb[0].mxu0
  %v2357 = vadd.f32 %v283, %v2356
  %v2358 = vpop.f32.mrb[0].mxu0
  %v2359 = vpop.f32.mrb[0].mxu0
  %v2360 = vadd.f32 %v283, %v2359
  %v2361 = vpop.f32.mrb[0].mxu0
  %2362 = vmatprep.mubr.bf16.mxu0 0
  %2363 = vmatmul.mubr.bf16.gmra.mrb[0].mxu0 %v1308
  %v2364 = vpop.f32.mrb[0].mxu0
  %v2365 = vadd.f32 %v283, %v2364
  %v2366 = vpop.f32.mrb[0].mxu0
  %v2367 = vpop.f32.mrb[0].mxu0
  %v2368 = vadd.f32 %v283, %v2367
  %v2369 = vpop.f32.mrb[0].mxu0
  %2370 = vdwg.mxu0
  %v2371 = vmax.f32 %v1349, 0.0
  %v2372 = vmax.f32 %v1352, 0.0
  %v2373 = vmax.f32 %v1357, 0.0
  %v2374 = vmax.f32 %v1360, 0.0
  %v2375 = vmax.f32 %v1365, 0.0
  %v2376 = vmax.f32 %v1368, 0.0
  %v2377 = vmax.f32 %v1373, 0.0
  %v2378 = vmax.f32 %v1376, 0.0
  %v2379 = vmax.f32 %v1381, 0.0
  %v2380 = vmax.f32 %v1384, 0.0
  %v2381 = vmax.f32 %v1389, 0.0
  %v2382 = vmax.f32 %v1392, 0.0
  %v2383 = vmax.f32 %v1397, 0.0
  %v2384 = vmax.f32 %v1400, 0.0
  %v2385 = vmax.f32 %v1405, 0.0
  %v2386 = vmax.f32 %v1408, 0.0
  %v2387 = vmax.f32 %v1413, 0.0
  %v2388 = vmax.f32 %v1416, 0.0
  %v2389 = vmax.f32 %v1421, 0.0
  %v2390 = vmax.f32 %v1424, 0.0
  %v2391 = vmax.f32 %v1429, 0.0
  %v2392 = vmax.f32 %v1432, 0.0
  %v2393 = vmax.f32 %v1437, 0.0
  %v2394 = vmax.f32 %v1440, 0.0
  %v2395 = vmax.f32 %v1445, 0.0
  %v2396 = vmax.f32 %v1448, 0.0
  %v2397 = vmax.f32 %v1453, 0.0
  %v2398 = vmax.f32 %v1456, 0.0
  %v2399 = vmax.f32 %v1461, 0.0
  %v2400 = vmax.f32 %v1464, 0.0
  %v2401 = vmax.f32 %v1469, 0.0
  %v2402 = vmax.f32 %v1472, 0.0
  %v2403 = vmax.f32 %v1477, 0.0
  %v2404 = vmax.f32 %v1480, 0.0
  %v2405 = vmax.f32 %v1485, 0.0
  %v2406 = vmax.f32 %v1488, 0.0
  %v2407 = vmax.f32 %v1493, 0.0
  %v2408 = vmax.f32 %v1496, 0.0
  %v2409 = vmax.f32 %v1501, 0.0
  %v2410 = vmax.f32 %v1504, 0.0
  %v2411 = vmax.f32 %v1509, 0.0
  %v2412 = vmax.f32 %v1512, 0.0
  %v2413 = vmax.f32 %v1517, 0.0
  %v2414 = vmax.f32 %v1520, 0.0
  %v2415 = vmax.f32 %v1525, 0.0
  %v2416 = vmax.f32 %v1528, 0.0
  %v2417 = vmax.f32 %v1533, 0.0
  %v2418 = vmax.f32 %v1536, 0.0
  %v2419 = vmax.f32 %v1541, 0.0
  %v2420 = vmax.f32 %v1544, 0.0
  %v2421 = vmax.f32 %v1549, 0.0
  %v2422 = vmax.f32 %v1552, 0.0
  %v2423 = vmax.f32 %v1557, 0.0
  %v2424 = vmax.f32 %v1560, 0.0
  %v2425 = vmax.f32 %v1565, 0.0
  %v2426 = vmax.f32 %v1568, 0.0
  %v2427 = vmax.f32 %v1573, 0.0
  %v2428 = vmax.f32 %v1576, 0.0
  %v2429 = vmax.f32 %v1581, 0.0
  %v2430 = vmax.f32 %v1584, 0.0
  %v2431 = vmax.f32 %v1589, 0.0
  %v2432 = vmax.f32 %v1592, 0.0
  %v2433 = vmax.f32 %v1597, 0.0
  %v2434 = vmax.f32 %v1600, 0.0
  %v2435 = vmax.f32 %v1605, 0.0
  %v2436 = vmax.f32 %v1608, 0.0
  %v2437 = vmax.f32 %v1613, 0.0
  %v2438 = vmax.f32 %v1616, 0.0
  %v2439 = vmax.f32 %v1621, 0.0
  %v2440 = vmax.f32 %v1624, 0.0
  %v2441 = vmax.f32 %v1629, 0.0
  %v2442 = vmax.f32 %v1632, 0.0
  %v2443 = vmax.f32 %v1637, 0.0
  %v2444 = vmax.f32 %v1640, 0.0
  %v2445 = vmax.f32 %v1645, 0.0
  %v2446 = vmax.f32 %v1648, 0.0
  %v2447 = vmax.f32 %v1653, 0.0
  %v2448 = vmax.f32 %v1656, 0.0
  %v2449 = vmax.f32 %v1661, 0.0
  %v2450 = vmax.f32 %v1664, 0.0
  %v2451 = vmax.f32 %v1669, 0.0
  %v2452 = vmax.f32 %v1672, 0.0
  %v2453 = vmax.f32 %v1677, 0.0
  %v2454 = vmax.f32 %v1680, 0.0
  %v2455 = vmax.f32 %v1685, 0.0
  %v2456 = vmax.f32 %v1688, 0.0
  %v2457 = vmax.f32 %v1693, 0.0
  %v2458 = vmax.f32 %v1696, 0.0
  %v2459 = vmax.f32 %v1701, 0.0
  %v2460 = vmax.f32 %v1704, 0.0
  %v2461 = vmax.f32 %v1709, 0.0
  %v2462 = vmax.f32 %v1712, 0.0
  %v2463 = vmax.f32 %v1717, 0.0
  %v2464 = vmax.f32 %v1720, 0.0
  %v2465 = vmax.f32 %v1725, 0.0
  %v2466 = vmax.f32 %v1728, 0.0
  %v2467 = vmax.f32 %v1733, 0.0
  %v2468 = vmax.f32 %v1736, 0.0
  %v2469 = vmax.f32 %v1741, 0.0
  %v2470 = vmax.f32 %v1744, 0.0
  %v2471 = vmax.f32 %v1749, 0.0
  %v2472 = vmax.f32 %v1752, 0.0
  %v2473 = vmax.f32 %v1757, 0.0
  %v2474 = vmax.f32 %v1760, 0.0
  %v2475 = vmax.f32 %v1765, 0.0
  %v2476 = vmax.f32 %v1768, 0.0
  %v2477 = vmax.f32 %v1773, 0.0
  %v2478 = vmax.f32 %v1776, 0.0
  %v2479 = vmax.f32 %v1781, 0.0
  %v2480 = vmax.f32 %v1784, 0.0
  %v2481 = vmax.f32 %v1789, 0.0
  %v2482 = vmax.f32 %v1792, 0.0
  %v2483 = vmax.f32 %v1797, 0.0
  %v2484 = vmax.f32 %v1800, 0.0
  %v2485 = vmax.f32 %v1805, 0.0
  %v2486 = vmax.f32 %v1808, 0.0
  %v2487 = vmax.f32 %v1813, 0.0
  %v2488 = vmax.f32 %v1816, 0.0
  %v2489 = vmax.f32 %v1821, 0.0
  %v2490 = vmax.f32 %v1824, 0.0
  %v2491 = vmax.f32 %v1829, 0.0
  %v2492 = vmax.f32 %v1832, 0.0
  %v2493 = vmax.f32 %v1837, 0.0
  %v2494 = vmax.f32 %v1840, 0.0
  %v2495 = vmax.f32 %v1845, 0.0
  %v2496 = vmax.f32 %v1848, 0.0
  %v2497 = vmax.f32 %v1853, 0.0
  %v2498 = vmax.f32 %v1856, 0.0
  %v2499 = vmax.f32 %v1861, 0.0
  %v2500 = vmax.f32 %v1864, 0.0
  %v2501 = vmax.f32 %v1869, 0.0
  %v2502 = vmax.f32 %v1872, 0.0
  %v2503 = vmax.f32 %v1877, 0.0
  %v2504 = vmax.f32 %v1880, 0.0
  %v2505 = vmax.f32 %v1885, 0.0
  %v2506 = vmax.f32 %v1888, 0.0
  %v2507 = vmax.f32 %v1893, 0.0
  %v2508 = vmax.f32 %v1896, 0.0
  %v2509 = vmax.f32 %v1901, 0.0
  %v2510 = vmax.f32 %v1904, 0.0
  %v2511 = vmax.f32 %v1909, 0.0
  %v2512 = vmax.f32 %v1912, 0.0
  %v2513 = vmax.f32 %v1917, 0.0
  %v2514 = vmax.f32 %v1920, 0.0
  %v2515 = vmax.f32 %v1925, 0.0
  %v2516 = vmax.f32 %v1928, 0.0
  %v2517 = vmax.f32 %v1933, 0.0
  %v2518 = vmax.f32 %v1936, 0.0
  %v2519 = vmax.f32 %v1941, 0.0
  %v2520 = vmax.f32 %v1944, 0.0
  %v2521 = vmax.f32 %v1949, 0.0
  %v2522 = vmax.f32 %v1952, 0.0
  %v2523 = vmax.f32 %v1957, 0.0
  %v2524 = vmax.f32 %v1960, 0.0
  %v2525 = vmax.f32 %v1965, 0.0
  %v2526 = vmax.f32 %v1968, 0.0
  %v2527 = vmax.f32 %v1973, 0.0
  %v2528 = vmax.f32 %v1976, 0.0
  %v2529 = vmax.f32 %v1981, 0.0
  %v2530 = vmax.f32 %v1984, 0.0
  %v2531 = vmax.f32 %v1989, 0.0
  %v2532 = vmax.f32 %v1992, 0.0
  %v2533 = vmax.f32 %v1997, 0.0
  %v2534 = vmax.f32 %v2000, 0.0
  %v2535 = vmax.f32 %v2005, 0.0
  %v2536 = vmax.f32 %v2008, 0.0
  %v2537 = vmax.f32 %v2013, 0.0
  %v2538 = vmax.f32 %v2016, 0.0
  %v2539 = vmax.f32 %v2021, 0.0
  %v2540 = vmax.f32 %v2024, 0.0
  %v2541 = vmax.f32 %v2029, 0.0
  %v2542 = vmax.f32 %v2032, 0.0
  %v2543 = vmax.f32 %v2037, 0.0
  %v2544 = vmax.f32 %v2040, 0.0
  %v2545 = vmax.f32 %v2045, 0.0
  %v2546 = vmax.f32 %v2048, 0.0
  %v2547 = vmax.f32 %v2053, 0.0
  %v2548 = vmax.f32 %v2056, 0.0
  %v2549 = vmax.f32 %v2061, 0.0
  %v2550 = vmax.f32 %v2064, 0.0
  %v2551 = vmax.f32 %v2069, 0.0
  %v2552 = vmax.f32 %v2072, 0.0
  %v2553 = vmax.f32 %v2077, 0.0
  %v2554 = vmax.f32 %v2080, 0.0
  %v2555 = vmax.f32 %v2085, 0.0
  %v2556 = vmax.f32 %v2088, 0.0
  %v2557 = vmax.f32 %v2093, 0.0
  %v2558 = vmax.f32 %v2096, 0.0
  %v2559 = vmax.f32 %v2101, 0.0
  %v2560 = vmax.f32 %v2104, 0.0
  %v2561 = vmax.f32 %v2109, 0.0
  %v2562 = vmax.f32 %v2112, 0.0
  %v2563 = vmax.f32 %v2117, 0.0
  %v2564 = vmax.f32 %v2120, 0.0
  %v2565 = vmax.f32 %v2125, 0.0
  %v2566 = vmax.f32 %v2128, 0.0
  %v2567 = vmax.f32 %v2133, 0.0
  %v2568 = vmax.f32 %v2136, 0.0
  %v2569 = vmax.f32 %v2141, 0.0
  %v2570 = vmax.f32 %v2144, 0.0
  %v2571 = vmax.f32 %v2149, 0.0
  %v2572 = vmax.f32 %v2152, 0.0
  %v2573 = vmax.f32 %v2157, 0.0
  %v2574 = vmax.f32 %v2160, 0.0
  %v2575 = vmax.f32 %v2165, 0.0
  %v2576 = vmax.f32 %v2168, 0.0
  %v2577 = vmax.f32 %v2173, 0.0
  %v2578 = vmax.f32 %v2176, 0.0
  %v2579 = vmax.f32 %v2181, 0.0
  %v2580 = vmax.f32 %v2184, 0.0
  %v2581 = vmax.f32 %v2189, 0.0
  %v2582 = vmax.f32 %v2192, 0.0
  %v2583 = vmax.f32 %v2197, 0.0
  %v2584 = vmax.f32 %v2200, 0.0
  %v2585 = vmax.f32 %v2205, 0.0
  %v2586 = vmax.f32 %v2208, 0.0
  %v2587 = vmax.f32 %v2213, 0.0
  %v2588 = vmax.f32 %v2216, 0.0
  %v2589 = vmax.f32 %v2221, 0.0
  %v2590 = vmax.f32 %v2224, 0.0
  %v2591 = vmax.f32 %v2229, 0.0
  %v2592 = vmax.f32 %v2232, 0.0
  %v2593 = vmax.f32 %v2237, 0.0
  %v2594 = vmax.f32 %v2240, 0.0
  %v2595 = vmax.f32 %v2245, 0.0
  %v2596 = vmax.f32 %v2248, 0.0
  %v2597 = vmax.f32 %v2253, 0.0
  %v2598 = vmax.f32 %v2256, 0.0
  %v2599 = vmax.f32 %v2261, 0.0
  %v2600 = vmax.f32 %v2264, 0.0
  %v2601 = vmax.f32 %v2269, 0.0
  %v2602 = vmax.f32 %v2272, 0.0
  %v2603 = vmax.f32 %v2277, 0.0
  %v2604 = vmax.f32 %v2280, 0.0
  %v2605 = vmax.f32 %v2285, 0.0
  %v2606 = vmax.f32 %v2288, 0.0
  %v2607 = vmax.f32 %v2293, 0.0
  %v2608 = vmax.f32 %v2296, 0.0
  %v2609 = vmax.f32 %v2301, 0.0
  %v2610 = vmax.f32 %v2304, 0.0
  %v2611 = vmax.f32 %v2309, 0.0
  %v2612 = vmax.f32 %v2312, 0.0
  %v2613 = vmax.f32 %v2317, 0.0
  %v2614 = vmax.f32 %v2320, 0.0
  %v2615 = vmax.f32 %v2325, 0.0
  %v2616 = vmax.f32 %v2328, 0.0
  %v2617 = vmax.f32 %v2333, 0.0
  %v2618 = vmax.f32 %v2336, 0.0
  %v2619 = vmax.f32 %v2341, 0.0
  %v2620 = vmax.f32 %v2344, 0.0
  %v2621 = vmax.f32 %v2349, 0.0
  %v2622 = vmax.f32 %v2352, 0.0
  %v2623 = vmax.f32 %v2357, 0.0
  %v2624 = vmax.f32 %v2360, 0.0
  %v2625 = vmax.f32 %v2365, 0.0
  %v2626 = vmax.f32 %v2368, 0.0
  %v2627 = vpack.c.bf16 %v2372, %v2371
  %v2628 = vpack.c.bf16 %v2374, %v2373
  %v2629 = vpack.c.bf16 %v2376, %v2375
  %v2630 = vpack.c.bf16 %v2378, %v2377
  %v2631 = vpack.c.bf16 %v2380, %v2379
  %v2632 = vpack.c.bf16 %v2382, %v2381
  %v2633 = vpack.c.bf16 %v2384, %v2383
  %v2634 = vpack.c.bf16 %v2386, %v2385
  %v2635 = vpack.c.bf16 %v2388, %v2387
  %v2636 = vpack.c.bf16 %v2390, %v2389
  %v2637 = vpack.c.bf16 %v2392, %v2391
  %v2638 = vpack.c.bf16 %v2394, %v2393
  %v2639 = vpack.c.bf16 %v2396, %v2395
  %v2640 = vpack.c.bf16 %v2398, %v2397
  %v2641 = vpack.c.bf16 %v2400, %v2399
  %v2642 = vpack.c.bf16 %v2402, %v2401
  %v2643 = vpack.c.bf16 %v2404, %v2403
  %v2644 = vpack.c.bf16 %v2406, %v2405
  %v2645 = vpack.c.bf16 %v2408, %v2407
  %v2646 = vpack.c.bf16 %v2410, %v2409
  %v2647 = vpack.c.bf16 %v2412, %v2411
  %v2648 = vpack.c.bf16 %v2414, %v2413
  %v2649 = vpack.c.bf16 %v2416, %v2415
  %v2650 = vpack.c.bf16 %v2418, %v2417
  %v2651 = vpack.c.bf16 %v2420, %v2419
  %v2652 = vpack.c.bf16 %v2422, %v2421
  %v2653 = vpack.c.bf16 %v2424, %v2423
  %v2654 = vpack.c.bf16 %v2426, %v2425
  %v2655 = vpack.c.bf16 %v2428, %v2427
  %v2656 = vpack.c.bf16 %v2430, %v2429
  %v2657 = vpack.c.bf16 %v2432, %v2431
  %v2658 = vpack.c.bf16 %v2434, %v2433
  %v2659 = vpack.c.bf16 %v2436, %v2435
  %v2660 = vpack.c.bf16 %v2438, %v2437
  %v2661 = vpack.c.bf16 %v2440, %v2439
  %v2662 = vpack.c.bf16 %v2442, %v2441
  %v2663 = vpack.c.bf16 %v2444, %v2443
  %v2664 = vpack.c.bf16 %v2446, %v2445
  %v2665 = vpack.c.bf16 %v2448, %v2447
  %v2666 = vpack.c.bf16 %v2450, %v2449
  %v2667 = vpack.c.bf16 %v2452, %v2451
  %v2668 = vpack.c.bf16 %v2454, %v2453
  %v2669 = vpack.c.bf16 %v2456, %v2455
  %v2670 = vpack.c.bf16 %v2458, %v2457
  %v2671 = vpack.c.bf16 %v2460, %v2459
  %v2672 = vpack.c.bf16 %v2462, %v2461
  %v2673 = vpack.c.bf16 %v2464, %v2463
  %v2674 = vpack.c.bf16 %v2466, %v2465
  %v2675 = vpack.c.bf16 %v2468, %v2467
  %v2676 = vpack.c.bf16 %v2470, %v2469
  %v2677 = vpack.c.bf16 %v2472, %v2471
  %v2678 = vpack.c.bf16 %v2474, %v2473
  %v2679 = vpack.c.bf16 %v2476, %v2475
  %v2680 = vpack.c.bf16 %v2478, %v2477
  %v2681 = vpack.c.bf16 %v2480, %v2479
  %v2682 = vpack.c.bf16 %v2482, %v2481
  %v2683 = vpack.c.bf16 %v2484, %v2483
  %v2684 = vpack.c.bf16 %v2486, %v2485
  %v2685 = vpack.c.bf16 %v2488, %v2487
  %v2686 = vpack.c.bf16 %v2490, %v2489
  %v2687 = vpack.c.bf16 %v2492, %v2491
  %v2688 = vpack.c.bf16 %v2494, %v2493
  %v2689 = vpack.c.bf16 %v2496, %v2495
  %v2690 = vpack.c.bf16 %v2498, %v2497
  %v2691 = vpack.c.bf16 %v2500, %v2499
  %v2692 = vpack.c.bf16 %v2502, %v2501
  %v2693 = vpack.c.bf16 %v2504, %v2503
  %v2694 = vpack.c.bf16 %v2506, %v2505
  %v2695 = vpack.c.bf16 %v2508, %v2507
  %v2696 = vpack.c.bf16 %v2510, %v2509
  %v2697 = vpack.c.bf16 %v2512, %v2511
  %v2698 = vpack.c.bf16 %v2514, %v2513
  %v2699 = vpack.c.bf16 %v2516, %v2515
  %v2700 = vpack.c.bf16 %v2518, %v2517
  %v2701 = vpack.c.bf16 %v2520, %v2519
  %v2702 = vpack.c.bf16 %v2522, %v2521
  %v2703 = vpack.c.bf16 %v2524, %v2523
  %v2704 = vpack.c.bf16 %v2526, %v2525
  %v2705 = vpack.c.bf16 %v2528, %v2527
  %v2706 = vpack.c.bf16 %v2530, %v2529
  %v2707 = vpack.c.bf16 %v2532, %v2531
  %v2708 = vpack.c.bf16 %v2534, %v2533
  %v2709 = vpack.c.bf16 %v2536, %v2535
  %v2710 = vpack.c.bf16 %v2538, %v2537
  %v2711 = vpack.c.bf16 %v2540, %v2539
  %v2712 = vpack.c.bf16 %v2542, %v2541
  %v2713 = vpack.c.bf16 %v2544, %v2543
  %v2714 = vpack.c.bf16 %v2546, %v2545
  %v2715 = vpack.c.bf16 %v2548, %v2547
  %v2716 = vpack.c.bf16 %v2550, %v2549
  %v2717 = vpack.c.bf16 %v2552, %v2551
  %v2718 = vpack.c.bf16 %v2554, %v2553
  %v2719 = vpack.c.bf16 %v2556, %v2555
  %v2720 = vpack.c.bf16 %v2558, %v2557
  %v2721 = vpack.c.bf16 %v2560, %v2559
  %v2722 = vpack.c.bf16 %v2562, %v2561
  %v2723 = vpack.c.bf16 %v2564, %v2563
  %v2724 = vpack.c.bf16 %v2566, %v2565
  %v2725 = vpack.c.bf16 %v2568, %v2567
  %v2726 = vpack.c.bf16 %v2570, %v2569
  %v2727 = vpack.c.bf16 %v2572, %v2571
  %v2728 = vpack.c.bf16 %v2574, %v2573
  %v2729 = vpack.c.bf16 %v2576, %v2575
  %v2730 = vpack.c.bf16 %v2578, %v2577
  %v2731 = vpack.c.bf16 %v2580, %v2579
  %v2732 = vpack.c.bf16 %v2582, %v2581
  %v2733 = vpack.c.bf16 %v2584, %v2583
  %v2734 = vpack.c.bf16 %v2586, %v2585
  %v2735 = vpack.c.bf16 %v2588, %v2587
  %v2736 = vpack.c.bf16 %v2590, %v2589
  %v2737 = vpack.c.bf16 %v2592, %v2591
  %v2738 = vpack.c.bf16 %v2594, %v2593
  %v2739 = vpack.c.bf16 %v2596, %v2595
  %v2740 = vpack.c.bf16 %v2598, %v2597
  %v2741 = vpack.c.bf16 %v2600, %v2599
  %v2742 = vpack.c.bf16 %v2602, %v2601
  %v2743 = vpack.c.bf16 %v2604, %v2603
  %v2744 = vpack.c.bf16 %v2606, %v2605
  %v2745 = vpack.c.bf16 %v2608, %v2607
  %v2746 = vpack.c.bf16 %v2610, %v2609
  %v2747 = vpack.c.bf16 %v2612, %v2611
  %v2748 = vpack.c.bf16 %v2614, %v2613
  %v2749 = vpack.c.bf16 %v2616, %v2615
  %v2750 = vpack.c.bf16 %v2618, %v2617
  %v2751 = vpack.c.bf16 %v2620, %v2619
  %v2752 = vpack.c.bf16 %v2622, %v2621
  %v2753 = vpack.c.bf16 %v2624, %v2623
  %v2754 = vpack.c.bf16 %v2626, %v2625
  %v2755 = vld [vmem:[%s2] sm:$0xf]
  %v2756 = vld [vmem:[%s2 + $0x4] sm:$0xf]
  %v2757 = vld [vmem:[%s2 + $0x8] sm:$0xf]
  %v2758 = vld [vmem:[%s2 + $0xc] sm:$0xf]
  %v2759 = vld [vmem:[%s4] sm:$0x1]
  %v2761 = vlaneseq
  %v2762 = vshrl.u32 %v2761, 7
  %v2763 = vsub.s32 0, %v2762
  %v2764 = vrot.slane %v2759, %v2763
  %v2770 = vunpack.c.l.b16 %v2755
  %v2771 = vunpack.c.l.b16 %v2756
  %v2772 = vunpack.c.l.b16 %v2757
  %v2773 = vunpack.c.l.b16 %v2758
  %v2774 = vpack.c.b16 %v2771, %v2770
  %v2775 = vpack.c.b16 %v2773, %v2772
  %vm2778 = vcmask 261120
  %v2780 = vsel %vm2778, %v2627, 0
  %v2783 = vsel %vm2778, %v2628, 0
  %v2786 = vsel %vm2778, %v2629, 0
  %v2789 = vsel %vm2778, %v2630, 0
  %v2792 = vsel %vm2778, %v2631, 0
  %v2795 = vsel %vm2778, %v2632, 0
  %v2798 = vsel %vm2778, %v2633, 0
  %v2801 = vsel %vm2778, %v2634, 0
  %v2804 = vsel %vm2778, %v2635, 0
  %v2807 = vsel %vm2778, %v2636, 0
  %v2810 = vsel %vm2778, %v2637, 0
  %v2813 = vsel %vm2778, %v2638, 0
  %v2816 = vsel %vm2778, %v2639, 0
  %v2819 = vsel %vm2778, %v2640, 0
  %v2822 = vsel %vm2778, %v2641, 0
  %v2825 = vsel %vm2778, %v2642, 0
  %v2828 = vsel %vm2778, %v2643, 0
  %v2831 = vsel %vm2778, %v2644, 0
  %v2834 = vsel %vm2778, %v2645, 0
  %v2837 = vsel %vm2778, %v2646, 0
  %v2840 = vsel %vm2778, %v2647, 0
  %v2843 = vsel %vm2778, %v2648, 0
  %v2846 = vsel %vm2778, %v2649, 0
  %v2849 = vsel %vm2778, %v2650, 0
  %v2852 = vsel %vm2778, %v2651, 0
  %v2855 = vsel %vm2778, %v2652, 0
  %v2858 = vsel %vm2778, %v2653, 0
  %v2861 = vsel %vm2778, %v2654, 0
  %v2864 = vsel %vm2778, %v2655, 0
  %v2867 = vsel %vm2778, %v2656, 0
  %v2870 = vsel %vm2778, %v2657, 0
  %v2873 = vsel %vm2778, %v2658, 0
  %v2876 = vsel %vm2778, %v2659, 0
  %v2879 = vsel %vm2778, %v2660, 0
  %v2882 = vsel %vm2778, %v2661, 0
  %v2885 = vsel %vm2778, %v2662, 0
  %v2888 = vsel %vm2778, %v2663, 0
  %v2891 = vsel %vm2778, %v2664, 0
  %v2894 = vsel %vm2778, %v2665, 0
  %v2897 = vsel %vm2778, %v2666, 0
  %v2900 = vsel %vm2778, %v2667, 0
  %v2903 = vsel %vm2778, %v2668, 0
  %v2906 = vsel %vm2778, %v2669, 0
  %v2909 = vsel %vm2778, %v2670, 0
  %v2912 = vsel %vm2778, %v2671, 0
  %v2915 = vsel %vm2778, %v2672, 0
  %v2918 = vsel %vm2778, %v2673, 0
  %v2921 = vsel %vm2778, %v2674, 0
  %v2924 = vsel %vm2778, %v2675, 0
  %v2927 = vsel %vm2778, %v2676, 0
  %v2930 = vsel %vm2778, %v2677, 0
  %v2933 = vsel %vm2778, %v2678, 0
  %v2936 = vsel %vm2778, %v2679, 0
  %v2939 = vsel %vm2778, %v2680, 0
  %v2942 = vsel %vm2778, %v2681, 0
  %v2945 = vsel %vm2778, %v2682, 0
  %v2948 = vsel %vm2778, %v2683, 0
  %v2951 = vsel %vm2778, %v2684, 0
  %v2954 = vsel %vm2778, %v2685, 0
  %v2957 = vsel %vm2778, %v2686, 0
  %v2960 = vsel %vm2778, %v2687, 0
  %v2963 = vsel %vm2778, %v2688, 0
  %v2966 = vsel %vm2778, %v2689, 0
  %v2969 = vsel %vm2778, %v2690, 0
  %v2972 = vsel %vm2778, %v2691, 0
  %v2975 = vsel %vm2778, %v2692, 0
  %v2978 = vsel %vm2778, %v2693, 0
  %v2981 = vsel %vm2778, %v2694, 0
  %v2984 = vsel %vm2778, %v2695, 0
  %v2987 = vsel %vm2778, %v2696, 0
  %v2990 = vsel %vm2778, %v2697, 0
  %v2993 = vsel %vm2778, %v2698, 0
  %v2996 = vsel %vm2778, %v2699, 0
  %v2999 = vsel %vm2778, %v2700, 0
  %v3002 = vsel %vm2778, %v2701, 0
  %v3005 = vsel %vm2778, %v2702, 0
  %v3008 = vsel %vm2778, %v2703, 0
  %v3011 = vsel %vm2778, %v2704, 0
  %v3014 = vsel %vm2778, %v2705, 0
  %v3017 = vsel %vm2778, %v2706, 0
  %v3020 = vsel %vm2778, %v2707, 0
  %v3023 = vsel %vm2778, %v2708, 0
  %v3026 = vsel %vm2778, %v2709, 0
  %v3029 = vsel %vm2778, %v2710, 0
  %v3032 = vsel %vm2778, %v2711, 0
  %v3035 = vsel %vm2778, %v2712, 0
  %v3038 = vsel %vm2778, %v2713, 0
  %v3041 = vsel %vm2778, %v2714, 0
  %v3044 = vsel %vm2778, %v2715, 0
  %v3047 = vsel %vm2778, %v2716, 0
  %v3050 = vsel %vm2778, %v2717, 0
  %v3053 = vsel %vm2778, %v2718, 0
  %v3056 = vsel %vm2778, %v2719, 0
  %v3059 = vsel %vm2778, %v2720, 0
  %v3062 = vsel %vm2778, %v2721, 0
  %v3065 = vsel %vm2778, %v2722, 0
  %v3068 = vsel %vm2778, %v2723, 0
  %v3071 = vsel %vm2778, %v2724, 0
  %v3074 = vsel %vm2778, %v2725, 0
  %v3077 = vsel %vm2778, %v2726, 0
  %v3080 = vsel %vm2778, %v2727, 0
  %v3083 = vsel %vm2778, %v2728, 0
  %v3086 = vsel %vm2778, %v2729, 0
  %v3089 = vsel %vm2778, %v2730, 0
  %v3092 = vsel %vm2778, %v2731, 0
  %v3095 = vsel %vm2778, %v2732, 0
  %v3098 = vsel %vm2778, %v2733, 0
  %v3101 = vsel %vm2778, %v2734, 0
  %v3104 = vsel %vm2778, %v2735, 0
  %v3107 = vsel %vm2778, %v2736, 0
  %v3110 = vsel %vm2778, %v2737, 0
  %v3113 = vsel %vm2778, %v2738, 0
  %v3116 = vsel %vm2778, %v2739, 0
  %v3119 = vsel %vm2778, %v2740, 0
  %v3122 = vsel %vm2778, %v2741, 0
  %v3125 = vsel %vm2778, %v2742, 0
  %v3128 = vsel %vm2778, %v2743, 0
  %v3131 = vsel %vm2778, %v2744, 0
  %v3134 = vsel %vm2778, %v2745, 0
  %v3137 = vsel %vm2778, %v2746, 0
  %v3140 = vsel %vm2778, %v2747, 0
  %v3143 = vsel %vm2778, %v2748, 0
  %v3146 = vsel %vm2778, %v2749, 0
  %v3149 = vsel %vm2778, %v2750, 0
  %v3152 = vsel %vm2778, %v2751, 0
  %v3155 = vsel %vm2778, %v2752, 0
  %v3158 = vsel %vm2778, %v2753, 0
  %v3161 = vsel %vm2778, %v2754, 0
  %3163 = vmatprep.subr.bf16.mxu0 0
  %3164 = vmatpush1.bf16.msra.mxu0 %v2774
  %3165 = vmatprep.subr.bf16.mxu0 0
  %3166 = vmatpush1.bf16.msra.mxu0 %v2775
  %3167 = vmatprep.subr.bf16.mxu0 0
  %3168 = vmatpush1.bf16.msra.mxu0 0
  %3169 = vmatprep.subr.bf16.mxu0 0
  %3170 = vmatpush1.bf16.msra.mxu0 0
  %3171 = vmatprep.subr.bf16.mxu0 0
  %3172 = vmatpush1.bf16.msra.mxu0 0
  %3173 = vmatprep.subr.bf16.mxu0 0
  %3174 = vmatpush1.bf16.msra.mxu0 0
  %3175 = vmatprep.subr.bf16.mxu0 0
  %3176 = vmatpush1.bf16.msra.mxu0 0
  %3177 = vmatprep.subr.bf16.mxu0 0
  %3178 = vmatpush1.bf16.msra.mxu0 0
  %3179 = vmatprep.subr.bf16.mxu0 0
  %3180 = vmatpush1.bf16.msra.mxu0 0
  %3181 = vmatprep.subr.bf16.mxu0 0
  %3182 = vmatpush1.bf16.msra.mxu0 0
  %3183 = vmatprep.subr.bf16.mxu0 0
  %3184 = vmatpush1.bf16.msra.mxu0 0
  %3185 = vmatprep.subr.bf16.mxu0 0
  %3186 = vmatpush1.bf16.msra.mxu0 0
  %3187 = vmatprep.subr.bf16.mxu0 0
  %3188 = vmatpush1.bf16.msra.mxu0 0
  %3189 = vmatprep.subr.bf16.mxu0 0
  %3190 = vmatpush1.bf16.msra.mxu0 0
  %3191 = vmatprep.subr.bf16.mxu0 0
  %3192 = vmatpush1.bf16.msra.mxu0 0
  %3193 = vmatprep.subr.bf16.mxu0 0
  %3194 = vmatpush1.bf16.msra.mxu0 0
  %3195 = vmatprep.mubr.bf16.mxu0 0
  %3196 = vmatmul.mubr.bf16.gmra.mrb[0].mxu0 %v2780
  %v3197 = vpop.f32.mrb[0].mxu0
  %v3198 = vadd.f32 %v2764, %v3197
  %v3199 = vpop.f32.mrb[0].mxu0
  %v3200 = vpop.f32.mrb[0].mxu0
  %v3201 = vadd.f32 %v2764, %v3200
  %v3202 = vpop.f32.mrb[0].mxu0
  %3203 = vmatprep.mubr.bf16.mxu0 0
  %3204 = vmatmul.mubr.bf16.gmra.mrb[0].mxu0 %v2783
  %v3205 = vpop.f32.mrb[0].mxu0
  %v3206 = vadd.f32 %v2764, %v3205
  %v3207 = vpop.f32.mrb[0].mxu0
  %v3208 = vpop.f32.mrb[0].mxu0
  %v3209 = vadd.f32 %v2764, %v3208
  %v3210 = vpop.f32.mrb[0].mxu0
  %3211 = vmatprep.mubr.bf16.mxu0 0
  %3212 = vmatmul.mubr.bf16.gmra.mrb[0].mxu0 %v2786
  %v3213 = vpop.f32.mrb[0].mxu0
  %v3214 = vadd.f32 %v2764, %v3213
  %v3215 = vpop.f32.mrb[0].mxu0
  %v3216 = vpop.f32.mrb[0].mxu0
  %v3217 = vadd.f32 %v2764, %v3216
  %v3218 = vpop.f32.mrb[0].mxu0
  %3219 = vmatprep.mubr.bf16.mxu0 0
  %3220 = vmatmul.mubr.bf16.gmra.mrb[0].mxu0 %v2789
  %v3221 = vpop.f32.mrb[0].mxu0
  %v3222 = vadd.f32 %v2764, %v3221
  %v3223 = vpop.f32.mrb[0].mxu0
  %v3224 = vpop.f32.mrb[0].mxu0
  %v3225 = vadd.f32 %v2764, %v3224
  %v3226 = vpop.f32.mrb[0].mxu0
  %3227 = vmatprep.mubr.bf16.mxu0 0
  %3228 = vmatmul.mubr.bf16.gmra.mrb[0].mxu0 %v2792
  %v3229 = vpop.f32.mrb[0].mxu0
  %v3230 = vadd.f32 %v2764, %v3229
  %v3231 = vpop.f32.mrb[0].mxu0
  %v3232 = vpop.f32.mrb[0].mxu0
  %v3233 = vadd.f32 %v2764, %v3232
  %v3234 = vpop.f32.mrb[0].mxu0
  %3235 = vmatprep.mubr.bf16.mxu0 0
  %3236 = vmatmul.mubr.bf16.gmra.mrb[0].mxu0 %v2795
  %v3237 = vpop.f32.mrb[0].mxu0
  %v3238 = vadd.f32 %v2764, %v3237
  %v3239 = vpop.f32.mrb[0].mxu0
  %v3240 = vpop.f32.mrb[0].mxu0
  %v3241 = vadd.f32 %v2764, %v3240
  %v3242 = vpop.f32.mrb[0].mxu0
  %3243 = vmatprep.mubr.bf16.mxu0 0
  %3244 = vmatmul.mubr.bf16.gmra.mrb[0].mxu0 %v2798
  %v3245 = vpop.f32.mrb[0].mxu0
  %v3246 = vadd.f32 %v2764, %v3245
  %v3247 = vpop.f32.mrb[0].mxu0
  %v3248 = vpop.f32.mrb[0].mxu0
  %v3249 = vadd.f32 %v2764, %v3248
  %v3250 = vpop.f32.mrb[0].mxu0
  %3251 = vmatprep.mubr.bf16.mxu0 0
  %3252 = vmatmul.mubr.bf16.gmra.mrb[0].mxu0 %v2801
  %v3253 = vpop.f32.mrb[0].mxu0
  %v3254 = vadd.f32 %v2764, %v3253
  %v3255 = vpop.f32.mrb[0].mxu0
  %v3256 = vpop.f32.mrb[0].mxu0
  %v3257 = vadd.f32 %v2764, %v3256
  %v3258 = vpop.f32.mrb[0].mxu0
  %3259 = vmatprep.mubr.bf16.mxu0 0
  %3260 = vmatmul.mubr.bf16.gmra.mrb[0].mxu0 %v2804
  %v3261 = vpop.f32.mrb[0].mxu0
  %v3262 = vadd.f32 %v2764, %v3261
  %v3263 = vpop.f32.mrb[0].mxu0
  %v3264 = vpop.f32.mrb[0].mxu0
  %v3265 = vadd.f32 %v2764, %v3264
  %v3266 = vpop.f32.mrb[0].mxu0
  %3267 = vmatprep.mubr.bf16.mxu0 0
  %3268 = vmatmul.mubr.bf16.gmra.mrb[0].mxu0 %v2807
  %v3269 = vpop.f32.mrb[0].mxu0
  %v3270 = vadd.f32 %v2764, %v3269
  %v3271 = vpop.f32.mrb[0].mxu0
  %v3272 = vpop.f32.mrb[0].mxu0
  %v3273 = vadd.f32 %v2764, %v3272
  %v3274 = vpop.f32.mrb[0].mxu0
  %3275 = vmatprep.mubr.bf16.mxu0 0
  %3276 = vmatmul.mubr.bf16.gmra.mrb[0].mxu0 %v2810
  %v3277 = vpop.f32.mrb[0].mxu0
  %v3278 = vadd.f32 %v2764, %v3277
  %v3279 = vpop.f32.mrb[0].mxu0
  %v3280 = vpop.f32.mrb[0].mxu0
  %v3281 = vadd.f32 %v2764, %v3280
  %v3282 = vpop.f32.mrb[0].mxu0
  %3283 = vmatprep.mubr.bf16.mxu0 0
  %3284 = vmatmul.mubr.bf16.gmra.mrb[0].mxu0 %v2813
  %v3285 = vpop.f32.mrb[0].mxu0
  %v3286 = vadd.f32 %v2764, %v3285
  %v3287 = vpop.f32.mrb[0].mxu0
  %v3288 = vpop.f32.mrb[0].mxu0
  %v3289 = vadd.f32 %v2764, %v3288
  %v3290 = vpop.f32.mrb[0].mxu0
  %3291 = vmatprep.mubr.bf16.mxu0 0
  %3292 = vmatmul.mubr.bf16.gmra.mrb[0].mxu0 %v2816
  %v3293 = vpop.f32.mrb[0].mxu0
  %v3294 = vadd.f32 %v2764, %v3293
  %v3295 = vpop.f32.mrb[0].mxu0
  %v3296 = vpop.f32.mrb[0].mxu0
  %v3297 = vadd.f32 %v2764, %v3296
  %v3298 = vpop.f32.mrb[0].mxu0
  %3299 = vmatprep.mubr.bf16.mxu0 0
  %3300 = vmatmul.mubr.bf16.gmra.mrb[0].mxu0 %v2819
  %v3301 = vpop.f32.mrb[0].mxu0
  %v3302 = vadd.f32 %v2764, %v3301
  %v3303 = vpop.f32.mrb[0].mxu0
  %v3304 = vpop.f32.mrb[0].mxu0
  %v3305 = vadd.f32 %v2764, %v3304
  %v3306 = vpop.f32.mrb[0].mxu0
  %3307 = vmatprep.mubr.bf16.mxu0 0
  %3308 = vmatmul.mubr.bf16.gmra.mrb[0].mxu0 %v2822
  %v3309 = vpop.f32.mrb[0].mxu0
  %v3310 = vadd.f32 %v2764, %v3309
  %v3311 = vpop.f32.mrb[0].mxu0
  %v3312 = vpop.f32.mrb[0].mxu0
  %v3313 = vadd.f32 %v2764, %v3312
  %v3314 = vpop.f32.mrb[0].mxu0
  %3315 = vmatprep.mubr.bf16.mxu0 0
  %3316 = vmatmul.mubr.bf16.gmra.mrb[0].mxu0 %v2825
  %v3317 = vpop.f32.mrb[0].mxu0
  %v3318 = vadd.f32 %v2764, %v3317
  %v3319 = vpop.f32.mrb[0].mxu0
  %v3320 = vpop.f32.mrb[0].mxu0
  %v3321 = vadd.f32 %v2764, %v3320
  %v3322 = vpop.f32.mrb[0].mxu0
  %3323 = vmatprep.mubr.bf16.mxu0 0
  %3324 = vmatmul.mubr.bf16.gmra.mrb[0].mxu0 %v2828
  %v3325 = vpop.f32.mrb[0].mxu0
  %v3326 = vadd.f32 %v2764, %v3325
  %v3327 = vpop.f32.mrb[0].mxu0
  %v3328 = vpop.f32.mrb[0].mxu0
  %v3329 = vadd.f32 %v2764, %v3328
  %v3330 = vpop.f32.mrb[0].mxu0
  %3331 = vmatprep.mubr.bf16.mxu0 0
  %3332 = vmatmul.mubr.bf16.gmra.mrb[0].mxu0 %v2831
  %v3333 = vpop.f32.mrb[0].mxu0
  %v3334 = vadd.f32 %v2764, %v3333
  %v3335 = vpop.f32.mrb[0].mxu0
  %v3336 = vpop.f32.mrb[0].mxu0
  %v3337 = vadd.f32 %v2764, %v3336
  %v3338 = vpop.f32.mrb[0].mxu0
  %3339 = vmatprep.mubr.bf16.mxu0 0
  %3340 = vmatmul.mubr.bf16.gmra.mrb[0].mxu0 %v2834
  %v3341 = vpop.f32.mrb[0].mxu0
  %v3342 = vadd.f32 %v2764, %v3341
  %v3343 = vpop.f32.mrb[0].mxu0
  %v3344 = vpop.f32.mrb[0].mxu0
  %v3345 = vadd.f32 %v2764, %v3344
  %v3346 = vpop.f32.mrb[0].mxu0
  %3347 = vmatprep.mubr.bf16.mxu0 0
  %3348 = vmatmul.mubr.bf16.gmra.mrb[0].mxu0 %v2837
  %v3349 = vpop.f32.mrb[0].mxu0
  %v3350 = vadd.f32 %v2764, %v3349
  %v3351 = vpop.f32.mrb[0].mxu0
  %v3352 = vpop.f32.mrb[0].mxu0
  %v3353 = vadd.f32 %v2764, %v3352
  %v3354 = vpop.f32.mrb[0].mxu0
  %3355 = vmatprep.mubr.bf16.mxu0 0
  %3356 = vmatmul.mubr.bf16.gmra.mrb[0].mxu0 %v2840
  %v3357 = vpop.f32.mrb[0].mxu0
  %v3358 = vadd.f32 %v2764, %v3357
  %v3359 = vpop.f32.mrb[0].mxu0
  %v3360 = vpop.f32.mrb[0].mxu0
  %v3361 = vadd.f32 %v2764, %v3360
  %v3362 = vpop.f32.mrb[0].mxu0
  %3363 = vmatprep.mubr.bf16.mxu0 0
  %3364 = vmatmul.mubr.bf16.gmra.mrb[0].mxu0 %v2843
  %v3365 = vpop.f32.mrb[0].mxu0
  %v3366 = vadd.f32 %v2764, %v3365
  %v3367 = vpop.f32.mrb[0].mxu0
  %v3368 = vpop.f32.mrb[0].mxu0
  %v3369 = vadd.f32 %v2764, %v3368
  %v3370 = vpop.f32.mrb[0].mxu0
  %3371 = vmatprep.mubr.bf16.mxu0 0
  %3372 = vmatmul.mubr.bf16.gmra.mrb[0].mxu0 %v2846
  %v3373 = vpop.f32.mrb[0].mxu0
  %v3374 = vadd.f32 %v2764, %v3373
  %v3375 = vpop.f32.mrb[0].mxu0
  %v3376 = vpop.f32.mrb[0].mxu0
  %v3377 = vadd.f32 %v2764, %v3376
  %v3378 = vpop.f32.mrb[0].mxu0
  %3379 = vmatprep.mubr.bf16.mxu0 0
  %3380 = vmatmul.mubr.bf16.gmra.mrb[0].mxu0 %v2849
  %v3381 = vpop.f32.mrb[0].mxu0
  %v3382 = vadd.f32 %v2764, %v3381
  %v3383 = vpop.f32.mrb[0].mxu0
  %v3384 = vpop.f32.mrb[0].mxu0
  %v3385 = vadd.f32 %v2764, %v3384
  %v3386 = vpop.f32.mrb[0].mxu0
  %3387 = vmatprep.mubr.bf16.mxu0 0
  %3388 = vmatmul.mubr.bf16.gmra.mrb[0].mxu0 %v2852
  %v3389 = vpop.f32.mrb[0].mxu0
  %v3390 = vadd.f32 %v2764, %v3389
  %v3391 = vpop.f32.mrb[0].mxu0
  %v3392 = vpop.f32.mrb[0].mxu0
  %v3393 = vadd.f32 %v2764, %v3392
  %v3394 = vpop.f32.mrb[0].mxu0
  %3395 = vmatprep.mubr.bf16.mxu0 0
  %3396 = vmatmul.mubr.bf16.gmra.mrb[0].mxu0 %v2855
  %v3397 = vpop.f32.mrb[0].mxu0
  %v3398 = vadd.f32 %v2764, %v3397
  %v3399 = vpop.f32.mrb[0].mxu0
  %v3400 = vpop.f32.mrb[0].mxu0
  %v3401 = vadd.f32 %v2764, %v3400
  %v3402 = vpop.f32.mrb[0].mxu0
  %3403 = vmatprep.mubr.bf16.mxu0 0
  %3404 = vmatmul.mubr.bf16.gmra.mrb[0].mxu0 %v2858
  %v3405 = vpop.f32.mrb[0].mxu0
  %v3406 = vadd.f32 %v2764, %v3405
  %v3407 = vpop.f32.mrb[0].mxu0
  %v3408 = vpop.f32.mrb[0].mxu0
  %v3409 = vadd.f32 %v2764, %v3408
  %v3410 = vpop.f32.mrb[0].mxu0
  %3411 = vmatprep.mubr.bf16.mxu0 0
  %3412 = vmatmul.mubr.bf16.gmra.mrb[0].mxu0 %v2861
  %v3413 = vpop.f32.mrb[0].mxu0
  %v3414 = vadd.f32 %v2764, %v3413
  %v3415 = vpop.f32.mrb[0].mxu0
  %v3416 = vpop.f32.mrb[0].mxu0
  %v3417 = vadd.f32 %v2764, %v3416
  %v3418 = vpop.f32.mrb[0].mxu0
  %3419 = vmatprep.mubr.bf16.mxu0 0
  %3420 = vmatmul.mubr.bf16.gmra.mrb[0].mxu0 %v2864
  %v3421 = vpop.f32.mrb[0].mxu0
  %v3422 = vadd.f32 %v2764, %v3421
  %v3423 = vpop.f32.mrb[0].mxu0
  %v3424 = vpop.f32.mrb[0].mxu0
  %v3425 = vadd.f32 %v2764, %v3424
  %v3426 = vpop.f32.mrb[0].mxu0
  %3427 = vmatprep.mubr.bf16.mxu0 0
  %3428 = vmatmul.mubr.bf16.gmra.mrb[0].mxu0 %v2867
  %v3429 = vpop.f32.mrb[0].mxu0
  %v3430 = vadd.f32 %v2764, %v3429
  %v3431 = vpop.f32.mrb[0].mxu0
  %v3432 = vpop.f32.mrb[0].mxu0
  %v3433 = vadd.f32 %v2764, %v3432
  %v3434 = vpop.f32.mrb[0].mxu0
  %3435 = vmatprep.mubr.bf16.mxu0 0
  %3436 = vmatmul.mubr.bf16.gmra.mrb[0].mxu0 %v2870
  %v3437 = vpop.f32.mrb[0].mxu0
  %v3438 = vadd.f32 %v2764, %v3437
  %v3439 = vpop.f32.mrb[0].mxu0
  %v3440 = vpop.f32.mrb[0].mxu0
  %v3441 = vadd.f32 %v2764, %v3440
  %v3442 = vpop.f32.mrb[0].mxu0
  %3443 = vmatprep.mubr.bf16.mxu0 0
  %3444 = vmatmul.mubr.bf16.gmra.mrb[0].mxu0 %v2873
  %v3445 = vpop.f32.mrb[0].mxu0
  %v3446 = vadd.f32 %v2764, %v3445
  %v3447 = vpop.f32.mrb[0].mxu0
  %v3448 = vpop.f32.mrb[0].mxu0
  %v3449 = vadd.f32 %v2764, %v3448
  %v3450 = vpop.f32.mrb[0].mxu0
  %3451 = vmatprep.mubr.bf16.mxu0 0
  %3452 = vmatmul.mubr.bf16.gmra.mrb[0].mxu0 %v2876
  %v3453 = vpop.f32.mrb[0].mxu0
  %v3454 = vadd.f32 %v2764, %v3453
  %v3455 = vpop.f32.mrb[0].mxu0
  %v3456 = vpop.f32.mrb[0].mxu0
  %v3457 = vadd.f32 %v2764, %v3456
  %v3458 = vpop.f32.mrb[0].mxu0
  %3459 = vmatprep.mubr.bf16.mxu0 0
  %3460 = vmatmul.mubr.bf16.gmra.mrb[0].mxu0 %v2879
  %v3461 = vpop.f32.mrb[0].mxu0
  %v3462 = vadd.f32 %v2764, %v3461
  %v3463 = vpop.f32.mrb[0].mxu0
  %v3464 = vpop.f32.mrb[0].mxu0
  %v3465 = vadd.f32 %v2764, %v3464
  %v3466 = vpop.f32.mrb[0].mxu0
  %3467 = vmatprep.mubr.bf16.mxu0 0
  %3468 = vmatmul.mubr.bf16.gmra.mrb[0].mxu0 %v2882
  %v3469 = vpop.f32.mrb[0].mxu0
  %v3470 = vadd.f32 %v2764, %v3469
  %v3471 = vpop.f32.mrb[0].mxu0
  %v3472 = vpop.f32.mrb[0].mxu0
  %v3473 = vadd.f32 %v2764, %v3472
  %v3474 = vpop.f32.mrb[0].mxu0
  %3475 = vmatprep.mubr.bf16.mxu0 0
  %3476 = vmatmul.mubr.bf16.gmra.mrb[0].mxu0 %v2885
  %v3477 = vpop.f32.mrb[0].mxu0
  %v3478 = vadd.f32 %v2764, %v3477
  %v3479 = vpop.f32.mrb[0].mxu0
  %v3480 = vpop.f32.mrb[0].mxu0
  %v3481 = vadd.f32 %v2764, %v3480
  %v3482 = vpop.f32.mrb[0].mxu0
  %3483 = vmatprep.mubr.bf16.mxu0 0
  %3484 = vmatmul.mubr.bf16.gmra.mrb[0].mxu0 %v2888
  %v3485 = vpop.f32.mrb[0].mxu0
  %v3486 = vadd.f32 %v2764, %v3485
  %v3487 = vpop.f32.mrb[0].mxu0
  %v3488 = vpop.f32.mrb[0].mxu0
  %v3489 = vadd.f32 %v2764, %v3488
  %v3490 = vpop.f32.mrb[0].mxu0
  %3491 = vmatprep.mubr.bf16.mxu0 0
  %3492 = vmatmul.mubr.bf16.gmra.mrb[0].mxu0 %v2891
  %v3493 = vpop.f32.mrb[0].mxu0
  %v3494 = vadd.f32 %v2764, %v3493
  %v3495 = vpop.f32.mrb[0].mxu0
  %v3496 = vpop.f32.mrb[0].mxu0
  %v3497 = vadd.f32 %v2764, %v3496
  %v3498 = vpop.f32.mrb[0].mxu0
  %3499 = vmatprep.mubr.bf16.mxu0 0
  %3500 = vmatmul.mubr.bf16.gmra.mrb[0].mxu0 %v2894
  %v3501 = vpop.f32.mrb[0].mxu0
  %v3502 = vadd.f32 %v2764, %v3501
  %v3503 = vpop.f32.mrb[0].mxu0
  %v3504 = vpop.f32.mrb[0].mxu0
  %v3505 = vadd.f32 %v2764, %v3504
  %v3506 = vpop.f32.mrb[0].mxu0
  %3507 = vmatprep.mubr.bf16.mxu0 0
  %3508 = vmatmul.mubr.bf16.gmra.mrb[0].mxu0 %v2897
  %v3509 = vpop.f32.mrb[0].mxu0
  %v3510 = vadd.f32 %v2764, %v3509
  %v3511 = vpop.f32.mrb[0].mxu0
  %v3512 = vpop.f32.mrb[0].mxu0
  %v3513 = vadd.f32 %v2764, %v3512
  %v3514 = vpop.f32.mrb[0].mxu0
  %3515 = vmatprep.mubr.bf16.mxu0 0
  %3516 = vmatmul.mubr.bf16.gmra.mrb[0].mxu0 %v2900
  %v3517 = vpop.f32.mrb[0].mxu0
  %v3518 = vadd.f32 %v2764, %v3517
  %v3519 = vpop.f32.mrb[0].mxu0
  %v3520 = vpop.f32.mrb[0].mxu0
  %v3521 = vadd.f32 %v2764, %v3520
  %v3522 = vpop.f32.mrb[0].mxu0
  %3523 = vmatprep.mubr.bf16.mxu0 0
  %3524 = vmatmul.mubr.bf16.gmra.mrb[0].mxu0 %v2903
  %v3525 = vpop.f32.mrb[0].mxu0
  %v3526 = vadd.f32 %v2764, %v3525
  %v3527 = vpop.f32.mrb[0].mxu0
  %v3528 = vpop.f32.mrb[0].mxu0
  %v3529 = vadd.f32 %v2764, %v3528
  %v3530 = vpop.f32.mrb[0].mxu0
  %3531 = vmatprep.mubr.bf16.mxu0 0
  %3532 = vmatmul.mubr.bf16.gmra.mrb[0].mxu0 %v2906
  %v3533 = vpop.f32.mrb[0].mxu0
  %v3534 = vadd.f32 %v2764, %v3533
  %v3535 = vpop.f32.mrb[0].mxu0
  %v3536 = vpop.f32.mrb[0].mxu0
  %v3537 = vadd.f32 %v2764, %v3536
  %v3538 = vpop.f32.mrb[0].mxu0
  %3539 = vmatprep.mubr.bf16.mxu0 0
  %3540 = vmatmul.mubr.bf16.gmra.mrb[0].mxu0 %v2909
  %v3541 = vpop.f32.mrb[0].mxu0
  %v3542 = vadd.f32 %v2764, %v3541
  %v3543 = vpop.f32.mrb[0].mxu0
  %v3544 = vpop.f32.mrb[0].mxu0
  %v3545 = vadd.f32 %v2764, %v3544
  %v3546 = vpop.f32.mrb[0].mxu0
  %3547 = vmatprep.mubr.bf16.mxu0 0
  %3548 = vmatmul.mubr.bf16.gmra.mrb[0].mxu0 %v2912
  %v3549 = vpop.f32.mrb[0].mxu0
  %v3550 = vadd.f32 %v2764, %v3549
  %v3551 = vpop.f32.mrb[0].mxu0
  %v3552 = vpop.f32.mrb[0].mxu0
  %v3553 = vadd.f32 %v2764, %v3552
  %v3554 = vpop.f32.mrb[0].mxu0
  %3555 = vmatprep.mubr.bf16.mxu0 0
  %3556 = vmatmul.mubr.bf16.gmra.mrb[0].mxu0 %v2915
  %v3557 = vpop.f32.mrb[0].mxu0
  %v3558 = vadd.f32 %v2764, %v3557
  %v3559 = vpop.f32.mrb[0].mxu0
  %v3560 = vpop.f32.mrb[0].mxu0
  %v3561 = vadd.f32 %v2764, %v3560
  %v3562 = vpop.f32.mrb[0].mxu0
  %3563 = vmatprep.mubr.bf16.mxu0 0
  %3564 = vmatmul.mubr.bf16.gmra.mrb[0].mxu0 %v2918
  %v3565 = vpop.f32.mrb[0].mxu0
  %v3566 = vadd.f32 %v2764, %v3565
  %v3567 = vpop.f32.mrb[0].mxu0
  %v3568 = vpop.f32.mrb[0].mxu0
  %v3569 = vadd.f32 %v2764, %v3568
  %v3570 = vpop.f32.mrb[0].mxu0
  %3571 = vmatprep.mubr.bf16.mxu0 0
  %3572 = vmatmul.mubr.bf16.gmra.mrb[0].mxu0 %v2921
  %v3573 = vpop.f32.mrb[0].mxu0
  %v3574 = vadd.f32 %v2764, %v3573
  %v3575 = vpop.f32.mrb[0].mxu0
  %v3576 = vpop.f32.mrb[0].mxu0
  %v3577 = vadd.f32 %v2764, %v3576
  %v3578 = vpop.f32.mrb[0].mxu0
  %3579 = vmatprep.mubr.bf16.mxu0 0
  %3580 = vmatmul.mubr.bf16.gmra.mrb[0].mxu0 %v2924
  %v3581 = vpop.f32.mrb[0].mxu0
  %v3582 = vadd.f32 %v2764, %v3581
  %v3583 = vpop.f32.mrb[0].mxu0
  %v3584 = vpop.f32.mrb[0].mxu0
  %v3585 = vadd.f32 %v2764, %v3584
  %v3586 = vpop.f32.mrb[0].mxu0
  %3587 = vmatprep.mubr.bf16.mxu0 0
  %3588 = vmatmul.mubr.bf16.gmra.mrb[0].mxu0 %v2927
  %v3589 = vpop.f32.mrb[0].mxu0
  %v3590 = vadd.f32 %v2764, %v3589
  %v3591 = vpop.f32.mrb[0].mxu0
  %v3592 = vpop.f32.mrb[0].mxu0
  %v3593 = vadd.f32 %v2764, %v3592
  %v3594 = vpop.f32.mrb[0].mxu0
  %3595 = vmatprep.mubr.bf16.mxu0 0
  %3596 = vmatmul.mubr.bf16.gmra.mrb[0].mxu0 %v2930
  %v3597 = vpop.f32.mrb[0].mxu0
  %v3598 = vadd.f32 %v2764, %v3597
  %v3599 = vpop.f32.mrb[0].mxu0
  %v3600 = vpop.f32.mrb[0].mxu0
  %v3601 = vadd.f32 %v2764, %v3600
  %v3602 = vpop.f32.mrb[0].mxu0
  %3603 = vmatprep.mubr.bf16.mxu0 0
  %3604 = vmatmul.mubr.bf16.gmra.mrb[0].mxu0 %v2933
  %v3605 = vpop.f32.mrb[0].mxu0
  %v3606 = vadd.f32 %v2764, %v3605
  %v3607 = vpop.f32.mrb[0].mxu0
  %v3608 = vpop.f32.mrb[0].mxu0
  %v3609 = vadd.f32 %v2764, %v3608
  %v3610 = vpop.f32.mrb[0].mxu0
  %3611 = vmatprep.mubr.bf16.mxu0 0
  %3612 = vmatmul.mubr.bf16.gmra.mrb[0].mxu0 %v2936
  %v3613 = vpop.f32.mrb[0].mxu0
  %v3614 = vadd.f32 %v2764, %v3613
  %v3615 = vpop.f32.mrb[0].mxu0
  %v3616 = vpop.f32.mrb[0].mxu0
  %v3617 = vadd.f32 %v2764, %v3616
  %v3618 = vpop.f32.mrb[0].mxu0
  %3619 = vmatprep.mubr.bf16.mxu0 0
  %3620 = vmatmul.mubr.bf16.gmra.mrb[0].mxu0 %v2939
  %v3621 = vpop.f32.mrb[0].mxu0
  %v3622 = vadd.f32 %v2764, %v3621
  %v3623 = vpop.f32.mrb[0].mxu0
  %v3624 = vpop.f32.mrb[0].mxu0
  %v3625 = vadd.f32 %v2764, %v3624
  %v3626 = vpop.f32.mrb[0].mxu0
  %3627 = vmatprep.mubr.bf16.mxu0 0
  %3628 = vmatmul.mubr.bf16.gmra.mrb[0].mxu0 %v2942
  %v3629 = vpop.f32.mrb[0].mxu0
  %v3630 = vadd.f32 %v2764, %v3629
  %v3631 = vpop.f32.mrb[0].mxu0
  %v3632 = vpop.f32.mrb[0].mxu0
  %v3633 = vadd.f32 %v2764, %v3632
  %v3634 = vpop.f32.mrb[0].mxu0
  %3635 = vmatprep.mubr.bf16.mxu0 0
  %3636 = vmatmul.mubr.bf16.gmra.mrb[0].mxu0 %v2945
  %v3637 = vpop.f32.mrb[0].mxu0
  %v3638 = vadd.f32 %v2764, %v3637
  %v3639 = vpop.f32.mrb[0].mxu0
  %v3640 = vpop.f32.mrb[0].mxu0
  %v3641 = vadd.f32 %v2764, %v3640
  %v3642 = vpop.f32.mrb[0].mxu0
  %3643 = vmatprep.mubr.bf16.mxu0 0
  %3644 = vmatmul.mubr.bf16.gmra.mrb[0].mxu0 %v2948
  %v3645 = vpop.f32.mrb[0].mxu0
  %v3646 = vadd.f32 %v2764, %v3645
  %v3647 = vpop.f32.mrb[0].mxu0
  %v3648 = vpop.f32.mrb[0].mxu0
  %v3649 = vadd.f32 %v2764, %v3648
  %v3650 = vpop.f32.mrb[0].mxu0
  %3651 = vmatprep.mubr.bf16.mxu0 0
  %3652 = vmatmul.mubr.bf16.gmra.mrb[0].mxu0 %v2951
  %v3653 = vpop.f32.mrb[0].mxu0
  %v3654 = vadd.f32 %v2764, %v3653
  %v3655 = vpop.f32.mrb[0].mxu0
  %v3656 = vpop.f32.mrb[0].mxu0
  %v3657 = vadd.f32 %v2764, %v3656
  %v3658 = vpop.f32.mrb[0].mxu0
  %3659 = vmatprep.mubr.bf16.mxu0 0
  %3660 = vmatmul.mubr.bf16.gmra.mrb[0].mxu0 %v2954
  %v3661 = vpop.f32.mrb[0].mxu0
  %v3662 = vadd.f32 %v2764, %v3661
  %v3663 = vpop.f32.mrb[0].mxu0
  %v3664 = vpop.f32.mrb[0].mxu0
  %v3665 = vadd.f32 %v2764, %v3664
  %v3666 = vpop.f32.mrb[0].mxu0
  %3667 = vmatprep.mubr.bf16.mxu0 0
  %3668 = vmatmul.mubr.bf16.gmra.mrb[0].mxu0 %v2957
  %v3669 = vpop.f32.mrb[0].mxu0
  %v3670 = vadd.f32 %v2764, %v3669
  %v3671 = vpop.f32.mrb[0].mxu0
  %v3672 = vpop.f32.mrb[0].mxu0
  %v3673 = vadd.f32 %v2764, %v3672
  %v3674 = vpop.f32.mrb[0].mxu0
  %3675 = vmatprep.mubr.bf16.mxu0 0
  %3676 = vmatmul.mubr.bf16.gmra.mrb[0].mxu0 %v2960
  %v3677 = vpop.f32.mrb[0].mxu0
  %v3678 = vadd.f32 %v2764, %v3677
  %v3679 = vpop.f32.mrb[0].mxu0
  %v3680 = vpop.f32.mrb[0].mxu0
  %v3681 = vadd.f32 %v2764, %v3680
  %v3682 = vpop.f32.mrb[0].mxu0
  %3683 = vmatprep.mubr.bf16.mxu0 0
  %3684 = vmatmul.mubr.bf16.gmra.mrb[0].mxu0 %v2963
  %v3685 = vpop.f32.mrb[0].mxu0
  %v3686 = vadd.f32 %v2764, %v3685
  %v3687 = vpop.f32.mrb[0].mxu0
  %v3688 = vpop.f32.mrb[0].mxu0
  %v3689 = vadd.f32 %v2764, %v3688
  %v3690 = vpop.f32.mrb[0].mxu0
  %3691 = vmatprep.mubr.bf16.mxu0 0
  %3692 = vmatmul.mubr.bf16.gmra.mrb[0].mxu0 %v2966
  %v3693 = vpop.f32.mrb[0].mxu0
  %v3694 = vadd.f32 %v2764, %v3693
  %v3695 = vpop.f32.mrb[0].mxu0
  %v3696 = vpop.f32.mrb[0].mxu0
  %v3697 = vadd.f32 %v2764, %v3696
  %v3698 = vpop.f32.mrb[0].mxu0
  %3699 = vmatprep.mubr.bf16.mxu0 0
  %3700 = vmatmul.mubr.bf16.gmra.mrb[0].mxu0 %v2969
  %v3701 = vpop.f32.mrb[0].mxu0
  %v3702 = vadd.f32 %v2764, %v3701
  %v3703 = vpop.f32.mrb[0].mxu0
  %v3704 = vpop.f32.mrb[0].mxu0
  %v3705 = vadd.f32 %v2764, %v3704
  %v3706 = vpop.f32.mrb[0].mxu0
  %3707 = vmatprep.mubr.bf16.mxu0 0
  %3708 = vmatmul.mubr.bf16.gmra.mrb[0].mxu0 %v2972
  %v3709 = vpop.f32.mrb[0].mxu0
  %v3710 = vadd.f32 %v2764, %v3709
  %v3711 = vpop.f32.mrb[0].mxu0
  %v3712 = vpop.f32.mrb[0].mxu0
  %v3713 = vadd.f32 %v2764, %v3712
  %v3714 = vpop.f32.mrb[0].mxu0
  %3715 = vmatprep.mubr.bf16.mxu0 0
  %3716 = vmatmul.mubr.bf16.gmra.mrb[0].mxu0 %v2975
  %v3717 = vpop.f32.mrb[0].mxu0
  %v3718 = vadd.f32 %v2764, %v3717
  %v3719 = vpop.f32.mrb[0].mxu0
  %v3720 = vpop.f32.mrb[0].mxu0
  %v3721 = vadd.f32 %v2764, %v3720
  %v3722 = vpop.f32.mrb[0].mxu0
  %3723 = vmatprep.mubr.bf16.mxu0 0
  %3724 = vmatmul.mubr.bf16.gmra.mrb[0].mxu0 %v2978
  %v3725 = vpop.f32.mrb[0].mxu0
  %v3726 = vadd.f32 %v2764, %v3725
  %v3727 = vpop.f32.mrb[0].mxu0
  %v3728 = vpop.f32.mrb[0].mxu0
  %v3729 = vadd.f32 %v2764, %v3728
  %v3730 = vpop.f32.mrb[0].mxu0
  %3731 = vmatprep.mubr.bf16.mxu0 0
  %3732 = vmatmul.mubr.bf16.gmra.mrb[0].mxu0 %v2981
  %v3733 = vpop.f32.mrb[0].mxu0
  %v3734 = vadd.f32 %v2764, %v3733
  %v3735 = vpop.f32.mrb[0].mxu0
  %v3736 = vpop.f32.mrb[0].mxu0
  %v3737 = vadd.f32 %v2764, %v3736
  %v3738 = vpop.f32.mrb[0].mxu0
  %3739 = vmatprep.mubr.bf16.mxu0 0
  %3740 = vmatmul.mubr.bf16.gmra.mrb[0].mxu0 %v2984
  %v3741 = vpop.f32.mrb[0].mxu0
  %v3742 = vadd.f32 %v2764, %v3741
  %v3743 = vpop.f32.mrb[0].mxu0
  %v3744 = vpop.f32.mrb[0].mxu0
  %v3745 = vadd.f32 %v2764, %v3744
  %v3746 = vpop.f32.mrb[0].mxu0
  %3747 = vmatprep.mubr.bf16.mxu0 0
  %3748 = vmatmul.mubr.bf16.gmra.mrb[0].mxu0 %v2987
  %v3749 = vpop.f32.mrb[0].mxu0
  %v3750 = vadd.f32 %v2764, %v3749
  %v3751 = vpop.f32.mrb[0].mxu0
  %v3752 = vpop.f32.mrb[0].mxu0
  %v3753 = vadd.f32 %v2764, %v3752
  %v3754 = vpop.f32.mrb[0].mxu0
  %3755 = vmatprep.mubr.bf16.mxu0 0
  %3756 = vmatmul.mubr.bf16.gmra.mrb[0].mxu0 %v2990
  %v3757 = vpop.f32.mrb[0].mxu0
  %v3758 = vadd.f32 %v2764, %v3757
  %v3759 = vpop.f32.mrb[0].mxu0
  %v3760 = vpop.f32.mrb[0].mxu0
  %v3761 = vadd.f32 %v2764, %v3760
  %v3762 = vpop.f32.mrb[0].mxu0
  %3763 = vmatprep.mubr.bf16.mxu0 0
  %3764 = vmatmul.mubr.bf16.gmra.mrb[0].mxu0 %v2993
  %v3765 = vpop.f32.mrb[0].mxu0
  %v3766 = vadd.f32 %v2764, %v3765
  %v3767 = vpop.f32.mrb[0].mxu0
  %v3768 = vpop.f32.mrb[0].mxu0
  %v3769 = vadd.f32 %v2764, %v3768
  %v3770 = vpop.f32.mrb[0].mxu0
  %3771 = vmatprep.mubr.bf16.mxu0 0
  %3772 = vmatmul.mubr.bf16.gmra.mrb[0].mxu0 %v2996
  %v3773 = vpop.f32.mrb[0].mxu0
  %v3774 = vadd.f32 %v2764, %v3773
  %v3775 = vpop.f32.mrb[0].mxu0
  %v3776 = vpop.f32.mrb[0].mxu0
  %v3777 = vadd.f32 %v2764, %v3776
  %v3778 = vpop.f32.mrb[0].mxu0
  %3779 = vmatprep.mubr.bf16.mxu0 0
  %3780 = vmatmul.mubr.bf16.gmra.mrb[0].mxu0 %v2999
  %v3781 = vpop.f32.mrb[0].mxu0
  %v3782 = vadd.f32 %v2764, %v3781
  %v3783 = vpop.f32.mrb[0].mxu0
  %v3784 = vpop.f32.mrb[0].mxu0
  %v3785 = vadd.f32 %v2764, %v3784
  %v3786 = vpop.f32.mrb[0].mxu0
  %3787 = vmatprep.mubr.bf16.mxu0 0
  %3788 = vmatmul.mubr.bf16.gmra.mrb[0].mxu0 %v3002
  %v3789 = vpop.f32.mrb[0].mxu0
  %v3790 = vadd.f32 %v2764, %v3789
  %v3791 = vpop.f32.mrb[0].mxu0
  %v3792 = vpop.f32.mrb[0].mxu0
  %v3793 = vadd.f32 %v2764, %v3792
  %v3794 = vpop.f32.mrb[0].mxu0
  %3795 = vmatprep.mubr.bf16.mxu0 0
  %3796 = vmatmul.mubr.bf16.gmra.mrb[0].mxu0 %v3005
  %v3797 = vpop.f32.mrb[0].mxu0
  %v3798 = vadd.f32 %v2764, %v3797
  %v3799 = vpop.f32.mrb[0].mxu0
  %v3800 = vpop.f32.mrb[0].mxu0
  %v3801 = vadd.f32 %v2764, %v3800
  %v3802 = vpop.f32.mrb[0].mxu0
  %3803 = vmatprep.mubr.bf16.mxu0 0
  %3804 = vmatmul.mubr.bf16.gmra.mrb[0].mxu0 %v3008
  %v3805 = vpop.f32.mrb[0].mxu0
  %v3806 = vadd.f32 %v2764, %v3805
  %v3807 = vpop.f32.mrb[0].mxu0
  %v3808 = vpop.f32.mrb[0].mxu0
  %v3809 = vadd.f32 %v2764, %v3808
  %v3810 = vpop.f32.mrb[0].mxu0
  %3811 = vmatprep.mubr.bf16.mxu0 0
  %3812 = vmatmul.mubr.bf16.gmra.mrb[0].mxu0 %v3011
  %v3813 = vpop.f32.mrb[0].mxu0
  %v3814 = vadd.f32 %v2764, %v3813
  %v3815 = vpop.f32.mrb[0].mxu0
  %v3816 = vpop.f32.mrb[0].mxu0
  %v3817 = vadd.f32 %v2764, %v3816
  %v3818 = vpop.f32.mrb[0].mxu0
  %3819 = vmatprep.mubr.bf16.mxu0 0
  %3820 = vmatmul.mubr.bf16.gmra.mrb[0].mxu0 %v3014
  %v3821 = vpop.f32.mrb[0].mxu0
  %v3822 = vadd.f32 %v2764, %v3821
  %v3823 = vpop.f32.mrb[0].mxu0
  %v3824 = vpop.f32.mrb[0].mxu0
  %v3825 = vadd.f32 %v2764, %v3824
  %v3826 = vpop.f32.mrb[0].mxu0
  %3827 = vmatprep.mubr.bf16.mxu0 0
  %3828 = vmatmul.mubr.bf16.gmra.mrb[0].mxu0 %v3017
  %v3829 = vpop.f32.mrb[0].mxu0
  %v3830 = vadd.f32 %v2764, %v3829
  %v3831 = vpop.f32.mrb[0].mxu0
  %v3832 = vpop.f32.mrb[0].mxu0
  %v3833 = vadd.f32 %v2764, %v3832
  %v3834 = vpop.f32.mrb[0].mxu0
  %3835 = vmatprep.mubr.bf16.mxu0 0
  %3836 = vmatmul.mubr.bf16.gmra.mrb[0].mxu0 %v3020
  %v3837 = vpop.f32.mrb[0].mxu0
  %v3838 = vadd.f32 %v2764, %v3837
  %v3839 = vpop.f32.mrb[0].mxu0
  %v3840 = vpop.f32.mrb[0].mxu0
  %v3841 = vadd.f32 %v2764, %v3840
  %v3842 = vpop.f32.mrb[0].mxu0
  %3843 = vmatprep.mubr.bf16.mxu0 0
  %3844 = vmatmul.mubr.bf16.gmra.mrb[0].mxu0 %v3023
  %v3845 = vpop.f32.mrb[0].mxu0
  %v3846 = vadd.f32 %v2764, %v3845
  %v3847 = vpop.f32.mrb[0].mxu0
  %v3848 = vpop.f32.mrb[0].mxu0
  %v3849 = vadd.f32 %v2764, %v3848
  %v3850 = vpop.f32.mrb[0].mxu0
  %3851 = vmatprep.mubr.bf16.mxu0 0
  %3852 = vmatmul.mubr.bf16.gmra.mrb[0].mxu0 %v3026
  %v3853 = vpop.f32.mrb[0].mxu0
  %v3854 = vadd.f32 %v2764, %v3853
  %v3855 = vpop.f32.mrb[0].mxu0
  %v3856 = vpop.f32.mrb[0].mxu0
  %v3857 = vadd.f32 %v2764, %v3856
  %v3858 = vpop.f32.mrb[0].mxu0
  %3859 = vmatprep.mubr.bf16.mxu0 0
  %3860 = vmatmul.mubr.bf16.gmra.mrb[0].mxu0 %v3029
  %v3861 = vpop.f32.mrb[0].mxu0
  %v3862 = vadd.f32 %v2764, %v3861
  %v3863 = vpop.f32.mrb[0].mxu0
  %v3864 = vpop.f32.mrb[0].mxu0
  %v3865 = vadd.f32 %v2764, %v3864
  %v3866 = vpop.f32.mrb[0].mxu0
  %3867 = vmatprep.mubr.bf16.mxu0 0
  %3868 = vmatmul.mubr.bf16.gmra.mrb[0].mxu0 %v3032
  %v3869 = vpop.f32.mrb[0].mxu0
  %v3870 = vadd.f32 %v2764, %v3869
  %v3871 = vpop.f32.mrb[0].mxu0
  %v3872 = vpop.f32.mrb[0].mxu0
  %v3873 = vadd.f32 %v2764, %v3872
  %v3874 = vpop.f32.mrb[0].mxu0
  %3875 = vmatprep.mubr.bf16.mxu0 0
  %3876 = vmatmul.mubr.bf16.gmra.mrb[0].mxu0 %v3035
  %v3877 = vpop.f32.mrb[0].mxu0
  %v3878 = vadd.f32 %v2764, %v3877
  %v3879 = vpop.f32.mrb[0].mxu0
  %v3880 = vpop.f32.mrb[0].mxu0
  %v3881 = vadd.f32 %v2764, %v3880
  %v3882 = vpop.f32.mrb[0].mxu0
  %3883 = vmatprep.mubr.bf16.mxu0 0
  %3884 = vmatmul.mubr.bf16.gmra.mrb[0].mxu0 %v3038
  %v3885 = vpop.f32.mrb[0].mxu0
  %v3886 = vadd.f32 %v2764, %v3885
  %v3887 = vpop.f32.mrb[0].mxu0
  %v3888 = vpop.f32.mrb[0].mxu0
  %v3889 = vadd.f32 %v2764, %v3888
  %v3890 = vpop.f32.mrb[0].mxu0
  %3891 = vmatprep.mubr.bf16.mxu0 0
  %3892 = vmatmul.mubr.bf16.gmra.mrb[0].mxu0 %v3041
  %v3893 = vpop.f32.mrb[0].mxu0
  %v3894 = vadd.f32 %v2764, %v3893
  %v3895 = vpop.f32.mrb[0].mxu0
  %v3896 = vpop.f32.mrb[0].mxu0
  %v3897 = vadd.f32 %v2764, %v3896
  %v3898 = vpop.f32.mrb[0].mxu0
  %3899 = vmatprep.mubr.bf16.mxu0 0
  %3900 = vmatmul.mubr.bf16.gmra.mrb[0].mxu0 %v3044
  %v3901 = vpop.f32.mrb[0].mxu0
  %v3902 = vadd.f32 %v2764, %v3901
  %v3903 = vpop.f32.mrb[0].mxu0
  %v3904 = vpop.f32.mrb[0].mxu0
  %v3905 = vadd.f32 %v2764, %v3904
  %v3906 = vpop.f32.mrb[0].mxu0
  %3907 = vmatprep.mubr.bf16.mxu0 0
  %3908 = vmatmul.mubr.bf16.gmra.mrb[0].mxu0 %v3047
  %v3909 = vpop.f32.mrb[0].mxu0
  %v3910 = vadd.f32 %v2764, %v3909
  %v3911 = vpop.f32.mrb[0].mxu0
  %v3912 = vpop.f32.mrb[0].mxu0
  %v3913 = vadd.f32 %v2764, %v3912
  %v3914 = vpop.f32.mrb[0].mxu0
  %3915 = vmatprep.mubr.bf16.mxu0 0
  %3916 = vmatmul.mubr.bf16.gmra.mrb[0].mxu0 %v3050
  %v3917 = vpop.f32.mrb[0].mxu0
  %v3918 = vadd.f32 %v2764, %v3917
  %v3919 = vpop.f32.mrb[0].mxu0
  %v3920 = vpop.f32.mrb[0].mxu0
  %v3921 = vadd.f32 %v2764, %v3920
  %v3922 = vpop.f32.mrb[0].mxu0
  %3923 = vmatprep.mubr.bf16.mxu0 0
  %3924 = vmatmul.mubr.bf16.gmra.mrb[0].mxu0 %v3053
  %v3925 = vpop.f32.mrb[0].mxu0
  %v3926 = vadd.f32 %v2764, %v3925
  %v3927 = vpop.f32.mrb[0].mxu0
  %v3928 = vpop.f32.mrb[0].mxu0
  %v3929 = vadd.f32 %v2764, %v3928
  %v3930 = vpop.f32.mrb[0].mxu0
  %3931 = vmatprep.mubr.bf16.mxu0 0
  %3932 = vmatmul.mubr.bf16.gmra.mrb[0].mxu0 %v3056
  %v3933 = vpop.f32.mrb[0].mxu0
  %v3934 = vadd.f32 %v2764, %v3933
  %v3935 = vpop.f32.mrb[0].mxu0
  %v3936 = vpop.f32.mrb[0].mxu0
  %v3937 = vadd.f32 %v2764, %v3936
  %v3938 = vpop.f32.mrb[0].mxu0
  %3939 = vmatprep.mubr.bf16.mxu0 0
  %3940 = vmatmul.mubr.bf16.gmra.mrb[0].mxu0 %v3059
  %v3941 = vpop.f32.mrb[0].mxu0
  %v3942 = vadd.f32 %v2764, %v3941
  %v3943 = vpop.f32.mrb[0].mxu0
  %v3944 = vpop.f32.mrb[0].mxu0
  %v3945 = vadd.f32 %v2764, %v3944
  %v3946 = vpop.f32.mrb[0].mxu0
  %3947 = vmatprep.mubr.bf16.mxu0 0
  %3948 = vmatmul.mubr.bf16.gmra.mrb[0].mxu0 %v3062
  %v3949 = vpop.f32.mrb[0].mxu0
  %v3950 = vadd.f32 %v2764, %v3949
  %v3951 = vpop.f32.mrb[0].mxu0
  %v3952 = vpop.f32.mrb[0].mxu0
  %v3953 = vadd.f32 %v2764, %v3952
  %v3954 = vpop.f32.mrb[0].mxu0
  %3955 = vmatprep.mubr.bf16.mxu0 0
  %3956 = vmatmul.mubr.bf16.gmra.mrb[0].mxu0 %v3065
  %v3957 = vpop.f32.mrb[0].mxu0
  %v3958 = vadd.f32 %v2764, %v3957
  %v3959 = vpop.f32.mrb[0].mxu0
  %v3960 = vpop.f32.mrb[0].mxu0
  %v3961 = vadd.f32 %v2764, %v3960
  %v3962 = vpop.f32.mrb[0].mxu0
  %3963 = vmatprep.mubr.bf16.mxu0 0
  %3964 = vmatmul.mubr.bf16.gmra.mrb[0].mxu0 %v3068
  %v3965 = vpop.f32.mrb[0].mxu0
  %v3966 = vadd.f32 %v2764, %v3965
  %v3967 = vpop.f32.mrb[0].mxu0
  %v3968 = vpop.f32.mrb[0].mxu0
  %v3969 = vadd.f32 %v2764, %v3968
  %v3970 = vpop.f32.mrb[0].mxu0
  %3971 = vmatprep.mubr.bf16.mxu0 0
  %3972 = vmatmul.mubr.bf16.gmra.mrb[0].mxu0 %v3071
  %v3973 = vpop.f32.mrb[0].mxu0
  %v3974 = vadd.f32 %v2764, %v3973
  %v3975 = vpop.f32.mrb[0].mxu0
  %v3976 = vpop.f32.mrb[0].mxu0
  %v3977 = vadd.f32 %v2764, %v3976
  %v3978 = vpop.f32.mrb[0].mxu0
  %3979 = vmatprep.mubr.bf16.mxu0 0
  %3980 = vmatmul.mubr.bf16.gmra.mrb[0].mxu0 %v3074
  %v3981 = vpop.f32.mrb[0].mxu0
  %v3982 = vadd.f32 %v2764, %v3981
  %v3983 = vpop.f32.mrb[0].mxu0
  %v3984 = vpop.f32.mrb[0].mxu0
  %v3985 = vadd.f32 %v2764, %v3984
  %v3986 = vpop.f32.mrb[0].mxu0
  %3987 = vmatprep.mubr.bf16.mxu0 0
  %3988 = vmatmul.mubr.bf16.gmra.mrb[0].mxu0 %v3077
  %v3989 = vpop.f32.mrb[0].mxu0
  %v3990 = vadd.f32 %v2764, %v3989
  %v3991 = vpop.f32.mrb[0].mxu0
  %v3992 = vpop.f32.mrb[0].mxu0
  %v3993 = vadd.f32 %v2764, %v3992
  %v3994 = vpop.f32.mrb[0].mxu0
  %3995 = vmatprep.mubr.bf16.mxu0 0
  %3996 = vmatmul.mubr.bf16.gmra.mrb[0].mxu0 %v3080
  %v3997 = vpop.f32.mrb[0].mxu0
  %v3998 = vadd.f32 %v2764, %v3997
  %v3999 = vpop.f32.mrb[0].mxu0
  %v4000 = vpop.f32.mrb[0].mxu0
  %v4001 = vadd.f32 %v2764, %v4000
  %v4002 = vpop.f32.mrb[0].mxu0
  %4003 = vmatprep.mubr.bf16.mxu0 0
  %4004 = vmatmul.mubr.bf16.gmra.mrb[0].mxu0 %v3083
  %v4005 = vpop.f32.mrb[0].mxu0
  %v4006 = vadd.f32 %v2764, %v4005
  %v4007 = vpop.f32.mrb[0].mxu0
  %v4008 = vpop.f32.mrb[0].mxu0
  %v4009 = vadd.f32 %v2764, %v4008
  %v4010 = vpop.f32.mrb[0].mxu0
  %4011 = vmatprep.mubr.bf16.mxu0 0
  %4012 = vmatmul.mubr.bf16.gmra.mrb[0].mxu0 %v3086
  %v4013 = vpop.f32.mrb[0].mxu0
  %v4014 = vadd.f32 %v2764, %v4013
  %v4015 = vpop.f32.mrb[0].mxu0
  %v4016 = vpop.f32.mrb[0].mxu0
  %v4017 = vadd.f32 %v2764, %v4016
  %v4018 = vpop.f32.mrb[0].mxu0
  %4019 = vmatprep.mubr.bf16.mxu0 0
  %4020 = vmatmul.mubr.bf16.gmra.mrb[0].mxu0 %v3089
  %v4021 = vpop.f32.mrb[0].mxu0
  %v4022 = vadd.f32 %v2764, %v4021
  %v4023 = vpop.f32.mrb[0].mxu0
  %v4024 = vpop.f32.mrb[0].mxu0
  %v4025 = vadd.f32 %v2764, %v4024
  %v4026 = vpop.f32.mrb[0].mxu0
  %4027 = vmatprep.mubr.bf16.mxu0 0
  %4028 = vmatmul.mubr.bf16.gmra.mrb[0].mxu0 %v3092
  %v4029 = vpop.f32.mrb[0].mxu0
  %v4030 = vadd.f32 %v2764, %v4029
  %v4031 = vpop.f32.mrb[0].mxu0
  %v4032 = vpop.f32.mrb[0].mxu0
  %v4033 = vadd.f32 %v2764, %v4032
  %v4034 = vpop.f32.mrb[0].mxu0
  %4035 = vmatprep.mubr.bf16.mxu0 0
  %4036 = vmatmul.mubr.bf16.gmra.mrb[0].mxu0 %v3095
  %v4037 = vpop.f32.mrb[0].mxu0
  %v4038 = vadd.f32 %v2764, %v4037
  %v4039 = vpop.f32.mrb[0].mxu0
  %v4040 = vpop.f32.mrb[0].mxu0
  %v4041 = vadd.f32 %v2764, %v4040
  %v4042 = vpop.f32.mrb[0].mxu0
  %4043 = vmatprep.mubr.bf16.mxu0 0
  %4044 = vmatmul.mubr.bf16.gmra.mrb[0].mxu0 %v3098
  %v4045 = vpop.f32.mrb[0].mxu0
  %v4046 = vadd.f32 %v2764, %v4045
  %v4047 = vpop.f32.mrb[0].mxu0
  %v4048 = vpop.f32.mrb[0].mxu0
  %v4049 = vadd.f32 %v2764, %v4048
  %v4050 = vpop.f32.mrb[0].mxu0
  %4051 = vmatprep.mubr.bf16.mxu0 0
  %4052 = vmatmul.mubr.bf16.gmra.mrb[0].mxu0 %v3101
  %v4053 = vpop.f32.mrb[0].mxu0
  %v4054 = vadd.f32 %v2764, %v4053
  %v4055 = vpop.f32.mrb[0].mxu0
  %v4056 = vpop.f32.mrb[0].mxu0
  %v4057 = vadd.f32 %v2764, %v4056
  %v4058 = vpop.f32.mrb[0].mxu0
  %4059 = vmatprep.mubr.bf16.mxu0 0
  %4060 = vmatmul.mubr.bf16.gmra.mrb[0].mxu0 %v3104
  %v4061 = vpop.f32.mrb[0].mxu0
  %v4062 = vadd.f32 %v2764, %v4061
  %v4063 = vpop.f32.mrb[0].mxu0
  %v4064 = vpop.f32.mrb[0].mxu0
  %v4065 = vadd.f32 %v2764, %v4064
  %v4066 = vpop.f32.mrb[0].mxu0
  %4067 = vmatprep.mubr.bf16.mxu0 0
  %4068 = vmatmul.mubr.bf16.gmra.mrb[0].mxu0 %v3107
  %v4069 = vpop.f32.mrb[0].mxu0
  %v4070 = vadd.f32 %v2764, %v4069
  %v4071 = vpop.f32.mrb[0].mxu0
  %v4072 = vpop.f32.mrb[0].mxu0
  %v4073 = vadd.f32 %v2764, %v4072
  %v4074 = vpop.f32.mrb[0].mxu0
  %4075 = vmatprep.mubr.bf16.mxu0 0
  %4076 = vmatmul.mubr.bf16.gmra.mrb[0].mxu0 %v3110
  %v4077 = vpop.f32.mrb[0].mxu0
  %v4078 = vadd.f32 %v2764, %v4077
  %v4079 = vpop.f32.mrb[0].mxu0
  %v4080 = vpop.f32.mrb[0].mxu0
  %v4081 = vadd.f32 %v2764, %v4080
  %v4082 = vpop.f32.mrb[0].mxu0
  %4083 = vmatprep.mubr.bf16.mxu0 0
  %4084 = vmatmul.mubr.bf16.gmra.mrb[0].mxu0 %v3113
  %v4085 = vpop.f32.mrb[0].mxu0
  %v4086 = vadd.f32 %v2764, %v4085
  %v4087 = vpop.f32.mrb[0].mxu0
  %v4088 = vpop.f32.mrb[0].mxu0
  %v4089 = vadd.f32 %v2764, %v4088
  %v4090 = vpop.f32.mrb[0].mxu0
  %4091 = vmatprep.mubr.bf16.mxu0 0
  %4092 = vmatmul.mubr.bf16.gmra.mrb[0].mxu0 %v3116
  %v4093 = vpop.f32.mrb[0].mxu0
  %v4094 = vadd.f32 %v2764, %v4093
  %v4095 = vpop.f32.mrb[0].mxu0
  %v4096 = vpop.f32.mrb[0].mxu0
  %v4097 = vadd.f32 %v2764, %v4096
  %v4098 = vpop.f32.mrb[0].mxu0
  %4099 = vmatprep.mubr.bf16.mxu0 0
  %4100 = vmatmul.mubr.bf16.gmra.mrb[0].mxu0 %v3119
  %v4101 = vpop.f32.mrb[0].mxu0
  %v4102 = vadd.f32 %v2764, %v4101
  %v4103 = vpop.f32.mrb[0].mxu0
  %v4104 = vpop.f32.mrb[0].mxu0
  %v4105 = vadd.f32 %v2764, %v4104
  %v4106 = vpop.f32.mrb[0].mxu0
  %4107 = vmatprep.mubr.bf16.mxu0 0
  %4108 = vmatmul.mubr.bf16.gmra.mrb[0].mxu0 %v3122
  %v4109 = vpop.f32.mrb[0].mxu0
  %v4110 = vadd.f32 %v2764, %v4109
  %v4111 = vpop.f32.mrb[0].mxu0
  %v4112 = vpop.f32.mrb[0].mxu0
  %v4113 = vadd.f32 %v2764, %v4112
  %v4114 = vpop.f32.mrb[0].mxu0
  %4115 = vmatprep.mubr.bf16.mxu0 0
  %4116 = vmatmul.mubr.bf16.gmra.mrb[0].mxu0 %v3125
  %v4117 = vpop.f32.mrb[0].mxu0
  %v4118 = vadd.f32 %v2764, %v4117
  %v4119 = vpop.f32.mrb[0].mxu0
  %v4120 = vpop.f32.mrb[0].mxu0
  %v4121 = vadd.f32 %v2764, %v4120
  %v4122 = vpop.f32.mrb[0].mxu0
  %4123 = vmatprep.mubr.bf16.mxu0 0
  %4124 = vmatmul.mubr.bf16.gmra.mrb[0].mxu0 %v3128
  %v4125 = vpop.f32.mrb[0].mxu0
  %v4126 = vadd.f32 %v2764, %v4125
  %v4127 = vpop.f32.mrb[0].mxu0
  %v4128 = vpop.f32.mrb[0].mxu0
  %v4129 = vadd.f32 %v2764, %v4128
  %v4130 = vpop.f32.mrb[0].mxu0
  %4131 = vmatprep.mubr.bf16.mxu0 0
  %4132 = vmatmul.mubr.bf16.gmra.mrb[0].mxu0 %v3131
  %v4133 = vpop.f32.mrb[0].mxu0
  %v4134 = vadd.f32 %v2764, %v4133
  %v4135 = vpop.f32.mrb[0].mxu0
  %v4136 = vpop.f32.mrb[0].mxu0
  %v4137 = vadd.f32 %v2764, %v4136
  %v4138 = vpop.f32.mrb[0].mxu0
  %4139 = vmatprep.mubr.bf16.mxu0 0
  %4140 = vmatmul.mubr.bf16.gmra.mrb[0].mxu0 %v3134
  %v4141 = vpop.f32.mrb[0].mxu0
  %v4142 = vadd.f32 %v2764, %v4141
  %v4143 = vpop.f32.mrb[0].mxu0
  %v4144 = vpop.f32.mrb[0].mxu0
  %v4145 = vadd.f32 %v2764, %v4144
  %v4146 = vpop.f32.mrb[0].mxu0
  %4147 = vmatprep.mubr.bf16.mxu0 0
  %4148 = vmatmul.mubr.bf16.gmra.mrb[0].mxu0 %v3137
  %v4149 = vpop.f32.mrb[0].mxu0
  %v4150 = vadd.f32 %v2764, %v4149
  %v4151 = vpop.f32.mrb[0].mxu0
  %v4152 = vpop.f32.mrb[0].mxu0
  %v4153 = vadd.f32 %v2764, %v4152
  %v4154 = vpop.f32.mrb[0].mxu0
  %4155 = vmatprep.mubr.bf16.mxu0 0
  %4156 = vmatmul.mubr.bf16.gmra.mrb[0].mxu0 %v3140
  %v4157 = vpop.f32.mrb[0].mxu0
  %v4158 = vadd.f32 %v2764, %v4157
  %v4159 = vpop.f32.mrb[0].mxu0
  %v4160 = vpop.f32.mrb[0].mxu0
  %v4161 = vadd.f32 %v2764, %v4160
  %v4162 = vpop.f32.mrb[0].mxu0
  %4163 = vmatprep.mubr.bf16.mxu0 0
  %4164 = vmatmul.mubr.bf16.gmra.mrb[0].mxu0 %v3143
  %v4165 = vpop.f32.mrb[0].mxu0
  %v4166 = vadd.f32 %v2764, %v4165
  %v4167 = vpop.f32.mrb[0].mxu0
  %v4168 = vpop.f32.mrb[0].mxu0
  %v4169 = vadd.f32 %v2764, %v4168
  %v4170 = vpop.f32.mrb[0].mxu0
  %4171 = vmatprep.mubr.bf16.mxu0 0
  %4172 = vmatmul.mubr.bf16.gmra.mrb[0].mxu0 %v3146
  %v4173 = vpop.f32.mrb[0].mxu0
  %v4174 = vadd.f32 %v2764, %v4173
  %v4175 = vpop.f32.mrb[0].mxu0
  %v4176 = vpop.f32.mrb[0].mxu0
  %v4177 = vadd.f32 %v2764, %v4176
  %v4178 = vpop.f32.mrb[0].mxu0
  %4179 = vmatprep.mubr.bf16.mxu0 0
  %4180 = vmatmul.mubr.bf16.gmra.mrb[0].mxu0 %v3149
  %v4181 = vpop.f32.mrb[0].mxu0
  %v4182 = vadd.f32 %v2764, %v4181
  %v4183 = vpop.f32.mrb[0].mxu0
  %v4184 = vpop.f32.mrb[0].mxu0
  %v4185 = vadd.f32 %v2764, %v4184
  %v4186 = vpop.f32.mrb[0].mxu0
  %4187 = vmatprep.mubr.bf16.mxu0 0
  %4188 = vmatmul.mubr.bf16.gmra.mrb[0].mxu0 %v3152
  %v4189 = vpop.f32.mrb[0].mxu0
  %v4190 = vadd.f32 %v2764, %v4189
  %v4191 = vpop.f32.mrb[0].mxu0
  %v4192 = vpop.f32.mrb[0].mxu0
  %v4193 = vadd.f32 %v2764, %v4192
  %v4194 = vpop.f32.mrb[0].mxu0
  %4195 = vmatprep.mubr.bf16.mxu0 0
  %4196 = vmatmul.mubr.bf16.gmra.mrb[0].mxu0 %v3155
  %v4197 = vpop.f32.mrb[0].mxu0
  %v4198 = vadd.f32 %v2764, %v4197
  %v4199 = vpop.f32.mrb[0].mxu0
  %v4200 = vpop.f32.mrb[0].mxu0
  %v4201 = vadd.f32 %v2764, %v4200
  %v4202 = vpop.f32.mrb[0].mxu0
  %4203 = vmatprep.mubr.bf16.mxu0 0
  %4204 = vmatmul.mubr.bf16.gmra.mrb[0].mxu0 %v3158
  %v4205 = vpop.f32.mrb[0].mxu0
  %v4206 = vadd.f32 %v2764, %v4205
  %v4207 = vpop.f32.mrb[0].mxu0
  %v4208 = vpop.f32.mrb[0].mxu0
  %v4209 = vadd.f32 %v2764, %v4208
  %v4210 = vpop.f32.mrb[0].mxu0
  %4211 = vmatprep.mubr.bf16.mxu0 0
  %4212 = vmatmul.mubr.bf16.gmra.mrb[0].mxu0 %v3161
  %v4213 = vpop.f32.mrb[0].mxu0
  %v4214 = vadd.f32 %v2764, %v4213
  %v4215 = vpop.f32.mrb[0].mxu0
  %v4216 = vpop.f32.mrb[0].mxu0
  %v4217 = vadd.f32 %v2764, %v4216
  %v4218 = vpop.f32.mrb[0].mxu0
  %4219 = vdwg.mxu0
  %v4220 = vmax.f32 %v3198, 0.0
  %v4221 = vmax.f32 %v3201, 0.0
  %v4222 = vmax.f32 %v3206, 0.0
  %v4223 = vmax.f32 %v3209, 0.0
  %v4224 = vmax.f32 %v3214, 0.0
  %v4225 = vmax.f32 %v3217, 0.0
  %v4226 = vmax.f32 %v3222, 0.0
  %v4227 = vmax.f32 %v3225, 0.0
  %v4228 = vmax.f32 %v3230, 0.0
  %v4229 = vmax.f32 %v3233, 0.0
  %v4230 = vmax.f32 %v3238, 0.0
  %v4231 = vmax.f32 %v3241, 0.0
  %v4232 = vmax.f32 %v3246, 0.0
  %v4233 = vmax.f32 %v3249, 0.0
  %v4234 = vmax.f32 %v3254, 0.0
  %v4235 = vmax.f32 %v3257, 0.0
  %v4236 = vmax.f32 %v3262, 0.0
  %v4237 = vmax.f32 %v3265, 0.0
  %v4238 = vmax.f32 %v3270, 0.0
  %v4239 = vmax.f32 %v3273, 0.0
  %v4240 = vmax.f32 %v3278, 0.0
  %v4241 = vmax.f32 %v3281, 0.0
  %v4242 = vmax.f32 %v3286, 0.0
  %v4243 = vmax.f32 %v3289, 0.0
  %v4244 = vmax.f32 %v3294, 0.0
  %v4245 = vmax.f32 %v3297, 0.0
  %v4246 = vmax.f32 %v3302, 0.0
  %v4247 = vmax.f32 %v3305, 0.0
  %v4248 = vmax.f32 %v3310, 0.0
  %v4249 = vmax.f32 %v3313, 0.0
  %v4250 = vmax.f32 %v3318, 0.0
  %v4251 = vmax.f32 %v3321, 0.0
  %v4252 = vmax.f32 %v3326, 0.0
  %v4253 = vmax.f32 %v3329, 0.0
  %v4254 = vmax.f32 %v3334, 0.0
  %v4255 = vmax.f32 %v3337, 0.0
  %v4256 = vmax.f32 %v3342, 0.0
  %v4257 = vmax.f32 %v3345, 0.0
  %v4258 = vmax.f32 %v3350, 0.0
  %v4259 = vmax.f32 %v3353, 0.0
  %v4260 = vmax.f32 %v3358, 0.0
  %v4261 = vmax.f32 %v3361, 0.0
  %v4262 = vmax.f32 %v3366, 0.0
  %v4263 = vmax.f32 %v3369, 0.0
  %v4264 = vmax.f32 %v3374, 0.0
  %v4265 = vmax.f32 %v3377, 0.0
  %v4266 = vmax.f32 %v3382, 0.0
  %v4267 = vmax.f32 %v3385, 0.0
  %v4268 = vmax.f32 %v3390, 0.0
  %v4269 = vmax.f32 %v3393, 0.0
  %v4270 = vmax.f32 %v3398, 0.0
  %v4271 = vmax.f32 %v3401, 0.0
  %v4272 = vmax.f32 %v3406, 0.0
  %v4273 = vmax.f32 %v3409, 0.0
  %v4274 = vmax.f32 %v3414, 0.0
  %v4275 = vmax.f32 %v3417, 0.0
  %v4276 = vmax.f32 %v3422, 0.0
  %v4277 = vmax.f32 %v3425, 0.0
  %v4278 = vmax.f32 %v3430, 0.0
  %v4279 = vmax.f32 %v3433, 0.0
  %v4280 = vmax.f32 %v3438, 0.0
  %v4281 = vmax.f32 %v3441, 0.0
  %v4282 = vmax.f32 %v3446, 0.0
  %v4283 = vmax.f32 %v3449, 0.0
  %v4284 = vmax.f32 %v3454, 0.0
  %v4285 = vmax.f32 %v3457, 0.0
  %v4286 = vmax.f32 %v3462, 0.0
  %v4287 = vmax.f32 %v3465, 0.0
  %v4288 = vmax.f32 %v3470, 0.0
  %v4289 = vmax.f32 %v3473, 0.0
  %v4290 = vmax.f32 %v3478, 0.0
  %v4291 = vmax.f32 %v3481, 0.0
  %v4292 = vmax.f32 %v3486, 0.0
  %v4293 = vmax.f32 %v3489, 0.0
  %v4294 = vmax.f32 %v3494, 0.0
  %v4295 = vmax.f32 %v3497, 0.0
  %v4296 = vmax.f32 %v3502, 0.0
  %v4297 = vmax.f32 %v3505, 0.0
  %v4298 = vmax.f32 %v3510, 0.0
  %v4299 = vmax.f32 %v3513, 0.0
  %v4300 = vmax.f32 %v3518, 0.0
  %v4301 = vmax.f32 %v3521, 0.0
  %v4302 = vmax.f32 %v3526, 0.0
  %v4303 = vmax.f32 %v3529, 0.0
  %v4304 = vmax.f32 %v3534, 0.0
  %v4305 = vmax.f32 %v3537, 0.0
  %v4306 = vmax.f32 %v3542, 0.0
  %v4307 = vmax.f32 %v3545, 0.0
  %v4308 = vmax.f32 %v3550, 0.0
  %v4309 = vmax.f32 %v3553, 0.0
  %v4310 = vmax.f32 %v3558, 0.0
  %v4311 = vmax.f32 %v3561, 0.0
  %v4312 = vmax.f32 %v3566, 0.0
  %v4313 = vmax.f32 %v3569, 0.0
  %v4314 = vmax.f32 %v3574, 0.0
  %v4315 = vmax.f32 %v3577, 0.0
  %v4316 = vmax.f32 %v3582, 0.0
  %v4317 = vmax.f32 %v3585, 0.0
  %v4318 = vmax.f32 %v3590, 0.0
  %v4319 = vmax.f32 %v3593, 0.0
  %v4320 = vmax.f32 %v3598, 0.0
  %v4321 = vmax.f32 %v3601, 0.0
  %v4322 = vmax.f32 %v3606, 0.0
  %v4323 = vmax.f32 %v3609, 0.0
  %v4324 = vmax.f32 %v3614, 0.0
  %v4325 = vmax.f32 %v3617, 0.0
  %v4326 = vmax.f32 %v3622, 0.0
  %v4327 = vmax.f32 %v3625, 0.0
  %v4328 = vmax.f32 %v3630, 0.0
  %v4329 = vmax.f32 %v3633, 0.0
  %v4330 = vmax.f32 %v3638, 0.0
  %v4331 = vmax.f32 %v3641, 0.0
  %v4332 = vmax.f32 %v3646, 0.0
  %v4333 = vmax.f32 %v3649, 0.0
  %v4334 = vmax.f32 %v3654, 0.0
  %v4335 = vmax.f32 %v3657, 0.0
  %v4336 = vmax.f32 %v3662, 0.0
  %v4337 = vmax.f32 %v3665, 0.0
  %v4338 = vmax.f32 %v3670, 0.0
  %v4339 = vmax.f32 %v3673, 0.0
  %v4340 = vmax.f32 %v3678, 0.0
  %v4341 = vmax.f32 %v3681, 0.0
  %v4342 = vmax.f32 %v3686, 0.0
  %v4343 = vmax.f32 %v3689, 0.0
  %v4344 = vmax.f32 %v3694, 0.0
  %v4345 = vmax.f32 %v3697, 0.0
  %v4346 = vmax.f32 %v3702, 0.0
  %v4347 = vmax.f32 %v3705, 0.0
  %v4348 = vmax.f32 %v3710, 0.0
  %v4349 = vmax.f32 %v3713, 0.0
  %v4350 = vmax.f32 %v3718, 0.0
  %v4351 = vmax.f32 %v3721, 0.0
  %v4352 = vmax.f32 %v3726, 0.0
  %v4353 = vmax.f32 %v3729, 0.0
  %v4354 = vmax.f32 %v3734, 0.0
  %v4355 = vmax.f32 %v3737, 0.0
  %v4356 = vmax.f32 %v3742, 0.0
  %v4357 = vmax.f32 %v3745, 0.0
  %v4358 = vmax.f32 %v3750, 0.0
  %v4359 = vmax.f32 %v3753, 0.0
  %v4360 = vmax.f32 %v3758, 0.0
  %v4361 = vmax.f32 %v3761, 0.0
  %v4362 = vmax.f32 %v3766, 0.0
  %v4363 = vmax.f32 %v3769, 0.0
  %v4364 = vmax.f32 %v3774, 0.0
  %v4365 = vmax.f32 %v3777, 0.0
  %v4366 = vmax.f32 %v3782, 0.0
  %v4367 = vmax.f32 %v3785, 0.0
  %v4368 = vmax.f32 %v3790, 0.0
  %v4369 = vmax.f32 %v3793, 0.0
  %v4370 = vmax.f32 %v3798, 0.0
  %v4371 = vmax.f32 %v3801, 0.0
  %v4372 = vmax.f32 %v3806, 0.0
  %v4373 = vmax.f32 %v3809, 0.0
  %v4374 = vmax.f32 %v3814, 0.0
  %v4375 = vmax.f32 %v3817, 0.0
  %v4376 = vmax.f32 %v3822, 0.0
  %v4377 = vmax.f32 %v3825, 0.0
  %v4378 = vmax.f32 %v3830, 0.0
  %v4379 = vmax.f32 %v3833, 0.0
  %v4380 = vmax.f32 %v3838, 0.0
  %v4381 = vmax.f32 %v3841, 0.0
  %v4382 = vmax.f32 %v3846, 0.0
  %v4383 = vmax.f32 %v3849, 0.0
  %v4384 = vmax.f32 %v3854, 0.0
  %v4385 = vmax.f32 %v3857, 0.0
  %v4386 = vmax.f32 %v3862, 0.0
  %v4387 = vmax.f32 %v3865, 0.0
  %v4388 = vmax.f32 %v3870, 0.0
  %v4389 = vmax.f32 %v3873, 0.0
  %v4390 = vmax.f32 %v3878, 0.0
  %v4391 = vmax.f32 %v3881, 0.0
  %v4392 = vmax.f32 %v3886, 0.0
  %v4393 = vmax.f32 %v3889, 0.0
  %v4394 = vmax.f32 %v3894, 0.0
  %v4395 = vmax.f32 %v3897, 0.0
  %v4396 = vmax.f32 %v3902, 0.0
  %v4397 = vmax.f32 %v3905, 0.0
  %v4398 = vmax.f32 %v3910, 0.0
  %v4399 = vmax.f32 %v3913, 0.0
  %v4400 = vmax.f32 %v3918, 0.0
  %v4401 = vmax.f32 %v3921, 0.0
  %v4402 = vmax.f32 %v3926, 0.0
  %v4403 = vmax.f32 %v3929, 0.0
  %v4404 = vmax.f32 %v3934, 0.0
  %v4405 = vmax.f32 %v3937, 0.0
  %v4406 = vmax.f32 %v3942, 0.0
  %v4407 = vmax.f32 %v3945, 0.0
  %v4408 = vmax.f32 %v3950, 0.0
  %v4409 = vmax.f32 %v3953, 0.0
  %v4410 = vmax.f32 %v3958, 0.0
  %v4411 = vmax.f32 %v3961, 0.0
  %v4412 = vmax.f32 %v3966, 0.0
  %v4413 = vmax.f32 %v3969, 0.0
  %v4414 = vmax.f32 %v3974, 0.0
  %v4415 = vmax.f32 %v3977, 0.0
  %v4416 = vmax.f32 %v3982, 0.0
  %v4417 = vmax.f32 %v3985, 0.0
  %v4418 = vmax.f32 %v3990, 0.0
  %v4419 = vmax.f32 %v3993, 0.0
  %v4420 = vmax.f32 %v3998, 0.0
  %v4421 = vmax.f32 %v4001, 0.0
  %v4422 = vmax.f32 %v4006, 0.0
  %v4423 = vmax.f32 %v4009, 0.0
  %v4424 = vmax.f32 %v4014, 0.0
  %v4425 = vmax.f32 %v4017, 0.0
  %v4426 = vmax.f32 %v4022, 0.0
  %v4427 = vmax.f32 %v4025, 0.0
  %v4428 = vmax.f32 %v4030, 0.0
  %v4429 = vmax.f32 %v4033, 0.0
  %v4430 = vmax.f32 %v4038, 0.0
  %v4431 = vmax.f32 %v4041, 0.0
  %v4432 = vmax.f32 %v4046, 0.0
  %v4433 = vmax.f32 %v4049, 0.0
  %v4434 = vmax.f32 %v4054, 0.0
  %v4435 = vmax.f32 %v4057, 0.0
  %v4436 = vmax.f32 %v4062, 0.0
  %v4437 = vmax.f32 %v4065, 0.0
  %v4438 = vmax.f32 %v4070, 0.0
  %v4439 = vmax.f32 %v4073, 0.0
  %v4440 = vmax.f32 %v4078, 0.0
  %v4441 = vmax.f32 %v4081, 0.0
  %v4442 = vmax.f32 %v4086, 0.0
  %v4443 = vmax.f32 %v4089, 0.0
  %v4444 = vmax.f32 %v4094, 0.0
  %v4445 = vmax.f32 %v4097, 0.0
  %v4446 = vmax.f32 %v4102, 0.0
  %v4447 = vmax.f32 %v4105, 0.0
  %v4448 = vmax.f32 %v4110, 0.0
  %v4449 = vmax.f32 %v4113, 0.0
  %v4450 = vmax.f32 %v4118, 0.0
  %v4451 = vmax.f32 %v4121, 0.0
  %v4452 = vmax.f32 %v4126, 0.0
  %v4453 = vmax.f32 %v4129, 0.0
  %v4454 = vmax.f32 %v4134, 0.0
  %v4455 = vmax.f32 %v4137, 0.0
  %v4456 = vmax.f32 %v4142, 0.0
  %v4457 = vmax.f32 %v4145, 0.0
  %v4458 = vmax.f32 %v4150, 0.0
  %v4459 = vmax.f32 %v4153, 0.0
  %v4460 = vmax.f32 %v4158, 0.0
  %v4461 = vmax.f32 %v4161, 0.0
  %v4462 = vmax.f32 %v4166, 0.0
  %v4463 = vmax.f32 %v4169, 0.0
  %v4464 = vmax.f32 %v4174, 0.0
  %v4465 = vmax.f32 %v4177, 0.0
  %v4466 = vmax.f32 %v4182, 0.0
  %v4467 = vmax.f32 %v4185, 0.0
  %v4468 = vmax.f32 %v4190, 0.0
  %v4469 = vmax.f32 %v4193, 0.0
  %v4470 = vmax.f32 %v4198, 0.0
  %v4471 = vmax.f32 %v4201, 0.0
  %v4472 = vmax.f32 %v4206, 0.0
  %v4473 = vmax.f32 %v4209, 0.0
  %v4474 = vmax.f32 %v4214, 0.0
  %v4475 = vmax.f32 %v4217, 0.0
  %v4476 = vpack.c.bf16 %v4221, %v4220
  %v4477 = vpack.c.bf16 %v4223, %v4222
  %v4478 = vpack.c.bf16 %v4225, %v4224
  %v4479 = vpack.c.bf16 %v4227, %v4226
  %v4480 = vpack.c.bf16 %v4229, %v4228
  %v4481 = vpack.c.bf16 %v4231, %v4230
  %v4482 = vpack.c.bf16 %v4233, %v4232
  %v4483 = vpack.c.bf16 %v4235, %v4234
  %v4484 = vpack.c.bf16 %v4237, %v4236
  %v4485 = vpack.c.bf16 %v4239, %v4238
  %v4486 = vpack.c.bf16 %v4241, %v4240
  %v4487 = vpack.c.bf16 %v4243, %v4242
  %v4488 = vpack.c.bf16 %v4245, %v4244
  %v4489 = vpack.c.bf16 %v4247, %v4246
  %v4490 = vpack.c.bf16 %v4249, %v4248
  %v4491 = vpack.c.bf16 %v4251, %v4250
  %v4492 = vpack.c.bf16 %v4253, %v4252
  %v4493 = vpack.c.bf16 %v4255, %v4254
  %v4494 = vpack.c.bf16 %v4257, %v4256
  %v4495 = vpack.c.bf16 %v4259, %v4258
  %v4496 = vpack.c.bf16 %v4261, %v4260
  %v4497 = vpack.c.bf16 %v4263, %v4262
  %v4498 = vpack.c.bf16 %v4265, %v4264
  %v4499 = vpack.c.bf16 %v4267, %v4266
  %v4500 = vpack.c.bf16 %v4269, %v4268
  %v4501 = vpack.c.bf16 %v4271, %v4270
  %v4502 = vpack.c.bf16 %v4273, %v4272
  %v4503 = vpack.c.bf16 %v4275, %v4274
  %v4504 = vpack.c.bf16 %v4277, %v4276
  %v4505 = vpack.c.bf16 %v4279, %v4278
  %v4506 = vpack.c.bf16 %v4281, %v4280
  %v4507 = vpack.c.bf16 %v4283, %v4282
  %v4508 = vpack.c.bf16 %v4285, %v4284
  %v4509 = vpack.c.bf16 %v4287, %v4286
  %v4510 = vpack.c.bf16 %v4289, %v4288
  %v4511 = vpack.c.bf16 %v4291, %v4290
  %v4512 = vpack.c.bf16 %v4293, %v4292
  %v4513 = vpack.c.bf16 %v4295, %v4294
  %v4514 = vpack.c.bf16 %v4297, %v4296
  %v4515 = vpack.c.bf16 %v4299, %v4298
  %v4516 = vpack.c.bf16 %v4301, %v4300
  %v4517 = vpack.c.bf16 %v4303, %v4302
  %v4518 = vpack.c.bf16 %v4305, %v4304
  %v4519 = vpack.c.bf16 %v4307, %v4306
  %v4520 = vpack.c.bf16 %v4309, %v4308
  %v4521 = vpack.c.bf16 %v4311, %v4310
  %v4522 = vpack.c.bf16 %v4313, %v4312
  %v4523 = vpack.c.bf16 %v4315, %v4314
  %v4524 = vpack.c.bf16 %v4317, %v4316
  %v4525 = vpack.c.bf16 %v4319, %v4318
  %v4526 = vpack.c.bf16 %v4321, %v4320
  %v4527 = vpack.c.bf16 %v4323, %v4322
  %v4528 = vpack.c.bf16 %v4325, %v4324
  %v4529 = vpack.c.bf16 %v4327, %v4326
  %v4530 = vpack.c.bf16 %v4329, %v4328
  %v4531 = vpack.c.bf16 %v4331, %v4330
  %v4532 = vpack.c.bf16 %v4333, %v4332
  %v4533 = vpack.c.bf16 %v4335, %v4334
  %v4534 = vpack.c.bf16 %v4337, %v4336
  %v4535 = vpack.c.bf16 %v4339, %v4338
  %v4536 = vpack.c.bf16 %v4341, %v4340
  %v4537 = vpack.c.bf16 %v4343, %v4342
  %v4538 = vpack.c.bf16 %v4345, %v4344
  %v4539 = vpack.c.bf16 %v4347, %v4346
  %v4540 = vpack.c.bf16 %v4349, %v4348
  %v4541 = vpack.c.bf16 %v4351, %v4350
  %v4542 = vpack.c.bf16 %v4353, %v4352
  %v4543 = vpack.c.bf16 %v4355, %v4354
  %v4544 = vpack.c.bf16 %v4357, %v4356
  %v4545 = vpack.c.bf16 %v4359, %v4358
  %v4546 = vpack.c.bf16 %v4361, %v4360
  %v4547 = vpack.c.bf16 %v4363, %v4362
  %v4548 = vpack.c.bf16 %v4365, %v4364
  %v4549 = vpack.c.bf16 %v4367, %v4366
  %v4550 = vpack.c.bf16 %v4369, %v4368
  %v4551 = vpack.c.bf16 %v4371, %v4370
  %v4552 = vpack.c.bf16 %v4373, %v4372
  %v4553 = vpack.c.bf16 %v4375, %v4374
  %v4554 = vpack.c.bf16 %v4377, %v4376
  %v4555 = vpack.c.bf16 %v4379, %v4378
  %v4556 = vpack.c.bf16 %v4381, %v4380
  %v4557 = vpack.c.bf16 %v4383, %v4382
  %v4558 = vpack.c.bf16 %v4385, %v4384
  %v4559 = vpack.c.bf16 %v4387, %v4386
  %v4560 = vpack.c.bf16 %v4389, %v4388
  %v4561 = vpack.c.bf16 %v4391, %v4390
  %v4562 = vpack.c.bf16 %v4393, %v4392
  %v4563 = vpack.c.bf16 %v4395, %v4394
  %v4564 = vpack.c.bf16 %v4397, %v4396
  %v4565 = vpack.c.bf16 %v4399, %v4398
  %v4566 = vpack.c.bf16 %v4401, %v4400
  %v4567 = vpack.c.bf16 %v4403, %v4402
  %v4568 = vpack.c.bf16 %v4405, %v4404
  %v4569 = vpack.c.bf16 %v4407, %v4406
  %v4570 = vpack.c.bf16 %v4409, %v4408
  %v4571 = vpack.c.bf16 %v4411, %v4410
  %v4572 = vpack.c.bf16 %v4413, %v4412
  %v4573 = vpack.c.bf16 %v4415, %v4414
  %v4574 = vpack.c.bf16 %v4417, %v4416
  %v4575 = vpack.c.bf16 %v4419, %v4418
  %v4576 = vpack.c.bf16 %v4421, %v4420
  %v4577 = vpack.c.bf16 %v4423, %v4422
  %v4578 = vpack.c.bf16 %v4425, %v4424
  %v4579 = vpack.c.bf16 %v4427, %v4426
  %v4580 = vpack.c.bf16 %v4429, %v4428
  %v4581 = vpack.c.bf16 %v4431, %v4430
  %v4582 = vpack.c.bf16 %v4433, %v4432
  %v4583 = vpack.c.bf16 %v4435, %v4434
  %v4584 = vpack.c.bf16 %v4437, %v4436
  %v4585 = vpack.c.bf16 %v4439, %v4438
  %v4586 = vpack.c.bf16 %v4441, %v4440
  %v4587 = vpack.c.bf16 %v4443, %v4442
  %v4588 = vpack.c.bf16 %v4445, %v4444
  %v4589 = vpack.c.bf16 %v4447, %v4446
  %v4590 = vpack.c.bf16 %v4449, %v4448
  %v4591 = vpack.c.bf16 %v4451, %v4450
  %v4592 = vpack.c.bf16 %v4453, %v4452
  %v4593 = vpack.c.bf16 %v4455, %v4454
  %v4594 = vpack.c.bf16 %v4457, %v4456
  %v4595 = vpack.c.bf16 %v4459, %v4458
  %v4596 = vpack.c.bf16 %v4461, %v4460
  %v4597 = vpack.c.bf16 %v4463, %v4462
  %v4598 = vpack.c.bf16 %v4465, %v4464
  %v4599 = vpack.c.bf16 %v4467, %v4466
  %v4600 = vpack.c.bf16 %v4469, %v4468
  %v4601 = vpack.c.bf16 %v4471, %v4470
  %v4602 = vpack.c.bf16 %v4473, %v4472
  %v4603 = vpack.c.bf16 %v4475, %v4474
  %v4732 = vunpack.c.l.b16 %v4476
  %v4733 = vunpack.c.h.b16 %v4476
  %v4734 = vunpack.c.l.b16 %v4477
  %v4735 = vunpack.c.h.b16 %v4477
  %v4736 = vunpack.c.l.b16 %v4478
  %v4737 = vunpack.c.h.b16 %v4478
  %v4738 = vunpack.c.l.b16 %v4479
  %v4739 = vunpack.c.h.b16 %v4479
  %v4740 = vunpack.c.l.b16 %v4480
  %v4741 = vunpack.c.h.b16 %v4480
  %v4742 = vunpack.c.l.b16 %v4481
  %v4743 = vunpack.c.h.b16 %v4481
  %v4744 = vunpack.c.l.b16 %v4482
  %v4745 = vunpack.c.h.b16 %v4482
  %v4746 = vunpack.c.l.b16 %v4483
  %v4747 = vunpack.c.h.b16 %v4483
  %v4748 = vunpack.c.l.b16 %v4484
  %v4749 = vunpack.c.h.b16 %v4484
  %v4750 = vunpack.c.l.b16 %v4485
  %v4751 = vunpack.c.h.b16 %v4485
  %v4752 = vunpack.c.l.b16 %v4486
  %v4753 = vunpack.c.h.b16 %v4486
  %v4754 = vunpack.c.l.b16 %v4487
  %v4755 = vunpack.c.h.b16 %v4487
  %v4756 = vunpack.c.l.b16 %v4488
  %v4757 = vunpack.c.h.b16 %v4488
  %v4758 = vunpack.c.l.b16 %v4489
  %v4759 = vunpack.c.h.b16 %v4489
  %v4760 = vunpack.c.l.b16 %v4490
  %v4761 = vunpack.c.h.b16 %v4490
  %v4762 = vunpack.c.l.b16 %v4491
  %v4763 = vunpack.c.h.b16 %v4491
  %v4764 = vunpack.c.l.b16 %v4492
  %v4765 = vunpack.c.h.b16 %v4492
  %v4766 = vunpack.c.l.b16 %v4493
  %v4767 = vunpack.c.h.b16 %v4493
  %v4768 = vunpack.c.l.b16 %v4494
  %v4769 = vunpack.c.h.b16 %v4494
  %v4770 = vunpack.c.l.b16 %v4495
  %v4771 = vunpack.c.h.b16 %v4495
  %v4772 = vunpack.c.l.b16 %v4496
  %v4773 = vunpack.c.h.b16 %v4496
  %v4774 = vunpack.c.l.b16 %v4497
  %v4775 = vunpack.c.h.b16 %v4497
  %v4776 = vunpack.c.l.b16 %v4498
  %v4777 = vunpack.c.h.b16 %v4498
  %v4778 = vunpack.c.l.b16 %v4499
  %v4779 = vunpack.c.h.b16 %v4499
  %v4780 = vunpack.c.l.b16 %v4500
  %v4781 = vunpack.c.h.b16 %v4500
  %v4782 = vunpack.c.l.b16 %v4501
  %v4783 = vunpack.c.h.b16 %v4501
  %v4784 = vunpack.c.l.b16 %v4502
  %v4785 = vunpack.c.h.b16 %v4502
  %v4786 = vunpack.c.l.b16 %v4503
  %v4787 = vunpack.c.h.b16 %v4503
  %v4788 = vunpack.c.l.b16 %v4504
  %v4789 = vunpack.c.h.b16 %v4504
  %v4790 = vunpack.c.l.b16 %v4505
  %v4791 = vunpack.c.h.b16 %v4505
  %v4792 = vunpack.c.l.b16 %v4506
  %v4793 = vunpack.c.h.b16 %v4506
  %v4794 = vunpack.c.l.b16 %v4507
  %v4795 = vunpack.c.h.b16 %v4507
  %v4796 = vunpack.c.l.b16 %v4508
  %v4797 = vunpack.c.h.b16 %v4508
  %v4798 = vunpack.c.l.b16 %v4509
  %v4799 = vunpack.c.h.b16 %v4509
  %v4800 = vunpack.c.l.b16 %v4510
  %v4801 = vunpack.c.h.b16 %v4510
  %v4802 = vunpack.c.l.b16 %v4511
  %v4803 = vunpack.c.h.b16 %v4511
  %v4804 = vunpack.c.l.b16 %v4512
  %v4805 = vunpack.c.h.b16 %v4512
  %v4806 = vunpack.c.l.b16 %v4513
  %v4807 = vunpack.c.h.b16 %v4513
  %v4808 = vunpack.c.l.b16 %v4514
  %v4809 = vunpack.c.h.b16 %v4514
  %v4810 = vunpack.c.l.b16 %v4515
  %v4811 = vunpack.c.h.b16 %v4515
  %v4812 = vunpack.c.l.b16 %v4516
  %v4813 = vunpack.c.h.b16 %v4516
  %v4814 = vunpack.c.l.b16 %v4517
  %v4815 = vunpack.c.h.b16 %v4517
  %v4816 = vunpack.c.l.b16 %v4518
  %v4817 = vunpack.c.h.b16 %v4518
  %v4818 = vunpack.c.l.b16 %v4519
  %v4819 = vunpack.c.h.b16 %v4519
  %v4820 = vunpack.c.l.b16 %v4520
  %v4821 = vunpack.c.h.b16 %v4520
  %v4822 = vunpack.c.l.b16 %v4521
  %v4823 = vunpack.c.h.b16 %v4521
  %v4824 = vunpack.c.l.b16 %v4522
  %v4825 = vunpack.c.h.b16 %v4522
  %v4826 = vunpack.c.l.b16 %v4523
  %v4827 = vunpack.c.h.b16 %v4523
  %v4828 = vunpack.c.l.b16 %v4524
  %v4829 = vunpack.c.h.b16 %v4524
  %v4830 = vunpack.c.l.b16 %v4525
  %v4831 = vunpack.c.h.b16 %v4525
  %v4832 = vunpack.c.l.b16 %v4526
  %v4833 = vunpack.c.h.b16 %v4526
  %v4834 = vunpack.c.l.b16 %v4527
  %v4835 = vunpack.c.h.b16 %v4527
  %v4836 = vunpack.c.l.b16 %v4528
  %v4837 = vunpack.c.h.b16 %v4528
  %v4838 = vunpack.c.l.b16 %v4529
  %v4839 = vunpack.c.h.b16 %v4529
  %v4840 = vunpack.c.l.b16 %v4530
  %v4841 = vunpack.c.h.b16 %v4530
  %v4842 = vunpack.c.l.b16 %v4531
  %v4843 = vunpack.c.h.b16 %v4531
  %v4844 = vunpack.c.l.b16 %v4532
  %v4845 = vunpack.c.h.b16 %v4532
  %v4846 = vunpack.c.l.b16 %v4533
  %v4847 = vunpack.c.h.b16 %v4533
  %v4848 = vunpack.c.l.b16 %v4534
  %v4849 = vunpack.c.h.b16 %v4534
  %v4850 = vunpack.c.l.b16 %v4535
  %v4851 = vunpack.c.h.b16 %v4535
  %v4852 = vunpack.c.l.b16 %v4536
  %v4853 = vunpack.c.h.b16 %v4536
  %v4854 = vunpack.c.l.b16 %v4537
  %v4855 = vunpack.c.h.b16 %v4537
  %v4856 = vunpack.c.l.b16 %v4538
  %v4857 = vunpack.c.h.b16 %v4538
  %v4858 = vunpack.c.l.b16 %v4539
  %v4859 = vunpack.c.h.b16 %v4539
  %v4860 = vunpack.c.l.b16 %v4540
  %v4861 = vunpack.c.h.b16 %v4540
  %v4862 = vunpack.c.l.b16 %v4541
  %v4863 = vunpack.c.h.b16 %v4541
  %v4864 = vunpack.c.l.b16 %v4542
  %v4865 = vunpack.c.h.b16 %v4542
  %v4866 = vunpack.c.l.b16 %v4543
  %v4867 = vunpack.c.h.b16 %v4543
  %v4868 = vunpack.c.l.b16 %v4544
  %v4869 = vunpack.c.h.b16 %v4544
  %v4870 = vunpack.c.l.b16 %v4545
  %v4871 = vunpack.c.h.b16 %v4545
  %v4872 = vunpack.c.l.b16 %v4546
  %v4873 = vunpack.c.h.b16 %v4546
  %v4874 = vunpack.c.l.b16 %v4547
  %v4875 = vunpack.c.h.b16 %v4547
  %v4876 = vunpack.c.l.b16 %v4548
  %v4877 = vunpack.c.h.b16 %v4548
  %v4878 = vunpack.c.l.b16 %v4549
  %v4879 = vunpack.c.h.b16 %v4549
  %v4880 = vunpack.c.l.b16 %v4550
  %v4881 = vunpack.c.h.b16 %v4550
  %v4882 = vunpack.c.l.b16 %v4551
  %v4883 = vunpack.c.h.b16 %v4551
  %v4884 = vunpack.c.l.b16 %v4552
  %v4885 = vunpack.c.h.b16 %v4552
  %v4886 = vunpack.c.l.b16 %v4553
  %v4887 = vunpack.c.h.b16 %v4553
  %v4888 = vunpack.c.l.b16 %v4554
  %v4889 = vunpack.c.h.b16 %v4554
  %v4890 = vunpack.c.l.b16 %v4555
  %v4891 = vunpack.c.h.b16 %v4555
  %v4892 = vunpack.c.l.b16 %v4556
  %v4893 = vunpack.c.h.b16 %v4556
  %v4894 = vunpack.c.l.b16 %v4557
  %v4895 = vunpack.c.h.b16 %v4557
  %v4896 = vunpack.c.l.b16 %v4558
  %v4897 = vunpack.c.h.b16 %v4558
  %v4898 = vunpack.c.l.b16 %v4559
  %v4899 = vunpack.c.h.b16 %v4559
  %v4900 = vunpack.c.l.b16 %v4560
  %v4901 = vunpack.c.h.b16 %v4560
  %v4902 = vunpack.c.l.b16 %v4561
  %v4903 = vunpack.c.h.b16 %v4561
  %v4904 = vunpack.c.l.b16 %v4562
  %v4905 = vunpack.c.h.b16 %v4562
  %v4906 = vunpack.c.l.b16 %v4563
  %v4907 = vunpack.c.h.b16 %v4563
  %v4908 = vunpack.c.l.b16 %v4564
  %v4909 = vunpack.c.h.b16 %v4564
  %v4910 = vunpack.c.l.b16 %v4565
  %v4911 = vunpack.c.h.b16 %v4565
  %v4912 = vunpack.c.l.b16 %v4566
  %v4913 = vunpack.c.h.b16 %v4566
  %v4914 = vunpack.c.l.b16 %v4567
  %v4915 = vunpack.c.h.b16 %v4567
  %v4916 = vunpack.c.l.b16 %v4568
  %v4917 = vunpack.c.h.b16 %v4568
  %v4918 = vunpack.c.l.b16 %v4569
  %v4919 = vunpack.c.h.b16 %v4569
  %v4920 = vunpack.c.l.b16 %v4570
  %v4921 = vunpack.c.h.b16 %v4570
  %v4922 = vunpack.c.l.b16 %v4571
  %v4923 = vunpack.c.h.b16 %v4571
  %v4924 = vunpack.c.l.b16 %v4572
  %v4925 = vunpack.c.h.b16 %v4572
  %v4926 = vunpack.c.l.b16 %v4573
  %v4927 = vunpack.c.h.b16 %v4573
  %v4928 = vunpack.c.l.b16 %v4574
  %v4929 = vunpack.c.h.b16 %v4574
  %v4930 = vunpack.c.l.b16 %v4575
  %v4931 = vunpack.c.h.b16 %v4575
  %v4932 = vunpack.c.l.b16 %v4576
  %v4933 = vunpack.c.h.b16 %v4576
  %v4934 = vunpack.c.l.b16 %v4577
  %v4935 = vunpack.c.h.b16 %v4577
  %v4936 = vunpack.c.l.b16 %v4578
  %v4937 = vunpack.c.h.b16 %v4578
  %v4938 = vunpack.c.l.b16 %v4579
  %v4939 = vunpack.c.h.b16 %v4579
  %v4940 = vunpack.c.l.b16 %v4580
  %v4941 = vunpack.c.h.b16 %v4580
  %v4942 = vunpack.c.l.b16 %v4581
  %v4943 = vunpack.c.h.b16 %v4581
  %v4944 = vunpack.c.l.b16 %v4582
  %v4945 = vunpack.c.h.b16 %v4582
  %v4946 = vunpack.c.l.b16 %v4583
  %v4947 = vunpack.c.h.b16 %v4583
  %v4948 = vunpack.c.l.b16 %v4584
  %v4949 = vunpack.c.h.b16 %v4584
  %v4950 = vunpack.c.l.b16 %v4585
  %v4951 = vunpack.c.h.b16 %v4585
  %v4952 = vunpack.c.l.b16 %v4586
  %v4953 = vunpack.c.h.b16 %v4586
  %v4954 = vunpack.c.l.b16 %v4587
  %v4955 = vunpack.c.h.b16 %v4587
  %v4956 = vunpack.c.l.b16 %v4588
  %v4957 = vunpack.c.h.b16 %v4588
  %v4958 = vunpack.c.l.b16 %v4589
  %v4959 = vunpack.c.h.b16 %v4589
  %v4960 = vunpack.c.l.b16 %v4590
  %v4961 = vunpack.c.h.b16 %v4590
  %v4962 = vunpack.c.l.b16 %v4591
  %v4963 = vunpack.c.h.b16 %v4591
  %v4964 = vunpack.c.l.b16 %v4592
  %v4965 = vunpack.c.h.b16 %v4592
  %v4966 = vunpack.c.l.b16 %v4593
  %v4967 = vunpack.c.h.b16 %v4593
  %v4968 = vunpack.c.l.b16 %v4594
  %v4969 = vunpack.c.h.b16 %v4594
  %v4970 = vunpack.c.l.b16 %v4595
  %v4971 = vunpack.c.h.b16 %v4595
  %v4972 = vunpack.c.l.b16 %v4596
  %v4973 = vunpack.c.h.b16 %v4596
  %v4974 = vunpack.c.l.b16 %v4597
  %v4975 = vunpack.c.h.b16 %v4597
  %v4976 = vunpack.c.l.b16 %v4598
  %v4977 = vunpack.c.h.b16 %v4598
  %v4978 = vunpack.c.l.b16 %v4599
  %v4979 = vunpack.c.h.b16 %v4599
  %v4980 = vunpack.c.l.b16 %v4600
  %v4981 = vunpack.c.h.b16 %v4600
  %v4982 = vunpack.c.l.b16 %v4601
  %v4983 = vunpack.c.h.b16 %v4601
  %v4984 = vunpack.c.l.b16 %v4602
  %v4985 = vunpack.c.h.b16 %v4602
  %v4986 = vunpack.c.l.b16 %v4603
  %v4987 = vunpack.c.h.b16 %v4603
  %v4988 = vpack.c.b16 %v4732, %v4732
  %v4989 = vpack.c.b16 %v4733, %v4733
  %v4990 = vpack.c.b16 %v4734, %v4734
  %v4991 = vpack.c.b16 %v4735, %v4735
  %v4992 = vpack.c.b16 %v4736, %v4736
  %v4993 = vpack.c.b16 %v4737, %v4737
  %v4994 = vpack.c.b16 %v4738, %v4738
  %v4995 = vpack.c.b16 %v4739, %v4739
  %v4996 = vpack.c.b16 %v4740, %v4740
  %v4997 = vpack.c.b16 %v4741, %v4741
  %v4998 = vpack.c.b16 %v4742, %v4742
  %v4999 = vpack.c.b16 %v4743, %v4743
  %v5000 = vpack.c.b16 %v4744, %v4744
  %v5001 = vpack.c.b16 %v4745, %v4745
  %v5002 = vpack.c.b16 %v4746, %v4746
  %v5003 = vpack.c.b16 %v4747, %v4747
  %v5004 = vpack.c.b16 %v4748, %v4748
  %v5005 = vpack.c.b16 %v4749, %v4749
  %v5006 = vpack.c.b16 %v4750, %v4750
  %v5007 = vpack.c.b16 %v4751, %v4751
  %v5008 = vpack.c.b16 %v4752, %v4752
  %v5009 = vpack.c.b16 %v4753, %v4753
  %v5010 = vpack.c.b16 %v4754, %v4754
  %v5011 = vpack.c.b16 %v4755, %v4755
  %v5012 = vpack.c.b16 %v4756, %v4756
  %v5013 = vpack.c.b16 %v4757, %v4757
  %v5014 = vpack.c.b16 %v4758, %v4758
  %v5015 = vpack.c.b16 %v4759, %v4759
  %v5016 = vpack.c.b16 %v4760, %v4760
  %v5017 = vpack.c.b16 %v4761, %v4761
  %v5018 = vpack.c.b16 %v4762, %v4762
  %v5019 = vpack.c.b16 %v4763, %v4763
  %v5020 = vpack.c.b16 %v4764, %v4764
  %v5021 = vpack.c.b16 %v4765, %v4765
  %v5022 = vpack.c.b16 %v4766, %v4766
  %v5023 = vpack.c.b16 %v4767, %v4767
  %v5024 = vpack.c.b16 %v4768, %v4768
  %v5025 = vpack.c.b16 %v4769, %v4769
  %v5026 = vpack.c.b16 %v4770, %v4770
  %v5027 = vpack.c.b16 %v4771, %v4771
  %v5028 = vpack.c.b16 %v4772, %v4772
  %v5029 = vpack.c.b16 %v4773, %v4773
  %v5030 = vpack.c.b16 %v4774, %v4774
  %v5031 = vpack.c.b16 %v4775, %v4775
  %v5032 = vpack.c.b16 %v4776, %v4776
  %v5033 = vpack.c.b16 %v4777, %v4777
  %v5034 = vpack.c.b16 %v4778, %v4778
  %v5035 = vpack.c.b16 %v4779, %v4779
  %v5036 = vpack.c.b16 %v4780, %v4780
  %v5037 = vpack.c.b16 %v4781, %v4781
  %v5038 = vpack.c.b16 %v4782, %v4782
  %v5039 = vpack.c.b16 %v4783, %v4783
  %v5040 = vpack.c.b16 %v4784, %v4784
  %v5041 = vpack.c.b16 %v4785, %v4785
  %v5042 = vpack.c.b16 %v4786, %v4786
  %v5043 = vpack.c.b16 %v4787, %v4787
  %v5044 = vpack.c.b16 %v4788, %v4788
  %v5045 = vpack.c.b16 %v4789, %v4789
  %v5046 = vpack.c.b16 %v4790, %v4790
  %v5047 = vpack.c.b16 %v4791, %v4791
  %v5048 = vpack.c.b16 %v4792, %v4792
  %v5049 = vpack.c.b16 %v4793, %v4793
  %v5050 = vpack.c.b16 %v4794, %v4794
  %v5051 = vpack.c.b16 %v4795, %v4795
  %v5052 = vpack.c.b16 %v4796, %v4796
  %v5053 = vpack.c.b16 %v4797, %v4797
  %v5054 = vpack.c.b16 %v4798, %v4798
  %v5055 = vpack.c.b16 %v4799, %v4799
  %v5056 = vpack.c.b16 %v4800, %v4800
  %v5057 = vpack.c.b16 %v4801, %v4801
  %v5058 = vpack.c.b16 %v4802, %v4802
  %v5059 = vpack.c.b16 %v4803, %v4803
  %v5060 = vpack.c.b16 %v4804, %v4804
  %v5061 = vpack.c.b16 %v4805, %v4805
  %v5062 = vpack.c.b16 %v4806, %v4806
  %v5063 = vpack.c.b16 %v4807, %v4807
  %v5064 = vpack.c.b16 %v4808, %v4808
  %v5065 = vpack.c.b16 %v4809, %v4809
  %v5066 = vpack.c.b16 %v4810, %v4810
  %v5067 = vpack.c.b16 %v4811, %v4811
  %v5068 = vpack.c.b16 %v4812, %v4812
  %v5069 = vpack.c.b16 %v4813, %v4813
  %v5070 = vpack.c.b16 %v4814, %v4814
  %v5071 = vpack.c.b16 %v4815, %v4815
  %v5072 = vpack.c.b16 %v4816, %v4816
  %v5073 = vpack.c.b16 %v4817, %v4817
  %v5074 = vpack.c.b16 %v4818, %v4818
  %v5075 = vpack.c.b16 %v4819, %v4819
  %v5076 = vpack.c.b16 %v4820, %v4820
  %v5077 = vpack.c.b16 %v4821, %v4821
  %v5078 = vpack.c.b16 %v4822, %v4822
  %v5079 = vpack.c.b16 %v4823, %v4823
  %v5080 = vpack.c.b16 %v4824, %v4824
  %v5081 = vpack.c.b16 %v4825, %v4825
  %v5082 = vpack.c.b16 %v4826, %v4826
  %v5083 = vpack.c.b16 %v4827, %v4827
  %v5084 = vpack.c.b16 %v4828, %v4828
  %v5085 = vpack.c.b16 %v4829, %v4829
  %v5086 = vpack.c.b16 %v4830, %v4830
  %v5087 = vpack.c.b16 %v4831, %v4831
  %v5088 = vpack.c.b16 %v4832, %v4832
  %v5089 = vpack.c.b16 %v4833, %v4833
  %v5090 = vpack.c.b16 %v4834, %v4834
  %v5091 = vpack.c.b16 %v4835, %v4835
  %v5092 = vpack.c.b16 %v4836, %v4836
  %v5093 = vpack.c.b16 %v4837, %v4837
  %v5094 = vpack.c.b16 %v4838, %v4838
  %v5095 = vpack.c.b16 %v4839, %v4839
  %v5096 = vpack.c.b16 %v4840, %v4840
  %v5097 = vpack.c.b16 %v4841, %v4841
  %v5098 = vpack.c.b16 %v4842, %v4842
  %v5099 = vpack.c.b16 %v4843, %v4843
  %v5100 = vpack.c.b16 %v4844, %v4844
  %v5101 = vpack.c.b16 %v4845, %v4845
  %v5102 = vpack.c.b16 %v4846, %v4846
  %v5103 = vpack.c.b16 %v4847, %v4847
  %v5104 = vpack.c.b16 %v4848, %v4848
  %v5105 = vpack.c.b16 %v4849, %v4849
  %v5106 = vpack.c.b16 %v4850, %v4850
  %v5107 = vpack.c.b16 %v4851, %v4851
  %v5108 = vpack.c.b16 %v4852, %v4852
  %v5109 = vpack.c.b16 %v4853, %v4853
  %v5110 = vpack.c.b16 %v4854, %v4854
  %v5111 = vpack.c.b16 %v4855, %v4855
  %v5112 = vpack.c.b16 %v4856, %v4856
  %v5113 = vpack.c.b16 %v4857, %v4857
  %v5114 = vpack.c.b16 %v4858, %v4858
  %v5115 = vpack.c.b16 %v4859, %v4859
  %v5116 = vpack.c.b16 %v4860, %v4860
  %v5117 = vpack.c.b16 %v4861, %v4861
  %v5118 = vpack.c.b16 %v4862, %v4862
  %v5119 = vpack.c.b16 %v4863, %v4863
  %v5120 = vpack.c.b16 %v4864, %v4864
  %v5121 = vpack.c.b16 %v4865, %v4865
  %v5122 = vpack.c.b16 %v4866, %v4866
  %v5123 = vpack.c.b16 %v4867, %v4867
  %v5124 = vpack.c.b16 %v4868, %v4868
  %v5125 = vpack.c.b16 %v4869, %v4869
  %v5126 = vpack.c.b16 %v4870, %v4870
  %v5127 = vpack.c.b16 %v4871, %v4871
  %v5128 = vpack.c.b16 %v4872, %v4872
  %v5129 = vpack.c.b16 %v4873, %v4873
  %v5130 = vpack.c.b16 %v4874, %v4874
  %v5131 = vpack.c.b16 %v4875, %v4875
  %v5132 = vpack.c.b16 %v4876, %v4876
  %v5133 = vpack.c.b16 %v4877, %v4877
  %v5134 = vpack.c.b16 %v4878, %v4878
  %v5135 = vpack.c.b16 %v4879, %v4879
  %v5136 = vpack.c.b16 %v4880, %v4880
  %v5137 = vpack.c.b16 %v4881, %v4881
  %v5138 = vpack.c.b16 %v4882, %v4882
  %v5139 = vpack.c.b16 %v4883, %v4883
  %v5140 = vpack.c.b16 %v4884, %v4884
  %v5141 = vpack.c.b16 %v4885, %v4885
  %v5142 = vpack.c.b16 %v4886, %v4886
  %v5143 = vpack.c.b16 %v4887, %v4887
  %v5144 = vpack.c.b16 %v4888, %v4888
  %v5145 = vpack.c.b16 %v4889, %v4889
  %v5146 = vpack.c.b16 %v4890, %v4890
  %v5147 = vpack.c.b16 %v4891, %v4891
  %v5148 = vpack.c.b16 %v4892, %v4892
  %v5149 = vpack.c.b16 %v4893, %v4893
  %v5150 = vpack.c.b16 %v4894, %v4894
  %v5151 = vpack.c.b16 %v4895, %v4895
  %v5152 = vpack.c.b16 %v4896, %v4896
  %v5153 = vpack.c.b16 %v4897, %v4897
  %v5154 = vpack.c.b16 %v4898, %v4898
  %v5155 = vpack.c.b16 %v4899, %v4899
  %v5156 = vpack.c.b16 %v4900, %v4900
  %v5157 = vpack.c.b16 %v4901, %v4901
  %v5158 = vpack.c.b16 %v4902, %v4902
  %v5159 = vpack.c.b16 %v4903, %v4903
  %v5160 = vpack.c.b16 %v4904, %v4904
  %v5161 = vpack.c.b16 %v4905, %v4905
  %v5162 = vpack.c.b16 %v4906, %v4906
  %v5163 = vpack.c.b16 %v4907, %v4907
  %v5164 = vpack.c.b16 %v4908, %v4908
  %v5165 = vpack.c.b16 %v4909, %v4909
  %v5166 = vpack.c.b16 %v4910, %v4910
  %v5167 = vpack.c.b16 %v4911, %v4911
  %v5168 = vpack.c.b16 %v4912, %v4912
  %v5169 = vpack.c.b16 %v4913, %v4913
  %v5170 = vpack.c.b16 %v4914, %v4914
  %v5171 = vpack.c.b16 %v4915, %v4915
  %v5172 = vpack.c.b16 %v4916, %v4916
  %v5173 = vpack.c.b16 %v4917, %v4917
  %v5174 = vpack.c.b16 %v4918, %v4918
  %v5175 = vpack.c.b16 %v4919, %v4919
  %v5176 = vpack.c.b16 %v4920, %v4920
  %v5177 = vpack.c.b16 %v4921, %v4921
  %v5178 = vpack.c.b16 %v4922, %v4922
  %v5179 = vpack.c.b16 %v4923, %v4923
  %v5180 = vpack.c.b16 %v4924, %v4924
  %v5181 = vpack.c.b16 %v4925, %v4925
  %v5182 = vpack.c.b16 %v4926, %v4926
  %v5183 = vpack.c.b16 %v4927, %v4927
  %v5184 = vpack.c.b16 %v4928, %v4928
  %v5185 = vpack.c.b16 %v4929, %v4929
  %v5186 = vpack.c.b16 %v4930, %v4930
  %v5187 = vpack.c.b16 %v4931, %v4931
  %v5188 = vpack.c.b16 %v4932, %v4932
  %v5189 = vpack.c.b16 %v4933, %v4933
  %v5190 = vpack.c.b16 %v4934, %v4934
  %v5191 = vpack.c.b16 %v4935, %v4935
  %v5192 = vpack.c.b16 %v4936, %v4936
  %v5193 = vpack.c.b16 %v4937, %v4937
  %v5194 = vpack.c.b16 %v4938, %v4938
  %v5195 = vpack.c.b16 %v4939, %v4939
  %v5196 = vpack.c.b16 %v4940, %v4940
  %v5197 = vpack.c.b16 %v4941, %v4941
  %v5198 = vpack.c.b16 %v4942, %v4942
  %v5199 = vpack.c.b16 %v4943, %v4943
  %v5200 = vpack.c.b16 %v4944, %v4944
  %v5201 = vpack.c.b16 %v4945, %v4945
  %v5202 = vpack.c.b16 %v4946, %v4946
  %v5203 = vpack.c.b16 %v4947, %v4947
  %v5204 = vpack.c.b16 %v4948, %v4948
  %v5205 = vpack.c.b16 %v4949, %v4949
  %v5206 = vpack.c.b16 %v4950, %v4950
  %v5207 = vpack.c.b16 %v4951, %v4951
  %v5208 = vpack.c.b16 %v4952, %v4952
  %v5209 = vpack.c.b16 %v4953, %v4953
  %v5210 = vpack.c.b16 %v4954, %v4954
  %v5211 = vpack.c.b16 %v4955, %v4955
  %v5212 = vpack.c.b16 %v4956, %v4956
  %v5213 = vpack.c.b16 %v4957, %v4957
  %v5214 = vpack.c.b16 %v4958, %v4958
  %v5215 = vpack.c.b16 %v4959, %v4959
  %v5216 = vpack.c.b16 %v4960, %v4960
  %v5217 = vpack.c.b16 %v4961, %v4961
  %v5218 = vpack.c.b16 %v4962, %v4962
  %v5219 = vpack.c.b16 %v4963, %v4963
  %v5220 = vpack.c.b16 %v4964, %v4964
  %v5221 = vpack.c.b16 %v4965, %v4965
  %v5222 = vpack.c.b16 %v4966, %v4966
  %v5223 = vpack.c.b16 %v4967, %v4967
  %v5224 = vpack.c.b16 %v4968, %v4968
  %v5225 = vpack.c.b16 %v4969, %v4969
  %v5226 = vpack.c.b16 %v4970, %v4970
  %v5227 = vpack.c.b16 %v4971, %v4971
  %v5228 = vpack.c.b16 %v4972, %v4972
  %v5229 = vpack.c.b16 %v4973, %v4973
  %v5230 = vpack.c.b16 %v4974, %v4974
  %v5231 = vpack.c.b16 %v4975, %v4975
  %v5232 = vpack.c.b16 %v4976, %v4976
  %v5233 = vpack.c.b16 %v4977, %v4977
  %v5234 = vpack.c.b16 %v4978, %v4978
  %v5235 = vpack.c.b16 %v4979, %v4979
  %v5236 = vpack.c.b16 %v4980, %v4980
  %v5237 = vpack.c.b16 %v4981, %v4981
  %v5238 = vpack.c.b16 %v4982, %v4982
  %v5239 = vpack.c.b16 %v4983, %v4983
  %v5240 = vpack.c.b16 %v4984, %v4984
  %v5241 = vpack.c.b16 %v4985, %v4985
  %v5242 = vpack.c.b16 %v4986, %v4986
  %v5243 = vpack.c.b16 %v4987, %v4987
  %vm5500 = vcmask 257024
  %5501 = vst.msk [vmem:[%s5] sm:$0xf] %vm5500, %v4988
  %5502 = vst.msk [vmem:[%s5 + $0x4] sm:$0xf] %vm5500, %v4989
  %5503 = vst.msk [vmem:[%s5 + $0x8] sm:$0xf] %vm5500, %v4990
  %5504 = vst.msk [vmem:[%s5 + $0xc] sm:$0xf] %vm5500, %v4991
  %5505 = vst.msk [vmem:[%s5 + $0x10] sm:$0xf] %vm5500, %v4992
  %5506 = vst.msk [vmem:[%s5 + $0x14] sm:$0xf] %vm5500, %v4993
  %5507 = vst.msk [vmem:[%s5 + $0x18] sm:$0xf] %vm5500, %v4994
  %5508 = vst.msk [vmem:[%s5 + $0x1c] sm:$0xf] %vm5500, %v4995
  %5509 = vst.msk [vmem:[%s5 + $0x20] sm:$0xf] %vm5500, %v4996
  %5510 = vst.msk [vmem:[%s5 + $0x24] sm:$0xf] %vm5500, %v4997
  %5511 = vst.msk [vmem:[%s5 + $0x28] sm:$0xf] %vm5500, %v4998
  %5512 = vst.msk [vmem:[%s5 + $0x2c] sm:$0xf] %vm5500, %v4999
  %5513 = vst.msk [vmem:[%s5 + $0x30] sm:$0xf] %vm5500, %v5000
  %5514 = vst.msk [vmem:[%s5 + $0x34] sm:$0xf] %vm5500, %v5001
  %5515 = vst.msk [vmem:[%s5 + $0x38] sm:$0xf] %vm5500, %v5002
  %5516 = vst.msk [vmem:[%s5 + $0x3c] sm:$0xf] %vm5500, %v5003
  %5517 = vst.msk [vmem:[%s5 + $0x40] sm:$0xf] %vm5500, %v5004
  %5518 = vst.msk [vmem:[%s5 + $0x44] sm:$0xf] %vm5500, %v5005
  %5519 = vst.msk [vmem:[%s5 + $0x48] sm:$0xf] %vm5500, %v5006
  %5520 = vst.msk [vmem:[%s5 + $0x4c] sm:$0xf] %vm5500, %v5007
  %5521 = vst.msk [vmem:[%s5 + $0x50] sm:$0xf] %vm5500, %v5008
  %5522 = vst.msk [vmem:[%s5 + $0x54] sm:$0xf] %vm5500, %v5009
  %5523 = vst.msk [vmem:[%s5 + $0x58] sm:$0xf] %vm5500, %v5010
  %5524 = vst.msk [vmem:[%s5 + $0x5c] sm:$0xf] %vm5500, %v5011
  %5525 = vst.msk [vmem:[%s5 + $0x60] sm:$0xf] %vm5500, %v5012
  %5526 = vst.msk [vmem:[%s5 + $0x64] sm:$0xf] %vm5500, %v5013
  %5527 = vst.msk [vmem:[%s5 + $0x68] sm:$0xf] %vm5500, %v5014
  %5528 = vst.msk [vmem:[%s5 + $0x6c] sm:$0xf] %vm5500, %v5015
  %5529 = vst.msk [vmem:[%s5 + $0x70] sm:$0xf] %vm5500, %v5016
  %5530 = vst.msk [vmem:[%s5 + $0x74] sm:$0xf] %vm5500, %v5017
  %5531 = vst.msk [vmem:[%s5 + $0x78] sm:$0xf] %vm5500, %v5018
  %5532 = vst.msk [vmem:[%s5 + $0x7c] sm:$0xf] %vm5500, %v5019
  %5533 = vst.msk [vmem:[%s5 + $0x80] sm:$0xf] %vm5500, %v5020
  %5534 = vst.msk [vmem:[%s5 + $0x84] sm:$0xf] %vm5500, %v5021
  %5535 = vst.msk [vmem:[%s5 + $0x88] sm:$0xf] %vm5500, %v5022
  %5536 = vst.msk [vmem:[%s5 + $0x8c] sm:$0xf] %vm5500, %v5023
  %5537 = vst.msk [vmem:[%s5 + $0x90] sm:$0xf] %vm5500, %v5024
  %5538 = vst.msk [vmem:[%s5 + $0x94] sm:$0xf] %vm5500, %v5025
  %5539 = vst.msk [vmem:[%s5 + $0x98] sm:$0xf] %vm5500, %v5026
  %5540 = vst.msk [vmem:[%s5 + $0x9c] sm:$0xf] %vm5500, %v5027
  %5541 = vst.msk [vmem:[%s5 + $0xa0] sm:$0xf] %vm5500, %v5028
  %5542 = vst.msk [vmem:[%s5 + $0xa4] sm:$0xf] %vm5500, %v5029
  %5543 = vst.msk [vmem:[%s5 + $0xa8] sm:$0xf] %vm5500, %v5030
  %5544 = vst.msk [vmem:[%s5 + $0xac] sm:$0xf] %vm5500, %v5031
  %5545 = vst.msk [vmem:[%s5 + $0xb0] sm:$0xf] %vm5500, %v5032
  %5546 = vst.msk [vmem:[%s5 + $0xb4] sm:$0xf] %vm5500, %v5033
  %5547 = vst.msk [vmem:[%s5 + $0xb8] sm:$0xf] %vm5500, %v5034
  %5548 = vst.msk [vmem:[%s5 + $0xbc] sm:$0xf] %vm5500, %v5035
  %5549 = vst.msk [vmem:[%s5 + $0xc0] sm:$0xf] %vm5500, %v5036
  %5550 = vst.msk [vmem:[%s5 + $0xc4] sm:$0xf] %vm5500, %v5037
  %5551 = vst.msk [vmem:[%s5 + $0xc8] sm:$0xf] %vm5500, %v5038
  %5552 = vst.msk [vmem:[%s5 + $0xcc] sm:$0xf] %vm5500, %v5039
  %5553 = vst.msk [vmem:[%s5 + $0xd0] sm:$0xf] %vm5500, %v5040
  %5554 = vst.msk [vmem:[%s5 + $0xd4] sm:$0xf] %vm5500, %v5041
  %5555 = vst.msk [vmem:[%s5 + $0xd8] sm:$0xf] %vm5500, %v5042
  %5556 = vst.msk [vmem:[%s5 + $0xdc] sm:$0xf] %vm5500, %v5043
  %5557 = vst.msk [vmem:[%s5 + $0xe0] sm:$0xf] %vm5500, %v5044
  %5558 = vst.msk [vmem:[%s5 + $0xe4] sm:$0xf] %vm5500, %v5045
  %5559 = vst.msk [vmem:[%s5 + $0xe8] sm:$0xf] %vm5500, %v5046
  %5560 = vst.msk [vmem:[%s5 + $0xec] sm:$0xf] %vm5500, %v5047
  %5561 = vst.msk [vmem:[%s5 + $0xf0] sm:$0xf] %vm5500, %v5048
  %5562 = vst.msk [vmem:[%s5 + $0xf4] sm:$0xf] %vm5500, %v5049
  %5563 = vst.msk [vmem:[%s5 + $0xf8] sm:$0xf] %vm5500, %v5050
  %5564 = vst.msk [vmem:[%s5 + $0xfc] sm:$0xf] %vm5500, %v5051
  %5565 = vst.msk [vmem:[%s5 + $0x100] sm:$0xf] %vm5500, %v5052
  %5566 = vst.msk [vmem:[%s5 + $0x104] sm:$0xf] %vm5500, %v5053
  %5567 = vst.msk [vmem:[%s5 + $0x108] sm:$0xf] %vm5500, %v5054
  %5568 = vst.msk [vmem:[%s5 + $0x10c] sm:$0xf] %vm5500, %v5055
  %5569 = vst.msk [vmem:[%s5 + $0x110] sm:$0xf] %vm5500, %v5056
  %5570 = vst.msk [vmem:[%s5 + $0x114] sm:$0xf] %vm5500, %v5057
  %5571 = vst.msk [vmem:[%s5 + $0x118] sm:$0xf] %vm5500, %v5058
  %5572 = vst.msk [vmem:[%s5 + $0x11c] sm:$0xf] %vm5500, %v5059
  %5573 = vst.msk [vmem:[%s5 + $0x120] sm:$0xf] %vm5500, %v5060
  %5574 = vst.msk [vmem:[%s5 + $0x124] sm:$0xf] %vm5500, %v5061
  %5575 = vst.msk [vmem:[%s5 + $0x128] sm:$0xf] %vm5500, %v5062
  %5576 = vst.msk [vmem:[%s5 + $0x12c] sm:$0xf] %vm5500, %v5063
  %5577 = vst.msk [vmem:[%s5 + $0x130] sm:$0xf] %vm5500, %v5064
  %5578 = vst.msk [vmem:[%s5 + $0x134] sm:$0xf] %vm5500, %v5065
  %5579 = vst.msk [vmem:[%s5 + $0x138] sm:$0xf] %vm5500, %v5066
  %5580 = vst.msk [vmem:[%s5 + $0x13c] sm:$0xf] %vm5500, %v5067
  %5581 = vst.msk [vmem:[%s5 + $0x140] sm:$0xf] %vm5500, %v5068
  %5582 = vst.msk [vmem:[%s5 + $0x144] sm:$0xf] %vm5500, %v5069
  %5583 = vst.msk [vmem:[%s5 + $0x148] sm:$0xf] %vm5500, %v5070
  %5584 = vst.msk [vmem:[%s5 + $0x14c] sm:$0xf] %vm5500, %v5071
  %5585 = vst.msk [vmem:[%s5 + $0x150] sm:$0xf] %vm5500, %v5072
  %5586 = vst.msk [vmem:[%s5 + $0x154] sm:$0xf] %vm5500, %v5073
  %5587 = vst.msk [vmem:[%s5 + $0x158] sm:$0xf] %vm5500, %v5074
  %5588 = vst.msk [vmem:[%s5 + $0x15c] sm:$0xf] %vm5500, %v5075
  %5589 = vst.msk [vmem:[%s5 + $0x160] sm:$0xf] %vm5500, %v5076
  %5590 = vst.msk [vmem:[%s5 + $0x164] sm:$0xf] %vm5500, %v5077
  %5591 = vst.msk [vmem:[%s5 + $0x168] sm:$0xf] %vm5500, %v5078
  %5592 = vst.msk [vmem:[%s5 + $0x16c] sm:$0xf] %vm5500, %v5079
  %5593 = vst.msk [vmem:[%s5 + $0x170] sm:$0xf] %vm5500, %v5080
  %5594 = vst.msk [vmem:[%s5 + $0x174] sm:$0xf] %vm5500, %v5081
  %5595 = vst.msk [vmem:[%s5 + $0x178] sm:$0xf] %vm5500, %v5082
  %5596 = vst.msk [vmem:[%s5 + $0x17c] sm:$0xf] %vm5500, %v5083
  %5597 = vst.msk [vmem:[%s5 + $0x180] sm:$0xf] %vm5500, %v5084
  %5598 = vst.msk [vmem:[%s5 + $0x184] sm:$0xf] %vm5500, %v5085
  %5599 = vst.msk [vmem:[%s5 + $0x188] sm:$0xf] %vm5500, %v5086
  %5600 = vst.msk [vmem:[%s5 + $0x18c] sm:$0xf] %vm5500, %v5087
  %5601 = vst.msk [vmem:[%s5 + $0x190] sm:$0xf] %vm5500, %v5088
  %5602 = vst.msk [vmem:[%s5 + $0x194] sm:$0xf] %vm5500, %v5089
  %5603 = vst.msk [vmem:[%s5 + $0x198] sm:$0xf] %vm5500, %v5090
  %5604 = vst.msk [vmem:[%s5 + $0x19c] sm:$0xf] %vm5500, %v5091
  %5605 = vst.msk [vmem:[%s5 + $0x1a0] sm:$0xf] %vm5500, %v5092
  %5606 = vst.msk [vmem:[%s5 + $0x1a4] sm:$0xf] %vm5500, %v5093
  %5607 = vst.msk [vmem:[%s5 + $0x1a8] sm:$0xf] %vm5500, %v5094
  %5608 = vst.msk [vmem:[%s5 + $0x1ac] sm:$0xf] %vm5500, %v5095
  %5609 = vst.msk [vmem:[%s5 + $0x1b0] sm:$0xf] %vm5500, %v5096
  %5610 = vst.msk [vmem:[%s5 + $0x1b4] sm:$0xf] %vm5500, %v5097
  %5611 = vst.msk [vmem:[%s5 + $0x1b8] sm:$0xf] %vm5500, %v5098
  %5612 = vst.msk [vmem:[%s5 + $0x1bc] sm:$0xf] %vm5500, %v5099
  %5613 = vst.msk [vmem:[%s5 + $0x1c0] sm:$0xf] %vm5500, %v5100
  %5614 = vst.msk [vmem:[%s5 + $0x1c4] sm:$0xf] %vm5500, %v5101
  %5615 = vst.msk [vmem:[%s5 + $0x1c8] sm:$0xf] %vm5500, %v5102
  %5616 = vst.msk [vmem:[%s5 + $0x1cc] sm:$0xf] %vm5500, %v5103
  %5617 = vst.msk [vmem:[%s5 + $0x1d0] sm:$0xf] %vm5500, %v5104
  %5618 = vst.msk [vmem:[%s5 + $0x1d4] sm:$0xf] %vm5500, %v5105
  %5619 = vst.msk [vmem:[%s5 + $0x1d8] sm:$0xf] %vm5500, %v5106
  %5620 = vst.msk [vmem:[%s5 + $0x1dc] sm:$0xf] %vm5500, %v5107
  %5621 = vst.msk [vmem:[%s5 + $0x1e0] sm:$0xf] %vm5500, %v5108
  %5622 = vst.msk [vmem:[%s5 + $0x1e4] sm:$0xf] %vm5500, %v5109
  %5623 = vst.msk [vmem:[%s5 + $0x1e8] sm:$0xf] %vm5500, %v5110
  %5624 = vst.msk [vmem:[%s5 + $0x1ec] sm:$0xf] %vm5500, %v5111
  %5625 = vst.msk [vmem:[%s5 + $0x1f0] sm:$0xf] %vm5500, %v5112
  %5626 = vst.msk [vmem:[%s5 + $0x1f4] sm:$0xf] %vm5500, %v5113
  %5627 = vst.msk [vmem:[%s5 + $0x1f8] sm:$0xf] %vm5500, %v5114
  %5628 = vst.msk [vmem:[%s5 + $0x1fc] sm:$0xf] %vm5500, %v5115
  %5629 = vst.msk [vmem:[%s5 + $0x200] sm:$0xf] %vm5500, %v5116
  %5630 = vst.msk [vmem:[%s5 + $0x204] sm:$0xf] %vm5500, %v5117
  %5631 = vst.msk [vmem:[%s5 + $0x208] sm:$0xf] %vm5500, %v5118
  %5632 = vst.msk [vmem:[%s5 + $0x20c] sm:$0xf] %vm5500, %v5119
  %5633 = vst.msk [vmem:[%s5 + $0x210] sm:$0xf] %vm5500, %v5120
  %5634 = vst.msk [vmem:[%s5 + $0x214] sm:$0xf] %vm5500, %v5121
  %5635 = vst.msk [vmem:[%s5 + $0x218] sm:$0xf] %vm5500, %v5122
  %5636 = vst.msk [vmem:[%s5 + $0x21c] sm:$0xf] %vm5500, %v5123
  %5637 = vst.msk [vmem:[%s5 + $0x220] sm:$0xf] %vm5500, %v5124
  %5638 = vst.msk [vmem:[%s5 + $0x224] sm:$0xf] %vm5500, %v5125
  %5639 = vst.msk [vmem:[%s5 + $0x228] sm:$0xf] %vm5500, %v5126
  %5640 = vst.msk [vmem:[%s5 + $0x22c] sm:$0xf] %vm5500, %v5127
  %5641 = vst.msk [vmem:[%s5 + $0x230] sm:$0xf] %vm5500, %v5128
  %5642 = vst.msk [vmem:[%s5 + $0x234] sm:$0xf] %vm5500, %v5129
  %5643 = vst.msk [vmem:[%s5 + $0x238] sm:$0xf] %vm5500, %v5130
  %5644 = vst.msk [vmem:[%s5 + $0x23c] sm:$0xf] %vm5500, %v5131
  %5645 = vst.msk [vmem:[%s5 + $0x240] sm:$0xf] %vm5500, %v5132
  %5646 = vst.msk [vmem:[%s5 + $0x244] sm:$0xf] %vm5500, %v5133
  %5647 = vst.msk [vmem:[%s5 + $0x248] sm:$0xf] %vm5500, %v5134
  %5648 = vst.msk [vmem:[%s5 + $0x24c] sm:$0xf] %vm5500, %v5135
  %5649 = vst.msk [vmem:[%s5 + $0x250] sm:$0xf] %vm5500, %v5136
  %5650 = vst.msk [vmem:[%s5 + $0x254] sm:$0xf] %vm5500, %v5137
  %5651 = vst.msk [vmem:[%s5 + $0x258] sm:$0xf] %vm5500, %v5138
  %5652 = vst.msk [vmem:[%s5 + $0x25c] sm:$0xf] %vm5500, %v5139
  %5653 = vst.msk [vmem:[%s5 + $0x260] sm:$0xf] %vm5500, %v5140
  %5654 = vst.msk [vmem:[%s5 + $0x264] sm:$0xf] %vm5500, %v5141
  %5655 = vst.msk [vmem:[%s5 + $0x268] sm:$0xf] %vm5500, %v5142
  %5656 = vst.msk [vmem:[%s5 + $0x26c] sm:$0xf] %vm5500, %v5143
  %5657 = vst.msk [vmem:[%s5 + $0x270] sm:$0xf] %vm5500, %v5144
  %5658 = vst.msk [vmem:[%s5 + $0x274] sm:$0xf] %vm5500, %v5145
  %5659 = vst.msk [vmem:[%s5 + $0x278] sm:$0xf] %vm5500, %v5146
  %5660 = vst.msk [vmem:[%s5 + $0x27c] sm:$0xf] %vm5500, %v5147
  %5661 = vst.msk [vmem:[%s5 + $0x280] sm:$0xf] %vm5500, %v5148
  %5662 = vst.msk [vmem:[%s5 + $0x284] sm:$0xf] %vm5500, %v5149
  %5663 = vst.msk [vmem:[%s5 + $0x288] sm:$0xf] %vm5500, %v5150
  %5664 = vst.msk [vmem:[%s5 + $0x28c] sm:$0xf] %vm5500, %v5151
  %5665 = vst.msk [vmem:[%s5 + $0x290] sm:$0xf] %vm5500, %v5152
  %5666 = vst.msk [vmem:[%s5 + $0x294] sm:$0xf] %vm5500, %v5153
  %5667 = vst.msk [vmem:[%s5 + $0x298] sm:$0xf] %vm5500, %v5154
  %5668 = vst.msk [vmem:[%s5 + $0x29c] sm:$0xf] %vm5500, %v5155
  %5669 = vst.msk [vmem:[%s5 + $0x2a0] sm:$0xf] %vm5500, %v5156
  %5670 = vst.msk [vmem:[%s5 + $0x2a4] sm:$0xf] %vm5500, %v5157
  %5671 = vst.msk [vmem:[%s5 + $0x2a8] sm:$0xf] %vm5500, %v5158
  %5672 = vst.msk [vmem:[%s5 + $0x2ac] sm:$0xf] %vm5500, %v5159
  %5673 = vst.msk [vmem:[%s5 + $0x2b0] sm:$0xf] %vm5500, %v5160
  %5674 = vst.msk [vmem:[%s5 + $0x2b4] sm:$0xf] %vm5500, %v5161
  %5675 = vst.msk [vmem:[%s5 + $0x2b8] sm:$0xf] %vm5500, %v5162
  %5676 = vst.msk [vmem:[%s5 + $0x2bc] sm:$0xf] %vm5500, %v5163
  %5677 = vst.msk [vmem:[%s5 + $0x2c0] sm:$0xf] %vm5500, %v5164
  %5678 = vst.msk [vmem:[%s5 + $0x2c4] sm:$0xf] %vm5500, %v5165
  %5679 = vst.msk [vmem:[%s5 + $0x2c8] sm:$0xf] %vm5500, %v5166
  %5680 = vst.msk [vmem:[%s5 + $0x2cc] sm:$0xf] %vm5500, %v5167
  %5681 = vst.msk [vmem:[%s5 + $0x2d0] sm:$0xf] %vm5500, %v5168
  %5682 = vst.msk [vmem:[%s5 + $0x2d4] sm:$0xf] %vm5500, %v5169
  %5683 = vst.msk [vmem:[%s5 + $0x2d8] sm:$0xf] %vm5500, %v5170
  %5684 = vst.msk [vmem:[%s5 + $0x2dc] sm:$0xf] %vm5500, %v5171
  %5685 = vst.msk [vmem:[%s5 + $0x2e0] sm:$0xf] %vm5500, %v5172
  %5686 = vst.msk [vmem:[%s5 + $0x2e4] sm:$0xf] %vm5500, %v5173
  %5687 = vst.msk [vmem:[%s5 + $0x2e8] sm:$0xf] %vm5500, %v5174
  %5688 = vst.msk [vmem:[%s5 + $0x2ec] sm:$0xf] %vm5500, %v5175
  %5689 = vst.msk [vmem:[%s5 + $0x2f0] sm:$0xf] %vm5500, %v5176
  %5690 = vst.msk [vmem:[%s5 + $0x2f4] sm:$0xf] %vm5500, %v5177
  %5691 = vst.msk [vmem:[%s5 + $0x2f8] sm:$0xf] %vm5500, %v5178
  %5692 = vst.msk [vmem:[%s5 + $0x2fc] sm:$0xf] %vm5500, %v5179
  %5693 = vst.msk [vmem:[%s5 + $0x300] sm:$0xf] %vm5500, %v5180
  %5694 = vst.msk [vmem:[%s5 + $0x304] sm:$0xf] %vm5500, %v5181
  %5695 = vst.msk [vmem:[%s5 + $0x308] sm:$0xf] %vm5500, %v5182
  %5696 = vst.msk [vmem:[%s5 + $0x30c] sm:$0xf] %vm5500, %v5183
  %5697 = vst.msk [vmem:[%s5 + $0x310] sm:$0xf] %vm5500, %v5184
  %5698 = vst.msk [vmem:[%s5 + $0x314] sm:$0xf] %vm5500, %v5185
  %5699 = vst.msk [vmem:[%s5 + $0x318] sm:$0xf] %vm5500, %v5186
  %5700 = vst.msk [vmem:[%s5 + $0x31c] sm:$0xf] %vm5500, %v5187
  %5701 = vst.msk [vmem:[%s5 + $0x320] sm:$0xf] %vm5500, %v5188
  %5702 = vst.msk [vmem:[%s5 + $0x324] sm:$0xf] %vm5500, %v5189
  %5703 = vst.msk [vmem:[%s5 + $0x328] sm:$0xf] %vm5500, %v5190
  %5704 = vst.msk [vmem:[%s5 + $0x32c] sm:$0xf] %vm5500, %v5191
  %5705 = vst.msk [vmem:[%s5 + $0x330] sm:$0xf] %vm5500, %v5192
  %5706 = vst.msk [vmem:[%s5 + $0x334] sm:$0xf] %vm5500, %v5193
  %5707 = vst.msk [vmem:[%s5 + $0x338] sm:$0xf] %vm5500, %v5194
  %5708 = vst.msk [vmem:[%s5 + $0x33c] sm:$0xf] %vm5500, %v5195
  %5709 = vst.msk [vmem:[%s5 + $0x340] sm:$0xf] %vm5500, %v5196
  %5710 = vst.msk [vmem:[%s5 + $0x344] sm:$0xf] %vm5500, %v5197
  %5711 = vst.msk [vmem:[%s5 + $0x348] sm:$0xf] %vm5500, %v5198
  %5712 = vst.msk [vmem:[%s5 + $0x34c] sm:$0xf] %vm5500, %v5199
  %5713 = vst.msk [vmem:[%s5 + $0x350] sm:$0xf] %vm5500, %v5200
  %5714 = vst.msk [vmem:[%s5 + $0x354] sm:$0xf] %vm5500, %v5201
  %5715 = vst.msk [vmem:[%s5 + $0x358] sm:$0xf] %vm5500, %v5202
  %5716 = vst.msk [vmem:[%s5 + $0x35c] sm:$0xf] %vm5500, %v5203
  %5717 = vst.msk [vmem:[%s5 + $0x360] sm:$0xf] %vm5500, %v5204
  %5718 = vst.msk [vmem:[%s5 + $0x364] sm:$0xf] %vm5500, %v5205
  %5719 = vst.msk [vmem:[%s5 + $0x368] sm:$0xf] %vm5500, %v5206
  %5720 = vst.msk [vmem:[%s5 + $0x36c] sm:$0xf] %vm5500, %v5207
  %5721 = vst.msk [vmem:[%s5 + $0x370] sm:$0xf] %vm5500, %v5208
  %5722 = vst.msk [vmem:[%s5 + $0x374] sm:$0xf] %vm5500, %v5209
  %5723 = vst.msk [vmem:[%s5 + $0x378] sm:$0xf] %vm5500, %v5210
  %5724 = vst.msk [vmem:[%s5 + $0x37c] sm:$0xf] %vm5500, %v5211
  %5725 = vst.msk [vmem:[%s5 + $0x380] sm:$0xf] %vm5500, %v5212
  %5726 = vst.msk [vmem:[%s5 + $0x384] sm:$0xf] %vm5500, %v5213
  %5727 = vst.msk [vmem:[%s5 + $0x388] sm:$0xf] %vm5500, %v5214
  %5728 = vst.msk [vmem:[%s5 + $0x38c] sm:$0xf] %vm5500, %v5215
  %5729 = vst.msk [vmem:[%s5 + $0x390] sm:$0xf] %vm5500, %v5216
  %5730 = vst.msk [vmem:[%s5 + $0x394] sm:$0xf] %vm5500, %v5217
  %5731 = vst.msk [vmem:[%s5 + $0x398] sm:$0xf] %vm5500, %v5218
  %5732 = vst.msk [vmem:[%s5 + $0x39c] sm:$0xf] %vm5500, %v5219
  %5733 = vst.msk [vmem:[%s5 + $0x3a0] sm:$0xf] %vm5500, %v5220
  %5734 = vst.msk [vmem:[%s5 + $0x3a4] sm:$0xf] %vm5500, %v5221
  %5735 = vst.msk [vmem:[%s5 + $0x3a8] sm:$0xf] %vm5500, %v5222
  %5736 = vst.msk [vmem:[%s5 + $0x3ac] sm:$0xf] %vm5500, %v5223
  %5737 = vst.msk [vmem:[%s5 + $0x3b0] sm:$0xf] %vm5500, %v5224
  %5738 = vst.msk [vmem:[%s5 + $0x3b4] sm:$0xf] %vm5500, %v5225
  %5739 = vst.msk [vmem:[%s5 + $0x3b8] sm:$0xf] %vm5500, %v5226
  %5740 = vst.msk [vmem:[%s5 + $0x3bc] sm:$0xf] %vm5500, %v5227
  %5741 = vst.msk [vmem:[%s5 + $0x3c0] sm:$0xf] %vm5500, %v5228
  %5742 = vst.msk [vmem:[%s5 + $0x3c4] sm:$0xf] %vm5500, %v5229
  %5743 = vst.msk [vmem:[%s5 + $0x3c8] sm:$0xf] %vm5500, %v5230
  %5744 = vst.msk [vmem:[%s5 + $0x3cc] sm:$0xf] %vm5500, %v5231
  %5745 = vst.msk [vmem:[%s5 + $0x3d0] sm:$0xf] %vm5500, %v5232
  %5746 = vst.msk [vmem:[%s5 + $0x3d4] sm:$0xf] %vm5500, %v5233
  %5747 = vst.msk [vmem:[%s5 + $0x3d8] sm:$0xf] %vm5500, %v5234
  %5748 = vst.msk [vmem:[%s5 + $0x3dc] sm:$0xf] %vm5500, %v5235
  %5749 = vst.msk [vmem:[%s5 + $0x3e0] sm:$0xf] %vm5500, %v5236
  %5750 = vst.msk [vmem:[%s5 + $0x3e4] sm:$0xf] %vm5500, %v5237
  %5751 = vst.msk [vmem:[%s5 + $0x3e8] sm:$0xf] %vm5500, %v5238
  %5752 = vst.msk [vmem:[%s5 + $0x3ec] sm:$0xf] %vm5500, %v5239
  %5753 = vst.msk [vmem:[%s5 + $0x3f0] sm:$0xf] %vm5500, %v5240
  %5754 = vst.msk [vmem:[%s5 + $0x3f4] sm:$0xf] %vm5500, %v5241
  %5755 = vst.msk [vmem:[%s5 + $0x3f8] sm:$0xf] %vm5500, %v5242
  %5756 = vst.msk [vmem:[%s5 + $0x3fc] sm:$0xf] %vm5500, %v5243
  // Predicated region
  $region22: #{tpu_custom_call.1} parent=0 // pred_check
    _
  $region23: #{tpu_custom_call.1} parent=0 // pred_check_branch
    %5758 = sbr.rel (0) target = $region25
  $region24: #{tpu_custom_call.1} parent=0 // pred_region
    _
  $region25: #{tpu_custom_call.1} parent=0 // pred_fallthru
    _
  // Predicated region
  $region26: #{tpu_custom_call.1} parent=0 // pred_check
    _
  $region27: #{tpu_custom_call.1} parent=0 // pred_check_branch
    %5760 = sbr.rel (0) target = $region29
  $region28: #{tpu_custom_call.1} parent=0 // pred_region
    _
  $region29: #{tpu_custom_call.1} parent=0 // pred_fallthru
    _

</llo_original>
